<compile_context>
chip_gen: v5e
topology: v5e:2x2
jax: 0.10.0
libtpu: 0.0.40
codegen_flags: <defaults>
</compile_context>

<pallas_src>
import jax
import jax.numpy as jnp
from jax.experimental import pallas as pl
from jax.experimental.pallas import tpu as pltpu

LANE = 128
SUBLANE = 8
BN_EPS = 1e-5


def _pad_to(n, m):
    return ((n + m - 1) // m) * m


def _pad2d(a, rows, cols, dtype=None):
    if dtype is not None and a.dtype != dtype:
        a = a.astype(dtype)
    pr, pc = rows - a.shape[0], cols - a.shape[1]
    if pr == 0 and pc == 0:
        return a
    return jnp.pad(a, ((0, pr), (0, pc)))


# ----------------------------------------------------------------------------
# Kernel
# ----------------------------------------------------------------------------
def _make_kernel(n_reg_hidden: int, n_enc_hidden: int, n_dec_hidden: int,
                 n_weights: int, bias_offsets, ks_pad: int, kp_pad: int):
    """Whole-forward kernel for one batch tile (fixed layer counts)."""
    assert n_dec_hidden >= 1, "this script assumes >=1 decoder hidden layer"

    def kernel(*refs):
        xc_ref, xe_ref, es_ref, ep_ref, bias_ref = refs[:5]
        w_refs = refs[5:5 + n_weights]
        recon_ref, stats_ref = refs[5 + n_weights], refs[5 + n_weights + 1]

        w_pos, b_pos = [0], [0]

        def next_w():
            r = w_refs[w_pos[0]]
            w_pos[0] += 1
            return r

        def next_b():
            off, width = bias_offsets[b_pos[0]]
            b_pos[0] += 1
            return bias_ref[:, off:off + width]          # (1, width) f32

        def dense(h, w_ref, b):
            # bf16 operands -> MXU, f32 accumulation; bias add in f32.
            return jnp.dot(h.astype(jnp.bfloat16), w_ref[...],
                           preferred_element_type=jnp.float32) + b

        # ----- regressor: [Linear -> ReLU]*, fused mu/logvar head ----------
        h = xe_ref[...]
        for _ in range(n_reg_hidden):
            h = jnp.maximum(dense(h, next_w(), next_b()), 0.0)
        head_s = dense(h, next_w(), next_b())       # (tb, 2*ks_pad) [mu | lv]
        stats_ref[:, :2 * ks_pad] = head_s.astype(stats_ref.dtype)
        mu_s, lv_s = head_s[:, :ks_pad], head_s[:, ks_pad:]

        # ----- private encoder: [Linear(+folded BN) -> ReLU]*, fused head --
        h = xc_ref[...]
        for _ in range(n_enc_hidden):
            h = jnp.maximum(dense(h, next_w(), next_b()), 0.0)  # Dropout = id
        head_p = dense(h, next_w(), next_b())       # (tb, 2*kp_pad)
        stats_ref[:, 2 * ks_pad:] = head_p.astype(stats_ref.dtype)
        mu_p, lv_p = head_p[:, :kp_pad], head_p[:, kp_pad:]

        # ----- reparameterize (f32 elementwise, exp on EUP) -----------------
        z_s = mu_s + es_ref[...] * jnp.exp(0.5 * lv_s)
        z_p = mu_p + ep_ref[...] * jnp.exp(0.5 * lv_p)

        # ----- decoder -------------------------------------------------------
        # first hidden layer consumes cat([z_s, z_p], 1) via split weights
        wa, wb = next_w(), next_w()
        b0 = next_b()
        h = jnp.dot(z_s.astype(jnp.bfloat16), wa[...],
                    preferred_element_type=jnp.float32)
        h = h + jnp.dot(z_p.astype(jnp.bfloat16), wb[...],
                        preferred_element_type=jnp.float32)
        h = jnp.maximum(h + b0, 0.0)
        for _ in range(n_dec_hidden - 1):
            h = jnp.maximum(dense(h, next_w(), next_b()), 0.0)
        recon = jnp.clip(dense(h, next_w(), next_b()), -1.0, 8.0)  # Hardtanh
        recon_ref[...] = recon

    return kernel


# ----------------------------------------------------------------------------
# Parameter init (PyTorch-style uniform(-1/sqrt(fan_in), ...)), BN folding,
# head fusion, bias packing and lane padding all done once, offline.
# TODO(synk): for production widths on v6e/v7x, pad contraction/output dims to
#             multiples of 256 to fill the 256x256 MXU (keep 128 for v5e).
# ----------------------------------------------------------------------------
def _linear(key, fan_in, fan_out):
    kw, kb = jax.random.split(key)
    lim = 1.0 / jnp.sqrt(jnp.float32(fan_in))
    w = jax.random.uniform(kw, (fan_in, fan_out), jnp.float32, -lim, lim)
    b = jax.random.uniform(kb, (fan_out,), jnp.float32, -lim, lim)
    return w, b


def init_params(key, n_taxa, n_env, k_s, k_p,
                enc_hidden, dec_hidden, reg_hidden):
    """Returns ((weights, bias_slab, bias_offsets), meta, raw_f32_params)."""
    assert len(dec_hidden) >= 1
    n_keys = len(reg_hidden) + len(enc_hidden) + len(dec_hidden) + 8
    keys = iter(jax.random.split(key, n_keys))
    bn_scale = (1.0 + BN_EPS) ** -0.5   # eval BN: mean=0, var=1, gamma=1, beta=0

    nt_pad, ne_pad = _pad_to(n_taxa, LANE), _pad_to(n_env, LANE)
    ks_pad, kp_pad = _pad_to(k_s, LANE), _pad_to(k_p, LANE)

    weights, bias_chunks, bias_offsets = [], [], []
    off = [0]
    raw = {'reg': [], 'enc': [], 'dec': []}

    def add_w(wp):
        weights.append(wp.astype(jnp.bfloat16))

    def add_b(bp):
        bias_offsets.append((off[0], bp.shape[1]))
        off[0] += bp.shape[1]
        bias_chunks.append(bp)

    def pad_w(w, in_pad, out_pad):
        return jnp.zeros((in_pad, out_pad), jnp.float32) \
                  .at[:w.shape[0], :w.shape[1]].set(w)

    def pad_b(b, out_pad):
        return jnp.zeros((1, out_pad), jnp.float32).at[0, :b.shape[0]].set(b)

    def fused_head(k1, k2, in_size, in_pad, k, k_pad):
        w_mu, b_mu = _linear(k1, in_size, k)
        w_lv, b_lv = _linear(k2, in_size, k)
        wp = jnp.zeros((in_pad, 2 * k_pad), jnp.float32)
        wp = wp.at[:in_size, :k].set(w_mu).at[:in_size, k_pad:k_pad + k].set(w_lv)
        bp = jnp.zeros((1, 2 * k_pad), jnp.float32)
        bp = bp.at[0, :k].set(b_mu).at[0, k_pad:k_pad + k].set(b_lv)
        add_w(wp); add_b(bp)
        return (w_mu, b_mu), (w_lv, b_lv)

    # regressor (no BN / Dropout)
    in_size, in_pad = n_env, ne_pad
    for h in reg_hidden:
        w, b = _linear(next(keys), in_size, h)
        raw['reg'].append((w, b))
        h_pad = _pad_to(h, LANE)
        add_w(pad_w(w, in_pad, h_pad)); add_b(pad_b(b, h_pad))
        in_size, in_pad = h, h_pad
    raw['reg_mu'], raw['reg_lv'] = fused_head(next(keys), next(keys),
                                              in_size, in_pad, k_s, ks_pad)

    # private encoder (fold eval-mode BatchNorm1d into the Linear)
    in_size, in_pad = n_taxa, nt_pad
    for h in enc_hidden:
        w, b = _linear(next(keys), in_size, h)
        raw['enc'].append((w, b))
        h_pad = _pad_to(h, LANE)
        add_w(pad_w(w * bn_scale, in_pad, h_pad))
        add_b(pad_b(b * bn_scale, h_pad))
        in_size, in_pad = h, h_pad
    raw['enc_mu'], raw['enc_lv'] = fused_head(next(keys), next(keys),
                                              in_size, in_pad, k_p, kp_pad)

    # decoder: first hidden layer weight split into salient / private halves
    h0 = dec_hidden[0]
    h0_pad = _pad_to(h0, LANE)
    w0, b0 = _linear(next(keys), k_s + k_p, h0)
    raw['dec'].append((w0, b0))
    w0f, b0f = w0 * bn_scale, b0 * bn_scale
    add_w(jnp.zeros((ks_pad, h0_pad), jnp.float32).at[:k_s, :h0].set(w0f[:k_s]))
    add_w(jnp.zeros((kp_pad, h0_pad), jnp.float32).at[:k_p, :h0].set(w0f[k_s:]))
    add_b(pad_b(b0f, h0_pad))
    in_size, in_pad = h0, h0_pad
    for h in dec_hidden[1:]:
        w, b = _linear(next(keys), in_size, h)
        raw['dec'].append((w, b))
        h_pad = _pad_to(h, LANE)
        add_w(pad_w(w * bn_scale, in_pad, h_pad))
        add_b(pad_b(b * bn_scale, h_pad))
        in_size, in_pad = h, h_pad
    w, b = _linear(next(keys), in_size, n_taxa)
    raw['dec_out'] = (w, b)
    add_w(pad_w(w, in_pad, nt_pad)); add_b(pad_b(b, nt_pad))   # Linear+Hardtanh

    bias_slab = jnp.concatenate(bias_chunks, axis=1)
    params = (tuple(weights), bias_slab, tuple(bias_offsets))
    meta = dict(n_taxa=n_taxa, n_env=n_env, k_s=k_s, k_p=k_p,
                nt_pad=nt_pad, ne_pad=ne_pad, ks_pad=ks_pad, kp_pad=kp_pad,
                n_reg_hidden=len(reg_hidden), n_enc_hidden=len(enc_hidden),
                n_dec_hidden=len(dec_hidden), bn_scale=bn_scale)
    return params, meta, raw


# ----------------------------------------------------------------------------
# Wrapper
# ----------------------------------------------------------------------------
def _chip_vmem_capacity():
    try:
        return int(pltpu.get_tpu_info().vmem_capacity_bytes)
    except Exception:
        return 128 << 20   # conservative default (v5e/v6e physical VMEM)


def _pick_tile_b(B, requested, vmem_cap):
    b_pad8 = _pad_to(max(B, 1), SUBLANE)
    if requested is None:
        # bigger tiles on 128-MiB-VMEM chips (v5e/v6e); smaller on v7x
        requested = 512 if vmem_cap >= (100 << 20) else 256
    tile = min(_pad_to(requested, SUBLANE), b_pad8)
    # ensure >=2 grid steps so v7x's two TCs + the DMA pipeline engage
    if b_pad8 >= 2 * SUBLANE:
        tile = min(tile, _pad_to(pl.cdiv(b_pad8, 2), SUBLANE))
    tile = max(SUBLANE, tile)
    # prefer a tile that divides the 8-padded batch (no batch-axis pad copy)
    while b_pad8 % tile and tile > SUBLANE:
        tile -= SUBLANE
    return tile


def separable_vae_forward(x_conc, x_env, eps_s, eps_p, params, meta,
                          tile_b=None):
    weights, bias_slab, bias_offsets = params
    B = x_conc.shape[0]
    nt_pad, ne_pad = meta['nt_pad'], meta['ne_pad']
    ks_pad, kp_pad = meta['ks_pad'], meta['kp_pad']
    k_s, k_p, n_taxa = meta['k_s'], meta['k_p'], meta['n_taxa']
    stats_w = 2 * ks_pad + 2 * kp_pad

    vmem_cap = _chip_vmem_capacity()
    vmem_limit = int(min(max(vmem_cap - (16 << 20), 32 << 20), 100 << 20))

    # weight-residency budget: keep-everything-resident only works while the
    # (single-buffered) params fit comfortably in scoped VMEM.
    param_bytes = (sum(int(w.size) * w.dtype.itemsize for w in weights)
                   + int(bias_slab.size) * bias_slab.dtype.itemsize)
    if param_bytes > (vmem_limit * 3) // 4:
        # TODO(synk): stream the largest matrices via a K/N-tiled grid axis
        #             with a VMEM accumulator (pl.when init/finalize).
        raise NotImplementedError(
            "parameters exceed the VMEM residency budget; K-tiled streaming "
            "is not implemented")

    tile_b = _pick_tile_b(B, tile_b, vmem_cap)
    b_pad = _pad_to(B, tile_b)
    grid = (b_pad // tile_b,)

    # bf16 activations (kernel used bf16 matmul operands already); f32 eps.
    xc = _pad2d(x_conc, b_pad, nt_pad, jnp.bfloat16)
    xe = _pad2d(x_env, b_pad, ne_pad, jnp.bfloat16)
    es = _pad2d(eps_s, b_pad, ks_pad)   # zero-padded lanes keep z padding = 0
    ep = _pad2d(eps_p, b_pad, kp_pad)

    kernel = _make_kernel(meta['n_reg_hidden'], meta['n_enc_hidden'],
                          meta['n_dec_hidden'], len(weights), bias_offsets,
                          ks_pad, kp_pad)

    def batch_spec(cols):
        return pl.BlockSpec((tile_b, cols), lambda i: (i, 0))

    out_shape = (jax.ShapeDtypeStruct((b_pad, nt_pad), jnp.float32),
                 jax.ShapeDtypeStruct((b_pad, stats_w), jnp.bfloat16))
    out_specs = (batch_spec(nt_pad), batch_spec(stats_w))
    cparams = pltpu.CompilerParams(
        dimension_semantics=("parallel",),        # megacore sharding on v7x
        vmem_limit_bytes=vmem_limit)

    def run(single_buffer_params):
        def const_spec(arr):
            # Constant block index -> params resident in VMEM across steps;
            # single-buffered since they are never re-fetched.
            if single_buffer_params:
                return pl.BlockSpec(arr.shape, lambda i: (0, 0),
                                    pipeline_mode=pl.Buffered(1))
            return pl.BlockSpec(arr.shape, lambda i: (0, 0))

        in_specs = [batch_spec(nt_pad), batch_spec(ne_pad),
                    batch_spec(ks_pad), batch_spec(kp_pad),
                    const_spec(bias_slab)]
        in_specs += [const_spec(w) for w in weights]
        return pl.pallas_call(
            kernel, grid=grid, out_shape=out_shape,
            in_specs=in_specs, out_specs=out_specs,
            compiler_params=cparams,
        )(xc, xe, es, ep, bias_slab, *weights)

    try:
        recon_p, stats = run(True)
    except Exception:
        recon_p, stats = run(False)    # fallback: default double-buffering

    stats = stats[:B].astype(jnp.float32)
    recon = recon_p[:B, :n_taxa]
    mu_s = stats[:, 0:k_s]
    lv_s = stats[:, ks_pad:ks_pad + k_s]
    mu_p = stats[:, 2 * ks_pad:2 * ks_pad + k_p]
    lv_p = stats[:, 2 * ks_pad + kp_pad:2 * ks_pad + kp_pad + k_p]
    return recon, mu_s, lv_s, mu_p, lv_p


# ----------------------------------------------------------------------------
# References
# ----------------------------------------------------------------------------
def _reference_padded(xc, xe, es, ep, weights, bias_slab, bias_offsets, meta):
    """Mirrors the kernel math exactly (padded arrays, bf16 dots/stats)."""
    widx, bidx = [0], [0]

    def nw():
        w = weights[widx[0]]; widx[0] += 1
        return w

    def nb():
        off, width = bias_offsets[bidx[0]]; bidx[0] += 1
        return bias_slab[:, off:off + width]

    def dense(h, w, b):
        return jnp.dot(h.astype(jnp.bfloat16), w,
                       preferred_element_type=jnp.float32) + b

    ks_pad, kp_pad = meta['ks_pad'], meta['kp_pad']
    h = xe
    for _ in range(meta['n_reg_hidden']):
        h = jnp.maximum(dense(h, nw(), nb()), 0.0)
    head_s = dense(h, nw(), nb())
    mu_s, lv_s = head_s[:, :ks_pad], head_s[:, ks_pad:]

    h = xc
    for _ in range(meta['n_enc_hidden']):
        h = jnp.maximum(dense(h, nw(), nb()), 0.0)
    head_p = dense(h, nw(), nb())
    mu_p, lv_p = head_p[:, :kp_pad], head_p[:, kp_pad:]

    z_s = mu_s + es * jnp.exp(0.5 * lv_s)
    z_p = mu_p + ep * jnp.exp(0.5 * lv_p)

    wa, wb = nw(), nw()
    b0 = nb()
    h = (jnp.dot(z_s.astype(jnp.bfloat16), wa, preferred_element_type=jnp.float32)
         + jnp.dot(z_p.astype(jnp.bfloat16), wb, preferred_element_type=jnp.float32)
         + b0)
    h = jnp.maximum(h, 0.0)
    for _ in range(meta['n_dec_hidden'] - 1):
        h = jnp.maximum(dense(h, nw(), nb()), 0.0)
    recon = jnp.clip(dense(h, nw(), nb()), -1.0, 8.0)
    stats = jnp.concatenate([head_s, head_p], axis=1)
    stats = stats.astype(jnp.bfloat16).astype(jnp.float32)   # kernel stores bf16
    return recon, stats


def _reference_f32(x_conc, x_env, eps_s, eps_p, raw, bn_scale):
    """Original (PyTorch eval-mode) semantics in f32, unfolded/unpadded."""
    h = x_env
    for w, b in raw['reg']:
        h = jnp.maximum(h @ w + b, 0.0)
    mu_s = h @ raw['reg_mu'][0] + raw['reg_mu'][1]
    lv_s = h @ raw['reg_lv'][0] + raw['reg_lv'][1]

    h = x_conc
    for w, b in raw['enc']:
        h = jnp.maximum((h @ w + b) * bn_scale, 0.0)
    mu_p = h @ raw['enc_mu'][0] + raw['enc_mu'][1]
    lv_p = h @ raw['enc_lv'][0] + raw['enc_lv'][1]

    z_s = mu_s + eps_s * jnp.exp(0.5 * lv_s)
    z_p = mu_p + eps_p * jnp.exp(0.5 * lv_p)
    h = jnp.concatenate([z_s, z_p], axis=1)
    for w, b in raw['dec']:
        h = jnp.maximum((h @ w + b) * bn_scale, 0.0)
    w, b = raw['dec_out']
    recon = jnp.clip(h @ w + b, -1.0, 8.0)
    return recon, mu_s, lv_s, mu_p, lv_p


if __name__ == "__main__":
    # Small, module-consistent shapes (auto tile -> grid of 2 batch tiles).
    B, N_TAXA, N_ENV = 32, 32, 8
    K_SALIENT, K_PRIVATE = 4, 4
    REG_HIDDEN, ENC_HIDDEN, DEC_HIDDEN = [16], [32], [32]

    key = jax.random.PRNGKey(0)
    k_x, k_e, k_es, k_ep, k_par = jax.random.split(key, 5)

    x_conc = jax.random.normal(k_x, (B, N_TAXA), jnp.float32)
    x_env = jax.random.normal(k_e, (B, N_ENV), jnp.float32)
    eps_s = jax.random.normal(k_es, (B, K_SALIENT), jnp.float32)
    eps_p = jax.random.normal(k_ep, (B, K_PRIVATE), jnp.float32)

    params, meta, raw = init_params(k_par, N_TAXA, N_ENV, K_SALIENT, K_PRIVATE,
                                    ENC_HIDDEN, DEC_HIDDEN, REG_HIDDEN)

    outs = separable_vae_forward(x_conc, x_env, eps_s, eps_p, params, meta)
    outs = jax.block_until_ready(outs)

    # 1) exact-math reference (same padding / folding / bf16 dots as kernel)
    weights, bias_slab, bias_offsets = params
    ks_pad, kp_pad = meta['ks_pad'], meta['kp_pad']
    xc_p = _pad2d(x_conc, B, meta['nt_pad'])
    xe_p = _pad2d(x_env, B, meta['ne_pad'])
    es_p = _pad2d(eps_s, B, ks_pad)
    ep_p = _pad2d(eps_p, B, kp_pad)
    ref_recon_p, ref_stats = _reference_padded(xc_p, xe_p, es_p, ep_p,
                                               weights, bias_slab,
                                               bias_offsets, meta)
    refs_tight = (ref_recon_p[:, :N_TAXA],
                  ref_stats[:, :K_SALIENT],
                  ref_stats[:, ks_pad:ks_pad + K_SALIENT],
                  ref_stats[:, 2 * ks_pad:2 * ks_pad + K_PRIVATE],
                  ref_stats[:, 2 * ks_pad + kp_pad:2 * ks_pad + kp_pad + K_PRIVATE])
    for o, r in zip(outs, refs_tight):
        assert o.shape == r.shape and o.dtype == r.dtype
        assert float(jnp.max(jnp.abs(o - r))) < 1e-3, "mismatch vs mirrored ref"

    # 2) f32 eval-mode semantics reference (validates BN folding / head fusion
    #    / padding; looser tolerance due to bf16 matmul operands + bf16 stats)
    refs_f32 = _reference_f32(x_conc, x_env, eps_s, eps_p, raw,
                              meta['bn_scale'])
    for o, r in zip(outs, refs_f32):
        assert o.shape == r.shape
        assert float(jnp.max(jnp.abs(o - r))) < 1e-1, "mismatch vs f32 semantics"

    print("KERNEL_OK")
</pallas_src>

<mosaic_0001>
module attributes {stable_mosaic.version = 11 : i64} {
  func.func @kernel(%arg0: i32, %arg1: memref<16x128xbf16, #tpu.memory_space<vmem>>, %arg2: memref<16x128xbf16, #tpu.memory_space<vmem>>, %arg3: memref<16x128xf32, #tpu.memory_space<vmem>>, %arg4: memref<16x128xf32, #tpu.memory_space<vmem>>, %arg5: memref<1x1024xf32, #tpu.memory_space<vmem>>, %arg6: memref<128x128xbf16, #tpu.memory_space<vmem>>, %arg7: memref<128x256xbf16, #tpu.memory_space<vmem>>, %arg8: memref<128x128xbf16, #tpu.memory_space<vmem>>, %arg9: memref<128x256xbf16, #tpu.memory_space<vmem>>, %arg10: memref<128x128xbf16, #tpu.memory_space<vmem>>, %arg11: memref<128x128xbf16, #tpu.memory_space<vmem>>, %arg12: memref<128x128xbf16, #tpu.memory_space<vmem>>, %arg13: memref<16x128xf32, #tpu.memory_space<vmem>>, %arg14: memref<16x512xbf16, #tpu.memory_space<vmem>>) attributes {dimension_semantics = [#tpu.dimension_semantics<parallel>], iteration_bounds = array<i64: 2>, scalar_prefetch = 0 : i64, scratch_operands = 0 : i64, tpu.core_type = #tpu.core_type<tc>, window_params = [{transform_indices = @transform_0, window_bounds = array<i64: 16, 128>}, {transform_indices = @transform_1, window_bounds = array<i64: 16, 128>}, {transform_indices = @transform_2, window_bounds = array<i64: 16, 128>}, {transform_indices = @transform_3, window_bounds = array<i64: 16, 128>}, {pipeline_mode = #tpu.pipeline_mode<synchronous>, transform_indices = @transform_4, window_bounds = array<i64: 1, 1024>}, {pipeline_mode = #tpu.pipeline_mode<synchronous>, transform_indices = @transform_5, window_bounds = array<i64: 128, 128>}, {pipeline_mode = #tpu.pipeline_mode<synchronous>, transform_indices = @transform_6, window_bounds = array<i64: 128, 256>}, {pipeline_mode = #tpu.pipeline_mode<synchronous>, transform_indices = @transform_7, window_bounds = array<i64: 128, 128>}, {pipeline_mode = #tpu.pipeline_mode<synchronous>, transform_indices = @transform_8, window_bounds = array<i64: 128, 256>}, {pipeline_mode = #tpu.pipeline_mode<synchronous>, transform_indices = @transform_9, window_bounds = array<i64: 128, 128>}, {pipeline_mode = #tpu.pipeline_mode<synchronous>, transform_indices = @transform_10, window_bounds = array<i64: 128, 128>}, {pipeline_mode = #tpu.pipeline_mode<synchronous>, transform_indices = @transform_11, window_bounds = array<i64: 128, 128>}, {transform_indices = @transform_12, window_bounds = array<i64: 16, 128>}, {transform_indices = @transform_13, window_bounds = array<i64: 16, 512>}]} {
    %c0 = arith.constant 0 : index
    %c0_0 = arith.constant 0 : index
    %0 = vector.load %arg2[%c0, %c0_0] : memref<16x128xbf16, #tpu.memory_space<vmem>>, vector<16x128xbf16>
    %c0_1 = arith.constant 0 : index
    %c0_2 = arith.constant 0 : index
    %1 = vector.load %arg5[%c0_1, %c0_2] : memref<1x1024xf32, #tpu.memory_space<vmem>>, vector<1x128xf32>
    %c0_3 = arith.constant 0 : index
    %c0_4 = arith.constant 0 : index
    %2 = vector.load %arg6[%c0_3, %c0_4] : memref<128x128xbf16, #tpu.memory_space<vmem>>, vector<128x128xbf16>
    %cst = arith.constant dense<0.000000e+00> : vector<16x128xf32>
    %3 = tpu.matmul %0, %2, %cst {dimension_numbers = #tpu.dot_dimension_numbers<[1], [0], [0], [1], [0, 0, 1, 1], [], []>} : vector<16x128xbf16>, vector<128x128xbf16>, vector<16x128xf32> -> vector<16x128xf32>
    %4 = vector.broadcast %1 : vector<1x128xf32> to vector<16x128xf32>
    %5 = arith.addf %3, %4 : vector<16x128xf32>
    %cst_5 = arith.constant 0.000000e+00 : f32
    %6 = vector.broadcast %cst_5 : f32 to vector<16x128xf32>
    %7 = arith.maximumf %5, %6 : vector<16x128xf32>
    %c0_6 = arith.constant 0 : index
    %c128 = arith.constant 128 : index
    %8 = vector.load %arg5[%c0_6, %c128] : memref<1x1024xf32, #tpu.memory_space<vmem>>, vector<1x256xf32>
    %9 = arith.truncf %7 : vector<16x128xf32> to vector<16x128xbf16>
    %c0_7 = arith.constant 0 : index
    %c0_8 = arith.constant 0 : index
    %10 = vector.load %arg7[%c0_7, %c0_8] : memref<128x256xbf16, #tpu.memory_space<vmem>>, vector<128x256xbf16>
    %cst_9 = arith.constant dense<0.000000e+00> : vector<16x256xf32>
    %11 = tpu.matmul %9, %10, %cst_9 {dimension_numbers = #tpu.dot_dimension_numbers<[1], [0], [0], [1], [0, 0, 1, 1], [], []>} : vector<16x128xbf16>, vector<128x256xbf16>, vector<16x256xf32> -> vector<16x256xf32>
    %12 = vector.broadcast %8 : vector<1x256xf32> to vector<16x256xf32>
    %13 = arith.addf %11, %12 : vector<16x256xf32>
    %14 = arith.truncf %13 : vector<16x256xf32> to vector<16x256xbf16>
    %c0_10 = arith.constant 0 : index
    %c0_11 = arith.constant 0 : index
    %15 = vector.load %arg14[%c0_10, %c0_11] : memref<16x512xbf16, #tpu.memory_space<vmem>>, vector<16x256xbf16>
    tpu.vector_store %arg14[%c0_10, %c0_11], %14 {strides = array<i32>} : memref<16x512xbf16, #tpu.memory_space<vmem>>, vector<16x256xbf16>,
    %16 = vector.extract_strided_slice %13 {offsets = [0, 0], sizes = [16, 128], strides = [1, 1]} : vector<16x256xf32> to vector<16x128xf32>
    %17 = vector.extract_strided_slice %13 {offsets = [0, 128], sizes = [16, 128], strides = [1, 1]} : vector<16x256xf32> to vector<16x128xf32>
    %c0_12 = arith.constant 0 : index
    %c0_13 = arith.constant 0 : index
    %18 = vector.load %arg1[%c0_12, %c0_13] : memref<16x128xbf16, #tpu.memory_space<vmem>>, vector<16x128xbf16>
    %c0_14 = arith.constant 0 : index
    %c384 = arith.constant 384 : index
    %19 = vector.load %arg5[%c0_14, %c384] : memref<1x1024xf32, #tpu.memory_space<vmem>>, vector<1x128xf32>
    %c0_15 = arith.constant 0 : index
    %c0_16 = arith.constant 0 : index
    %20 = vector.load %arg8[%c0_15, %c0_16] : memref<128x128xbf16, #tpu.memory_space<vmem>>, vector<128x128xbf16>
    %cst_17 = arith.constant dense<0.000000e+00> : vector<16x128xf32>
    %21 = tpu.matmul %18, %20, %cst_17 {dimension_numbers = #tpu.dot_dimension_numbers<[1], [0], [0], [1], [0, 0, 1, 1], [], []>} : vector<16x128xbf16>, vector<128x128xbf16>, vector<16x128xf32> -> vector<16x128xf32>
    %22 = vector.broadcast %19 : vector<1x128xf32> to vector<16x128xf32>
    %23 = arith.addf %21, %22 : vector<16x128xf32>
    %cst_18 = arith.constant 0.000000e+00 : f32
    %24 = vector.broadcast %cst_18 : f32 to vector<16x128xf32>
    %25 = arith.maximumf %23, %24 : vector<16x128xf32>
    %c0_19 = arith.constant 0 : index
    %c512 = arith.constant 512 : index
    %26 = vector.load %arg5[%c0_19, %c512] : memref<1x1024xf32, #tpu.memory_space<vmem>>, vector<1x256xf32>
    %27 = arith.truncf %25 : vector<16x128xf32> to vector<16x128xbf16>
    %c0_20 = arith.constant 0 : index
    %c0_21 = arith.constant 0 : index
    %28 = vector.load %arg9[%c0_20, %c0_21] : memref<128x256xbf16, #tpu.memory_space<vmem>>, vector<128x256xbf16>
    %cst_22 = arith.constant dense<0.000000e+00> : vector<16x256xf32>
    %29 = tpu.matmul %27, %28, %cst_22 {dimension_numbers = #tpu.dot_dimension_numbers<[1], [0], [0], [1], [0, 0, 1, 1], [], []>} : vector<16x128xbf16>, vector<128x256xbf16>, vector<16x256xf32> -> vector<16x256xf32>
    %30 = vector.broadcast %26 : vector<1x256xf32> to vector<16x256xf32>
    %31 = arith.addf %29, %30 : vector<16x256xf32>
    %32 = arith.truncf %31 : vector<16x256xf32> to vector<16x256xbf16>
    %c0_23 = arith.constant 0 : index
    %c256 = arith.constant 256 : index
    %33 = vector.load %arg14[%c0_23, %c256] : memref<16x512xbf16, #tpu.memory_space<vmem>>, vector<16x256xbf16>
    tpu.vector_store %arg14[%c0_23, %c256], %32 {strides = array<i32>} : memref<16x512xbf16, #tpu.memory_space<vmem>>, vector<16x256xbf16>,
    %34 = vector.extract_strided_slice %31 {offsets = [0, 0], sizes = [16, 128], strides = [1, 1]} : vector<16x256xf32> to vector<16x128xf32>
    %35 = vector.extract_strided_slice %31 {offsets = [0, 128], sizes = [16, 128], strides = [1, 1]} : vector<16x256xf32> to vector<16x128xf32>
    %c0_24 = arith.constant 0 : index
    %c0_25 = arith.constant 0 : index
    %36 = vector.load %arg3[%c0_24, %c0_25] : memref<16x128xf32, #tpu.memory_space<vmem>>, vector<16x128xf32>
    %cst_26 = arith.constant 5.000000e-01 : f32
    %37 = vector.broadcast %cst_26 : f32 to vector<16x128xf32>
    %38 = arith.mulf %37, %17 : vector<16x128xf32>
    %39 = math.exp %38 : vector<16x128xf32>
    %40 = arith.mulf %36, %39 : vector<16x128xf32>
    %41 = arith.addf %16, %40 : vector<16x128xf32>
    %c0_27 = arith.constant 0 : index
    %c0_28 = arith.constant 0 : index
    %42 = vector.load %arg4[%c0_27, %c0_28] : memref<16x128xf32, #tpu.memory_space<vmem>>, vector<16x128xf32>
    %cst_29 = arith.constant 5.000000e-01 : f32
    %43 = vector.broadcast %cst_29 : f32 to vector<16x128xf32>
    %44 = arith.mulf %43, %35 : vector<16x128xf32>
    %45 = math.exp %44 : vector<16x128xf32>
    %46 = arith.mulf %42, %45 : vector<16x128xf32>
    %47 = arith.addf %34, %46 : vector<16x128xf32>
    %c0_30 = arith.constant 0 : index
    %c768 = arith.constant 768 : index
    %48 = vector.load %arg5[%c0_30, %c768] : memref<1x1024xf32, #tpu.memory_space<vmem>>, vector<1x128xf32>
    %49 = arith.truncf %41 : vector<16x128xf32> to vector<16x128xbf16>
    %c0_31 = arith.constant 0 : index
    %c0_32 = arith.constant 0 : index
    %50 = vector.load %arg10[%c0_31, %c0_32] : memref<128x128xbf16, #tpu.memory_space<vmem>>, vector<128x128xbf16>
    %cst_33 = arith.constant dense<0.000000e+00> : vector<16x128xf32>
    %51 = tpu.matmul %49, %50, %cst_33 {dimension_numbers = #tpu.dot_dimension_numbers<[1], [0], [0], [1], [0, 0, 1, 1], [], []>} : vector<16x128xbf16>, vector<128x128xbf16>, vector<16x128xf32> -> vector<16x128xf32>
    %52 = arith.truncf %47 : vector<16x128xf32> to vector<16x128xbf16>
    %c0_34 = arith.constant 0 : index
    %c0_35 = arith.constant 0 : index
    %53 = vector.load %arg11[%c0_34, %c0_35] : memref<128x128xbf16, #tpu.memory_space<vmem>>, vector<128x128xbf16>
    %cst_36 = arith.constant dense<0.000000e+00> : vector<16x128xf32>
    %54 = tpu.matmul %52, %53, %cst_36 {dimension_numbers = #tpu.dot_dimension_numbers<[1], [0], [0], [1], [0, 0, 1, 1], [], []>} : vector<16x128xbf16>, vector<128x128xbf16>, vector<16x128xf32> -> vector<16x128xf32>
    %55 = arith.addf %51, %54 : vector<16x128xf32>
    %56 = vector.broadcast %48 : vector<1x128xf32> to vector<16x128xf32>
    %57 = arith.addf %55, %56 : vector<16x128xf32>
    %cst_37 = arith.constant 0.000000e+00 : f32
    %58 = vector.broadcast %cst_37 : f32 to vector<16x128xf32>
    %59 = arith.maximumf %57, %58 : vector<16x128xf32>
    %c0_38 = arith.constant 0 : index
    %c896 = arith.constant 896 : index
    %60 = vector.load %arg5[%c0_38, %c896] : memref<1x1024xf32, #tpu.memory_space<vmem>>, vector<1x128xf32>
    %61 = arith.truncf %59 : vector<16x128xf32> to vector<16x128xbf16>
    %c0_39 = arith.constant 0 : index
    %c0_40 = arith.constant 0 : index
    %62 = vector.load %arg12[%c0_39, %c0_40] : memref<128x128xbf16, #tpu.memory_space<vmem>>, vector<128x128xbf16>
    %cst_41 = arith.constant dense<0.000000e+00> : vector<16x128xf32>
    %63 = tpu.matmul %61, %62, %cst_41 {dimension_numbers = #tpu.dot_dimension_numbers<[1], [0], [0], [1], [0, 0, 1, 1], [], []>} : vector<16x128xbf16>, vector<128x128xbf16>, vector<16x128xf32> -> vector<16x128xf32>
    %64 = vector.broadcast %60 : vector<1x128xf32> to vector<16x128xf32>
    %65 = arith.addf %63, %64 : vector<16x128xf32>
    %cst_42 = arith.constant -1.000000e+00 : f32
    %cst_43 = arith.constant 8.000000e+00 : f32
    %66 = vector.broadcast %cst_42 : f32 to vector<16x128xf32>
    %67 = arith.maximumf %66, %65 : vector<16x128xf32>
    %68 = vector.broadcast %cst_43 : f32 to vector<16x128xf32>
    %69 = arith.minimumf %68, %67 : vector<16x128xf32>
    %c0_44 = arith.constant 0 : index
    %c0_45 = arith.constant 0 : index
    %70 = vector.load %arg13[%c0_44, %c0_45] : memref<16x128xf32, #tpu.memory_space<vmem>>, vector<16x128xf32>
    tpu.vector_store %arg13[%c0_44, %c0_45], %69 {strides = array<i32>} : memref<16x128xf32, #tpu.memory_space<vmem>>, vector<16x128xf32>,
    return
  }
  func.func @transform_0(%arg0: i32) -> (i32, i32) {
    %c0_i32 = arith.constant 0 : i32
    %c0_i32_0 = arith.constant 0 : i32
    return %arg0, %c0_i32 : i32, i32
  }
  func.func @transform_1(%arg0: i32) -> (i32, i32) {
    %c0_i32 = arith.constant 0 : i32
    %c0_i32_0 = arith.constant 0 : i32
    return %arg0, %c0_i32 : i32, i32
  }
  func.func @transform_2(%arg0: i32) -> (i32, i32) {
    %c0_i32 = arith.constant 0 : i32
    %c0_i32_0 = arith.constant 0 : i32
    return %arg0, %c0_i32 : i32, i32
  }
  func.func @transform_3(%arg0: i32) -> (i32, i32) {
    %c0_i32 = arith.constant 0 : i32
    %c0_i32_0 = arith.constant 0 : i32
    return %arg0, %c0_i32 : i32, i32
  }
  func.func @transform_4(%arg0: i32) -> (i32, i32) {
    %c0_i32 = arith.constant 0 : i32
    %c0_i32_0 = arith.constant 0 : i32
    %c0_i32_1 = arith.constant 0 : i32
    return %c0_i32, %c0_i32_0 : i32, i32
  }
  func.func @transform_5(%arg0: i32) -> (i32, i32) {
    %c0_i32 = arith.constant 0 : i32
    %c0_i32_0 = arith.constant 0 : i32
    %c0_i32_1 = arith.constant 0 : i32
    return %c0_i32, %c0_i32_0 : i32, i32
  }
  func.func @transform_6(%arg0: i32) -> (i32, i32) {
    %c0_i32 = arith.constant 0 : i32
    %c0_i32_0 = arith.constant 0 : i32
    %c0_i32_1 = arith.constant 0 : i32
    return %c0_i32, %c0_i32_0 : i32, i32
  }
  func.func @transform_7(%arg0: i32) -> (i32, i32) {
    %c0_i32 = arith.constant 0 : i32
    %c0_i32_0 = arith.constant 0 : i32
    %c0_i32_1 = arith.constant 0 : i32
    return %c0_i32, %c0_i32_0 : i32, i32
  }
  func.func @transform_8(%arg0: i32) -> (i32, i32) {
    %c0_i32 = arith.constant 0 : i32
    %c0_i32_0 = arith.constant 0 : i32
    %c0_i32_1 = arith.constant 0 : i32
    return %c0_i32, %c0_i32_0 : i32, i32
  }
  func.func @transform_9(%arg0: i32) -> (i32, i32) {
    %c0_i32 = arith.constant 0 : i32
    %c0_i32_0 = arith.constant 0 : i32
    %c0_i32_1 = arith.constant 0 : i32
    return %c0_i32, %c0_i32_0 : i32, i32
  }
  func.func @transform_10(%arg0: i32) -> (i32, i32) {
    %c0_i32 = arith.constant 0 : i32
    %c0_i32_0 = arith.constant 0 : i32
    %c0_i32_1 = arith.constant 0 : i32
    return %c0_i32, %c0_i32_0 : i32, i32
  }
  func.func @transform_11(%arg0: i32) -> (i32, i32) {
    %c0_i32 = arith.constant 0 : i32
    %c0_i32_0 = arith.constant 0 : i32
    %c0_i32_1 = arith.constant 0 : i32
    return %c0_i32, %c0_i32_0 : i32, i32
  }
  func.func @transform_12(%arg0: i32) -> (i32, i32) {
    %c0_i32 = arith.constant 0 : i32
    %c0_i32_0 = arith.constant 0 : i32
    return %arg0, %c0_i32 : i32, i32
  }
  func.func @transform_13(%arg0: i32) -> (i32, i32) {
    %c0_i32 = arith.constant 0 : i32
    %c0_i32_0 = arith.constant 0 : i32
    return %arg0, %c0_i32 : i32, i32
  }
}

module attributes {stable_mosaic.version = 11 : i64} {
  func.func @kernel(%arg0: i32, %arg1: memref<16x128xbf16, #tpu.memory_space<vmem>>, %arg2: memref<16x128xbf16, #tpu.memory_space<vmem>>, %arg3: memref<16x128xf32, #tpu.memory_space<vmem>>, %arg4: memref<16x128xf32, #tpu.memory_space<vmem>>, %arg5: memref<1x1024xf32, #tpu.memory_space<vmem>>, %arg6: memref<128x128xbf16, #tpu.memory_space<vmem>>, %arg7: memref<128x256xbf16, #tpu.memory_space<vmem>>, %arg8: memref<128x128xbf16, #tpu.memory_space<vmem>>, %arg9: memref<128x256xbf16, #tpu.memory_space<vmem>>, %arg10: memref<128x128xbf16, #tpu.memory_space<vmem>>, %arg11: memref<128x128xbf16, #tpu.memory_space<vmem>>, %arg12: memref<128x128xbf16, #tpu.memory_space<vmem>>, %arg13: memref<16x128xf32, #tpu.memory_space<vmem>>, %arg14: memref<16x512xbf16, #tpu.memory_space<vmem>>) attributes {dimension_semantics = [#tpu.dimension_semantics<parallel>], iteration_bounds = array<i64: 2>, scalar_prefetch = 0 : i64, scratch_operands = 0 : i64, tpu.core_type = #tpu.core_type<tc>, window_params = [{transform_indices = @transform_0, window_bounds = array<i64: 16, 128>}, {transform_indices = @transform_1, window_bounds = array<i64: 16, 128>}, {transform_indices = @transform_2, window_bounds = array<i64: 16, 128>}, {transform_indices = @transform_3, window_bounds = array<i64: 16, 128>}, {pipeline_mode = #tpu.pipeline_mode<synchronous>, transform_indices = @transform_4, window_bounds = array<i64: 1, 1024>}, {pipeline_mode = #tpu.pipeline_mode<synchronous>, transform_indices = @transform_5, window_bounds = array<i64: 128, 128>}, {pipeline_mode = #tpu.pipeline_mode<synchronous>, transform_indices = @transform_6, window_bounds = array<i64: 128, 256>}, {pipeline_mode = #tpu.pipeline_mode<synchronous>, transform_indices = @transform_7, window_bounds = array<i64: 128, 128>}, {pipeline_mode = #tpu.pipeline_mode<synchronous>, transform_indices = @transform_8, window_bounds = array<i64: 128, 256>}, {pipeline_mode = #tpu.pipeline_mode<synchronous>, transform_indices = @transform_9, window_bounds = array<i64: 128, 128>}, {pipeline_mode = #tpu.pipeline_mode<synchronous>, transform_indices = @transform_10, window_bounds = array<i64: 128, 128>}, {pipeline_mode = #tpu.pipeline_mode<synchronous>, transform_indices = @transform_11, window_bounds = array<i64: 128, 128>}, {transform_indices = @transform_12, window_bounds = array<i64: 16, 128>}, {transform_indices = @transform_13, window_bounds = array<i64: 16, 512>}]} {
    %c0 = arith.constant 0 : index
    %c0_0 = arith.constant 0 : index
    %0 = vector.load %arg2[%c0, %c0_0] : memref<16x128xbf16, #tpu.memory_space<vmem>>, vector<16x128xbf16>
    %c0_1 = arith.constant 0 : index
    %c0_2 = arith.constant 0 : index
    %1 = vector.load %arg5[%c0_1, %c0_2] : memref<1x1024xf32, #tpu.memory_space<vmem>>, vector<1x128xf32>
    %c0_3 = arith.constant 0 : index
    %c0_4 = arith.constant 0 : index
    %2 = vector.load %arg6[%c0_3, %c0_4] : memref<128x128xbf16, #tpu.memory_space<vmem>>, vector<128x128xbf16>
    %cst = arith.constant dense<0.000000e+00> : vector<16x128xf32>
    %3 = tpu.matmul %0, %2, %cst {dimension_numbers = #tpu.dot_dimension_numbers<[1], [0], [0], [1], [0, 0, 1, 1], [], []>} : vector<16x128xbf16>, vector<128x128xbf16>, vector<16x128xf32> -> vector<16x128xf32>
    %4 = vector.broadcast %1 : vector<1x128xf32> to vector<16x128xf32>
    %5 = arith.addf %3, %4 : vector<16x128xf32>
    %cst_5 = arith.constant 0.000000e+00 : f32
    %6 = vector.broadcast %cst_5 : f32 to vector<16x128xf32>
    %7 = arith.maximumf %5, %6 : vector<16x128xf32>
    %c0_6 = arith.constant 0 : index
    %c128 = arith.constant 128 : index
    %8 = vector.load %arg5[%c0_6, %c128] : memref<1x1024xf32, #tpu.memory_space<vmem>>, vector<1x256xf32>
    %9 = arith.truncf %7 : vector<16x128xf32> to vector<16x128xbf16>
    %c0_7 = arith.constant 0 : index
    %c0_8 = arith.constant 0 : index
    %10 = vector.load %arg7[%c0_7, %c0_8] : memref<128x256xbf16, #tpu.memory_space<vmem>>, vector<128x256xbf16>
    %cst_9 = arith.constant dense<0.000000e+00> : vector<16x256xf32>
    %11 = tpu.matmul %9, %10, %cst_9 {dimension_numbers = #tpu.dot_dimension_numbers<[1], [0], [0], [1], [0, 0, 1, 1], [], []>} : vector<16x128xbf16>, vector<128x256xbf16>, vector<16x256xf32> -> vector<16x256xf32>
    %12 = vector.broadcast %8 : vector<1x256xf32> to vector<16x256xf32>
    %13 = arith.addf %11, %12 : vector<16x256xf32>
    %14 = arith.truncf %13 : vector<16x256xf32> to vector<16x256xbf16>
    %c0_10 = arith.constant 0 : index
    %c0_11 = arith.constant 0 : index
    %15 = vector.load %arg14[%c0_10, %c0_11] : memref<16x512xbf16, #tpu.memory_space<vmem>>, vector<16x256xbf16>
    tpu.vector_store %arg14[%c0_10, %c0_11], %14 {strides = array<i32>} : memref<16x512xbf16, #tpu.memory_space<vmem>>, vector<16x256xbf16>,
    %16 = vector.extract_strided_slice %13 {offsets = [0, 0], sizes = [16, 128], strides = [1, 1]} : vector<16x256xf32> to vector<16x128xf32>
    %17 = vector.extract_strided_slice %13 {offsets = [0, 128], sizes = [16, 128], strides = [1, 1]} : vector<16x256xf32> to vector<16x128xf32>
    %c0_12 = arith.constant 0 : index
    %c0_13 = arith.constant 0 : index
    %18 = vector.load %arg1[%c0_12, %c0_13] : memref<16x128xbf16, #tpu.memory_space<vmem>>, vector<16x128xbf16>
    %c0_14 = arith.constant 0 : index
    %c384 = arith.constant 384 : index
    %19 = vector.load %arg5[%c0_14, %c384] : memref<1x1024xf32, #tpu.memory_space<vmem>>, vector<1x128xf32>
    %c0_15 = arith.constant 0 : index
    %c0_16 = arith.constant 0 : index
    %20 = vector.load %arg8[%c0_15, %c0_16] : memref<128x128xbf16, #tpu.memory_space<vmem>>, vector<128x128xbf16>
    %cst_17 = arith.constant dense<0.000000e+00> : vector<16x128xf32>
    %21 = tpu.matmul %18, %20, %cst_17 {dimension_numbers = #tpu.dot_dimension_numbers<[1], [0], [0], [1], [0, 0, 1, 1], [], []>} : vector<16x128xbf16>, vector<128x128xbf16>, vector<16x128xf32> -> vector<16x128xf32>
    %22 = vector.broadcast %19 : vector<1x128xf32> to vector<16x128xf32>
    %23 = arith.addf %21, %22 : vector<16x128xf32>
    %cst_18 = arith.constant 0.000000e+00 : f32
    %24 = vector.broadcast %cst_18 : f32 to vector<16x128xf32>
    %25 = arith.maximumf %23, %24 : vector<16x128xf32>
    %c0_19 = arith.constant 0 : index
    %c512 = arith.constant 512 : index
    %26 = vector.load %arg5[%c0_19, %c512] : memref<1x1024xf32, #tpu.memory_space<vmem>>, vector<1x256xf32>
    %27 = arith.truncf %25 : vector<16x128xf32> to vector<16x128xbf16>
    %c0_20 = arith.constant 0 : index
    %c0_21 = arith.constant 0 : index
    %28 = vector.load %arg9[%c0_20, %c0_21] : memref<128x256xbf16, #tpu.memory_space<vmem>>, vector<128x256xbf16>
    %cst_22 = arith.constant dense<0.000000e+00> : vector<16x256xf32>
    %29 = tpu.matmul %27, %28, %cst_22 {dimension_numbers = #tpu.dot_dimension_numbers<[1], [0], [0], [1], [0, 0, 1, 1], [], []>} : vector<16x128xbf16>, vector<128x256xbf16>, vector<16x256xf32> -> vector<16x256xf32>
    %30 = vector.broadcast %26 : vector<1x256xf32> to vector<16x256xf32>
    %31 = arith.addf %29, %30 : vector<16x256xf32>
    %32 = arith.truncf %31 : vector<16x256xf32> to vector<16x256xbf16>
    %c0_23 = arith.constant 0 : index
    %c256 = arith.constant 256 : index
    %33 = vector.load %arg14[%c0_23, %c256] : memref<16x512xbf16, #tpu.memory_space<vmem>>, vector<16x256xbf16>
    tpu.vector_store %arg14[%c0_23, %c256], %32 {strides = array<i32>} : memref<16x512xbf16, #tpu.memory_space<vmem>>, vector<16x256xbf16>,
    %34 = vector.extract_strided_slice %31 {offsets = [0, 0], sizes = [16, 128], strides = [1, 1]} : vector<16x256xf32> to vector<16x128xf32>
    %35 = vector.extract_strided_slice %31 {offsets = [0, 128], sizes = [16, 128], strides = [1, 1]} : vector<16x256xf32> to vector<16x128xf32>
    %c0_24 = arith.constant 0 : index
    %c0_25 = arith.constant 0 : index
    %36 = vector.load %arg3[%c0_24, %c0_25] : memref<16x128xf32, #tpu.memory_space<vmem>>, vector<16x128xf32>
    %cst_26 = arith.constant 5.000000e-01 : f32
    %37 = vector.broadcast %cst_26 : f32 to vector<16x128xf32>
    %38 = arith.mulf %37, %17 : vector<16x128xf32>
    %39 = math.exp %38 : vector<16x128xf32>
    %40 = arith.mulf %36, %39 : vector<16x128xf32>
    %41 = arith.addf %16, %40 : vector<16x128xf32>
    %c0_27 = arith.constant 0 : index
    %c0_28 = arith.constant 0 : index
    %42 = vector.load %arg4[%c0_27, %c0_28] : memref<16x128xf32, #tpu.memory_space<vmem>>, vector<16x128xf32>
    %cst_29 = arith.constant 5.000000e-01 : f32
    %43 = vector.broadcast %cst_29 : f32 to vector<16x128xf32>
    %44 = arith.mulf %43, %35 : vector<16x128xf32>
    %45 = math.exp %44 : vector<16x128xf32>
    %46 = arith.mulf %42, %45 : vector<16x128xf32>
    %47 = arith.addf %34, %46 : vector<16x128xf32>
    %c0_30 = arith.constant 0 : index
    %c768 = arith.constant 768 : index
    %48 = vector.load %arg5[%c0_30, %c768] : memref<1x1024xf32, #tpu.memory_space<vmem>>, vector<1x128xf32>
    %49 = arith.truncf %41 : vector<16x128xf32> to vector<16x128xbf16>
    %c0_31 = arith.constant 0 : index
    %c0_32 = arith.constant 0 : index
    %50 = vector.load %arg10[%c0_31, %c0_32] : memref<128x128xbf16, #tpu.memory_space<vmem>>, vector<128x128xbf16>
    %cst_33 = arith.constant dense<0.000000e+00> : vector<16x128xf32>
    %51 = tpu.matmul %49, %50, %cst_33 {dimension_numbers = #tpu.dot_dimension_numbers<[1], [0], [0], [1], [0, 0, 1, 1], [], []>} : vector<16x128xbf16>, vector<128x128xbf16>, vector<16x128xf32> -> vector<16x128xf32>
    %52 = arith.truncf %47 : vector<16x128xf32> to vector<16x128xbf16>
    %c0_34 = arith.constant 0 : index
    %c0_35 = arith.constant 0 : index
    %53 = vector.load %arg11[%c0_34, %c0_35] : memref<128x128xbf16, #tpu.memory_space<vmem>>, vector<128x128xbf16>
    %cst_36 = arith.constant dense<0.000000e+00> : vector<16x128xf32>
    %54 = tpu.matmul %52, %53, %cst_36 {dimension_numbers = #tpu.dot_dimension_numbers<[1], [0], [0], [1], [0, 0, 1, 1], [], []>} : vector<16x128xbf16>, vector<128x128xbf16>, vector<16x128xf32> -> vector<16x128xf32>
    %55 = arith.addf %51, %54 : vector<16x128xf32>
    %56 = vector.broadcast %48 : vector<1x128xf32> to vector<16x128xf32>
    %57 = arith.addf %55, %56 : vector<16x128xf32>
    %cst_37 = arith.constant 0.000000e+00 : f32
    %58 = vector.broadcast %cst_37 : f32 to vector<16x128xf32>
    %59 = arith.maximumf %57, %58 : vector<16x128xf32>
    %c0_38 = arith.constant 0 : index
    %c896 = arith.constant 896 : index
    %60 = vector.load %arg5[%c0_38, %c896] : memref<1x1024xf32, #tpu.memory_space<vmem>>, vector<1x128xf32>
    %61 = arith.truncf %59 : vector<16x128xf32> to vector<16x128xbf16>
    %c0_39 = arith.constant 0 : index
    %c0_40 = arith.constant 0 : index
    %62 = vector.load %arg12[%c0_39, %c0_40] : memref<128x128xbf16, #tpu.memory_space<vmem>>, vector<128x128xbf16>
    %cst_41 = arith.constant dense<0.000000e+00> : vector<16x128xf32>
    %63 = tpu.matmul %61, %62, %cst_41 {dimension_numbers = #tpu.dot_dimension_numbers<[1], [0], [0], [1], [0, 0, 1, 1], [], []>} : vector<16x128xbf16>, vector<128x128xbf16>, vector<16x128xf32> -> vector<16x128xf32>
    %64 = vector.broadcast %60 : vector<1x128xf32> to vector<16x128xf32>
    %65 = arith.addf %63, %64 : vector<16x128xf32>
    %cst_42 = arith.constant -1.000000e+00 : f32
    %cst_43 = arith.constant 8.000000e+00 : f32
    %66 = vector.broadcast %cst_42 : f32 to vector<16x128xf32>
    %67 = arith.maximumf %66, %65 : vector<16x128xf32>
    %68 = vector.broadcast %cst_43 : f32 to vector<16x128xf32>
    %69 = arith.minimumf %68, %67 : vector<16x128xf32>
    %c0_44 = arith.constant 0 : index
    %c0_45 = arith.constant 0 : index
    %70 = vector.load %arg13[%c0_44, %c0_45] : memref<16x128xf32, #tpu.memory_space<vmem>>, vector<16x128xf32>
    tpu.vector_store %arg13[%c0_44, %c0_45], %69 {strides = array<i32>} : memref<16x128xf32, #tpu.memory_space<vmem>>, vector<16x128xf32>,
    return
  }
  func.func @transform_0(%arg0: i32) -> (i32, i32) {
    %c0_i32 = arith.constant 0 : i32
    %c0_i32_0 = arith.constant 0 : i32
    return %arg0, %c0_i32 : i32, i32
  }
  func.func @transform_1(%arg0: i32) -> (i32, i32) {
    %c0_i32 = arith.constant 0 : i32
    %c0_i32_0 = arith.constant 0 : i32
    return %arg0, %c0_i32 : i32, i32
  }
  func.func @transform_2(%arg0: i32) -> (i32, i32) {
    %c0_i32 = arith.constant 0 : i32
    %c0_i32_0 = arith.constant 0 : i32
    return %arg0, %c0_i32 : i32, i32
  }
  func.func @transform_3(%arg0: i32) -> (i32, i32) {
    %c0_i32 = arith.constant 0 : i32
    %c0_i32_0 = arith.constant 0 : i32
    return %arg0, %c0_i32 : i32, i32
  }
  func.func @transform_4(%arg0: i32) -> (i32, i32) {
    %c0_i32 = arith.constant 0 : i32
    %c0_i32_0 = arith.constant 0 : i32
    %c0_i32_1 = arith.constant 0 : i32
    return %c0_i32, %c0_i32_0 : i32, i32
  }
  func.func @transform_5(%arg0: i32) -> (i32, i32) {
    %c0_i32 = arith.constant 0 : i32
    %c0_i32_0 = arith.constant 0 : i32
    %c0_i32_1 = arith.constant 0 : i32
    return %c0_i32, %c0_i32_0 : i32, i32
  }
  func.func @transform_6(%arg0: i32) -> (i32, i32) {
    %c0_i32 = arith.constant 0 : i32
    %c0_i32_0 = arith.constant 0 : i32
    %c0_i32_1 = arith.constant 0 : i32
    return %c0_i32, %c0_i32_0 : i32, i32
  }
  func.func @transform_7(%arg0: i32) -> (i32, i32) {
    %c0_i32 = arith.constant 0 : i32
    %c0_i32_0 = arith.constant 0 : i32
    %c0_i32_1 = arith.constant 0 : i32
    return %c0_i32, %c0_i32_0 : i32, i32
  }
  func.func @transform_8(%arg0: i32) -> (i32, i32) {
    %c0_i32 = arith.constant 0 : i32
    %c0_i32_0 = arith.constant 0 : i32
    %c0_i32_1 = arith.constant 0 : i32
    return %c0_i32, %c0_i32_0 : i32, i32
  }
  func.func @transform_9(%arg0: i32) -> (i32, i32) {
    %c0_i32 = arith.constant 0 : i32
    %c0_i32_0 = arith.constant 0 : i32
    %c0_i32_1 = arith.constant 0 : i32
    return %c0_i32, %c0_i32_0 : i32, i32
  }
  func.func @transform_10(%arg0: i32) -> (i32, i32) {
    %c0_i32 = arith.constant 0 : i32
    %c0_i32_0 = arith.constant 0 : i32
    %c0_i32_1 = arith.constant 0 : i32
    return %c0_i32, %c0_i32_0 : i32, i32
  }
  func.func @transform_11(%arg0: i32) -> (i32, i32) {
    %c0_i32 = arith.constant 0 : i32
    %c0_i32_0 = arith.constant 0 : i32
    %c0_i32_1 = arith.constant 0 : i32
    return %c0_i32, %c0_i32_0 : i32, i32
  }
  func.func @transform_12(%arg0: i32) -> (i32, i32) {
    %c0_i32 = arith.constant 0 : i32
    %c0_i32_0 = arith.constant 0 : i32
    return %arg0, %c0_i32 : i32, i32
  }
  func.func @transform_13(%arg0: i32) -> (i32, i32) {
    %c0_i32 = arith.constant 0 : i32
    %c0_i32_0 = arith.constant 0 : i32
    return %arg0, %c0_i32 : i32, i32
  }
}

</mosaic_0001>

<llo_original>
// kernel: tpu_custom_call.1
$region0: #{tpu_custom_call.1}
  #allocation0 [shape = 'u32[]', space=smem, size = 0x4, offset = 0x4, fixed_abs, tag = 'smem constant byte address 0x4 - core index']
  #allocation1 [shape = 'u32[72,128]{1,0:T(1,128)}', space=vmem, size = 0x9000, scoped, tag = 'internal scratch']
  %s0 = inlined_call_operand.hbm [shape: bf16[32,128], index: 0, kind: input, shape index: {}]
  %s1 = inlined_call_operand.hbm [shape: bf16[32,128], index: 1, kind: input, shape index: {}]
  %s2 = inlined_call_operand.hbm [shape: f32[32,128], index: 2, kind: input, shape index: {}]
  %s3 = inlined_call_operand.hbm [shape: f32[32,128], index: 3, kind: input, shape index: {}]
  %s4 = inlined_call_operand.hbm [shape: f32[1,1024], index: 4, kind: input, shape index: {}]
  %s5 = inlined_call_operand.hbm [shape: bf16[128,128], index: 5, kind: input, shape index: {}]
  %s6 = inlined_call_operand.hbm [shape: bf16[128,256], index: 6, kind: input, shape index: {}]
  %s7 = inlined_call_operand.hbm [shape: bf16[128,128], index: 7, kind: input, shape index: {}]
  %s8 = inlined_call_operand.hbm [shape: bf16[128,256], index: 8, kind: input, shape index: {}]
  %s9 = inlined_call_operand.hbm [shape: bf16[128,128], index: 9, kind: input, shape index: {}]
  %s10 = inlined_call_operand.hbm [shape: bf16[128,128], index: 10, kind: input, shape index: {}]
  %s11 = inlined_call_operand.hbm [shape: bf16[128,128], index: 11, kind: input, shape index: {}]
  %s12 = inlined_call_operand.hbm [shape: f32[32,128], index: 12, kind: output, shape index: {0}]
  %s13 = inlined_call_operand.hbm [shape: bf16[32,512], index: 13, kind: output, shape index: {1}]
  %14 = xla_tuple %s12, %s13
  %s15 = sld [smem:[#allocation0]]
  $region137: #{tpu_custom_call.1} parent=0
    _
  %s17 = ssub.s32 1, %s15
  %s18 = scalar_select 0, %s17, %s15
  $region1: #{tpu_custom_call.1} parent=0
    #allocation2 [shape = 'u8[8192]{0}', space=vmem, size = 0x2000, scoped, tag = 'input window, operand 0']
    #allocation3 [shape = 's32[2]{0}', space=sflag, size = 0x8, scoped, tag = 'scoped memory for tpu_custom_call.1']
    #allocation4 [shape = 's32[2]{0}', space=sflag, size = 0x8, scoped, tag = 'scoped memory for tpu_custom_call.1']
    #allocation5 [shape = 'u8[8192]{0}', space=vmem, size = 0x2000, scoped, tag = 'input window, operand 1']
    #allocation6 [shape = 's32[2]{0}', space=sflag, size = 0x8, scoped, tag = 'scoped memory for tpu_custom_call.1']
    #allocation7 [shape = 'u8[16384]{0}', space=vmem, size = 0x4000, scoped, tag = 'input window, operand 2']
    #allocation8 [shape = 'u8[16384]{0}', space=vmem, size = 0x4000, scoped, tag = 'input window, operand 3']
    #allocation9 [shape = 's32[2]{0}', space=sflag, size = 0x8, scoped, tag = 'scoped memory for tpu_custom_call.1']
    #allocation10 [shape = 'u8[4096]{0}', space=vmem, size = 0x1000, scoped, tag = 'input window, operand 4, single buffered']
    #allocation11 [shape = 'u8[32768]{0}', space=vmem, size = 0x8000, scoped, tag = 'input window, operand 5, single buffered']
    #allocation12 [shape = 's32[1]{0}', space=sflag, size = 0x4, scoped, tag = 'scoped memory for tpu_custom_call.1']
    #allocation13 [shape = 'u8[65536]{0}', space=vmem, size = 0x10000, scoped, tag = 'input window, operand 6, single buffered']
    #allocation14 [shape = 'u8[32768]{0}', space=vmem, size = 0x8000, scoped, tag = 'input window, operand 7, single buffered']
    #allocation15 [shape = 's32[1]{0}', space=sflag, size = 0x4, scoped, tag = 'scoped memory for tpu_custom_call.1']
    #allocation16 [shape = 'u8[65536]{0}', space=vmem, size = 0x10000, scoped, tag = 'input window, operand 8, single buffered']
    #allocation17 [shape = 'u8[32768]{0}', space=vmem, size = 0x8000, scoped, tag = 'input window, operand 9, single buffered']
    #allocation18 [shape = 's32[1]{0}', space=sflag, size = 0x4, scoped, tag = 'scoped memory for tpu_custom_call.1']
    #allocation19 [shape = 'u8[32768]{0}', space=vmem, size = 0x8000, scoped, tag = 'input window, operand 10, single buffered']
    #allocation20 [shape = 'u8[32768]{0}', space=vmem, size = 0x8000, scoped, tag = 'input window, operand 11, single buffered']
    #allocation21 [shape = 's32[1]{0}', space=sflag, size = 0x4, scoped, tag = 'scoped memory for tpu_custom_call.1']
    #allocation22 [shape = 'u8[16384]{0}', space=vmem, size = 0x4000, scoped, tag = 'output window, operand 0']
    #allocation23 [shape = 'u8[32768]{0}', space=vmem, size = 0x8000, scoped, tag = 'output window, operand 1']
    #allocation24 [shape = 's32[2]{0}', space=sflag, size = 0x8, scoped, tag = 'scoped memory for tpu_custom_call.1']
    %19 = vsyncpa [#allocation3], 0
    %s20 = scalar_lea.sflag [#allocation3], 1
    %21 = vsyncpa %s20, 0
    %22 = vsyncpa [#allocation6], 0
    %s23 = scalar_lea.sflag [#allocation6], 1
    %24 = vsyncpa %s23, 0
    %25 = vsyncpa [#allocation9], 0
    %s26 = scalar_lea.sflag [#allocation9], 1
    %27 = vsyncpa %s26, 0
    %28 = vsyncpa [#allocation12], 0
    %29 = vsyncpa [#allocation15], 0
    %30 = vsyncpa [#allocation18], 0
    %31 = vsyncpa [#allocation21], 0
    %32 = vsyncpa [#allocation4], 0
    %s33 = scalar_lea.sflag [#allocation4], 1
    %34 = vsyncpa %s33, 0
    %35 = vsyncpa [#allocation24], 0
    %s36 = scalar_lea.sflag [#allocation24], 1
    %37 = vsyncpa %s36, 0
    loop: start=0, step=1, limit=4
    $region2: #{tpu_custom_call.1} parent=1 // loop_pre_header
      _
    $region3: #{tpu_custom_call.1} parent=1 // loop_header
      %s39 = sphi 0, %s43
      %p40 = scmp.ge.s32.totalorder %s39, 4
      %s49 = sphi 0, %s51
      %s52 = sphi 0, %s49
      %s53 = sphi 0, %s52
      %s69 = sphi 0, %s53
      %s75 = sphi 0, %s77
      %s78 = sphi 0, %s75
      %s79 = sphi 0, %s78
      %s95 = sphi 0, %s79
      %s101 = sphi 0, %s103
      %s104 = sphi 0, %s101
      %s105 = sphi 0, %s104
      %s121 = sphi 0, %s105
      %s127 = sphi 0, %s129
      %s130 = sphi 0, %s127
      %s131 = sphi 0, %s130
      %s147 = sphi 0, %s131
      %s151 = sphi 0, %s151
      %s153 = sphi 0, %s151
      %s154 = sphi 0, %s153
      %s168 = sphi 0, %s154
      %s172 = sphi 0, %s172
      %s174 = sphi 0, %s172
      %s175 = sphi 0, %s174
      %s189 = sphi 0, %s175
      %s193 = sphi 0, %s193
      %s195 = sphi 0, %s193
      %s196 = sphi 0, %s195
      %s210 = sphi 0, %s196
      %s214 = sphi 0, %s214
      %s216 = sphi 0, %s214
      %s217 = sphi 0, %s216
      %s231 = sphi 0, %s217
      %s235 = sphi 0, %s235
      %s237 = sphi 0, %s235
      %s238 = sphi 0, %s237
      %s252 = sphi 0, %s238
      %s256 = sphi 0, %s256
      %s258 = sphi 0, %s256
      %s259 = sphi 0, %s258
      %s273 = sphi 0, %s259
      %s277 = sphi 0, %s277
      %s279 = sphi 0, %s277
      %s280 = sphi 0, %s279
      %s294 = sphi 0, %s280
      %s298 = sphi 0, %s298
      %s300 = sphi 0, %s298
      %s301 = sphi 0, %s300
      %s315 = sphi 0, %s301
      %s321 = sphi 0, %s323
      %s324 = sphi 0, %s321
      %s325 = sphi 0, %s324
      %s341 = sphi 0, %s325
      %s347 = sphi 0, %s349
      %s350 = sphi 0, %s347
      %s351 = sphi 0, %s350
      %s367 = sphi 0, %s351
    $region4: #{tpu_custom_call.1} parent=1 // loop_header_branch
      %42 = sbr.rel (%p40) target = $region8
    $region5: #{tpu_custom_call.1} parent=1 // loop_body
      %s44 = ssub.s32 %s39, 1
      %s45 = ssub.s32 %s39, 2
      %s46 = sadd.s32 %s39, 1
      %s47 = ssub.s32 %s39, %s46
      %p48 = scmp.eq.s32.totalorder %s47, 0
      %s50 = sadd.s32 %s49, 1
      %s51 = scalar_select %p48, %s49, %s50
      %p54 = pneg %p48
      %p55 = scmp.eq.s32.totalorder %s39, 1
      %p56 = por %p54, %p55
      %p57 = scmp.ne.s32.totalorder %s49, %s52
      %p58 = scmp.eq.s32.totalorder %s39, 0
      %p59 = por %p57, %p58
      %p60 = scmp.ne.s32.totalorder %s49, %s52
      %p61 = scmp.eq.s32.totalorder %s44, 1
      %p62 = por %p60, %p61
      %p63 = scmp.ne.s32.totalorder %s52, %s53
      %p64 = scmp.eq.s32.totalorder %s44, 0
      %p65 = por %p63, %p64
      %p66 = scmp.ne.s32.totalorder %s52, %s53
      %p67 = scmp.eq.s32.totalorder %s45, 1
      %p68 = por %p66, %p67
      %p70 = scmp.ne.s32.totalorder %s53, %s69
      %p71 = scmp.eq.s32.totalorder %s45, 0
      %p72 = por %p70, %p71
      %s73 = ssub.s32 %s39, %s46
      %p74 = scmp.eq.s32.totalorder %s73, 0
      %s76 = sadd.s32 %s75, 1
      %s77 = scalar_select %p74, %s75, %s76
      %p80 = pneg %p74
      %p81 = scmp.eq.s32.totalorder %s39, 1
      %p82 = por %p80, %p81
      %p83 = scmp.ne.s32.totalorder %s75, %s78
      %p84 = scmp.eq.s32.totalorder %s39, 0
      %p85 = por %p83, %p84
      %p86 = scmp.ne.s32.totalorder %s75, %s78
      %p87 = scmp.eq.s32.totalorder %s44, 1
      %p88 = por %p86, %p87
      %p89 = scmp.ne.s32.totalorder %s78, %s79
      %p90 = scmp.eq.s32.totalorder %s44, 0
      %p91 = por %p89, %p90
      %p92 = scmp.ne.s32.totalorder %s78, %s79
      %p93 = scmp.eq.s32.totalorder %s45, 1
      %p94 = por %p92, %p93
      %p96 = scmp.ne.s32.totalorder %s79, %s95
      %p97 = scmp.eq.s32.totalorder %s45, 0
      %p98 = por %p96, %p97
      %s99 = ssub.s32 %s39, %s46
      %p100 = scmp.eq.s32.totalorder %s99, 0
      %s102 = sadd.s32 %s101, 1
      %s103 = scalar_select %p100, %s101, %s102
      %p106 = pneg %p100
      %p107 = scmp.eq.s32.totalorder %s39, 1
      %p108 = por %p106, %p107
      %p109 = scmp.ne.s32.totalorder %s101, %s104
      %p110 = scmp.eq.s32.totalorder %s39, 0
      %p111 = por %p109, %p110
      %p112 = scmp.ne.s32.totalorder %s101, %s104
      %p113 = scmp.eq.s32.totalorder %s44, 1
      %p114 = por %p112, %p113
      %p115 = scmp.ne.s32.totalorder %s104, %s105
      %p116 = scmp.eq.s32.totalorder %s44, 0
      %p117 = por %p115, %p116
      %p118 = scmp.ne.s32.totalorder %s104, %s105
      %p119 = scmp.eq.s32.totalorder %s45, 1
      %p120 = por %p118, %p119
      %p122 = scmp.ne.s32.totalorder %s105, %s121
      %p123 = scmp.eq.s32.totalorder %s45, 0
      %p124 = por %p122, %p123
      %s125 = ssub.s32 %s39, %s46
      %p126 = scmp.eq.s32.totalorder %s125, 0
      %s128 = sadd.s32 %s127, 1
      %s129 = scalar_select %p126, %s127, %s128
      %p132 = pneg %p126
      %p133 = scmp.eq.s32.totalorder %s39, 1
      %p134 = por %p132, %p133
      %p135 = scmp.ne.s32.totalorder %s127, %s130
      %p136 = scmp.eq.s32.totalorder %s39, 0
      %p137 = por %p135, %p136
      %p138 = scmp.ne.s32.totalorder %s127, %s130
      %p139 = scmp.eq.s32.totalorder %s44, 1
      %p140 = por %p138, %p139
      %p141 = scmp.ne.s32.totalorder %s130, %s131
      %p142 = scmp.eq.s32.totalorder %s44, 0
      %p143 = por %p141, %p142
      %p144 = scmp.ne.s32.totalorder %s130, %s131
      %p145 = scmp.eq.s32.totalorder %s45, 1
      %p146 = por %p144, %p145
      %p148 = scmp.ne.s32.totalorder %s131, %s147
      %p149 = scmp.eq.s32.totalorder %s45, 0
      %p150 = por %p148, %p149
      %s152 = sadd.s32 %s151, 1
      %p155 = scmp.eq.s32.totalorder %s39, 1
      %p156 = scmp.ne.s32.totalorder %s151, %s153
      %p157 = scmp.eq.s32.totalorder %s39, 0
      %p158 = por %p156, %p157
      %p159 = scmp.ne.s32.totalorder %s151, %s153
      %p160 = scmp.eq.s32.totalorder %s44, 1
      %p161 = por %p159, %p160
      %p162 = scmp.ne.s32.totalorder %s153, %s154
      %p163 = scmp.eq.s32.totalorder %s44, 0
      %p164 = por %p162, %p163
      %p165 = scmp.ne.s32.totalorder %s153, %s154
      %p166 = scmp.eq.s32.totalorder %s45, 1
      %p167 = por %p165, %p166
      %p169 = scmp.ne.s32.totalorder %s154, %s168
      %p170 = scmp.eq.s32.totalorder %s45, 0
      %p171 = por %p169, %p170
      %s173 = sadd.s32 %s172, 1
      %p176 = scmp.eq.s32.totalorder %s39, 1
      %p177 = scmp.ne.s32.totalorder %s172, %s174
      %p178 = scmp.eq.s32.totalorder %s39, 0
      %p179 = por %p177, %p178
      %p180 = scmp.ne.s32.totalorder %s172, %s174
      %p181 = scmp.eq.s32.totalorder %s44, 1
      %p182 = por %p180, %p181
      %p183 = scmp.ne.s32.totalorder %s174, %s175
      %p184 = scmp.eq.s32.totalorder %s44, 0
      %p185 = por %p183, %p184
      %p186 = scmp.ne.s32.totalorder %s174, %s175
      %p187 = scmp.eq.s32.totalorder %s45, 1
      %p188 = por %p186, %p187
      %p190 = scmp.ne.s32.totalorder %s175, %s189
      %p191 = scmp.eq.s32.totalorder %s45, 0
      %p192 = por %p190, %p191
      %s194 = sadd.s32 %s193, 1
      %p197 = scmp.eq.s32.totalorder %s39, 1
      %p198 = scmp.ne.s32.totalorder %s193, %s195
      %p199 = scmp.eq.s32.totalorder %s39, 0
      %p200 = por %p198, %p199
      %p201 = scmp.ne.s32.totalorder %s193, %s195
      %p202 = scmp.eq.s32.totalorder %s44, 1
      %p203 = por %p201, %p202
      %p204 = scmp.ne.s32.totalorder %s195, %s196
      %p205 = scmp.eq.s32.totalorder %s44, 0
      %p206 = por %p204, %p205
      %p207 = scmp.ne.s32.totalorder %s195, %s196
      %p208 = scmp.eq.s32.totalorder %s45, 1
      %p209 = por %p207, %p208
      %p211 = scmp.ne.s32.totalorder %s196, %s210
      %p212 = scmp.eq.s32.totalorder %s45, 0
      %p213 = por %p211, %p212
      %s215 = sadd.s32 %s214, 1
      %p218 = scmp.eq.s32.totalorder %s39, 1
      %p219 = scmp.ne.s32.totalorder %s214, %s216
      %p220 = scmp.eq.s32.totalorder %s39, 0
      %p221 = por %p219, %p220
      %p222 = scmp.ne.s32.totalorder %s214, %s216
      %p223 = scmp.eq.s32.totalorder %s44, 1
      %p224 = por %p222, %p223
      %p225 = scmp.ne.s32.totalorder %s216, %s217
      %p226 = scmp.eq.s32.totalorder %s44, 0
      %p227 = por %p225, %p226
      %p228 = scmp.ne.s32.totalorder %s216, %s217
      %p229 = scmp.eq.s32.totalorder %s45, 1
      %p230 = por %p228, %p229
      %p232 = scmp.ne.s32.totalorder %s217, %s231
      %p233 = scmp.eq.s32.totalorder %s45, 0
      %p234 = por %p232, %p233
      %s236 = sadd.s32 %s235, 1
      %p239 = scmp.eq.s32.totalorder %s39, 1
      %p240 = scmp.ne.s32.totalorder %s235, %s237
      %p241 = scmp.eq.s32.totalorder %s39, 0
      %p242 = por %p240, %p241
      %p243 = scmp.ne.s32.totalorder %s235, %s237
      %p244 = scmp.eq.s32.totalorder %s44, 1
      %p245 = por %p243, %p244
      %p246 = scmp.ne.s32.totalorder %s237, %s238
      %p247 = scmp.eq.s32.totalorder %s44, 0
      %p248 = por %p246, %p247
      %p249 = scmp.ne.s32.totalorder %s237, %s238
      %p250 = scmp.eq.s32.totalorder %s45, 1
      %p251 = por %p249, %p250
      %p253 = scmp.ne.s32.totalorder %s238, %s252
      %p254 = scmp.eq.s32.totalorder %s45, 0
      %p255 = por %p253, %p254
      %s257 = sadd.s32 %s256, 1
      %p260 = scmp.eq.s32.totalorder %s39, 1
      %p261 = scmp.ne.s32.totalorder %s256, %s258
      %p262 = scmp.eq.s32.totalorder %s39, 0
      %p263 = por %p261, %p262
      %p264 = scmp.ne.s32.totalorder %s256, %s258
      %p265 = scmp.eq.s32.totalorder %s44, 1
      %p266 = por %p264, %p265
      %p267 = scmp.ne.s32.totalorder %s258, %s259
      %p268 = scmp.eq.s32.totalorder %s44, 0
      %p269 = por %p267, %p268
      %p270 = scmp.ne.s32.totalorder %s258, %s259
      %p271 = scmp.eq.s32.totalorder %s45, 1
      %p272 = por %p270, %p271
      %p274 = scmp.ne.s32.totalorder %s259, %s273
      %p275 = scmp.eq.s32.totalorder %s45, 0
      %p276 = por %p274, %p275
      %s278 = sadd.s32 %s277, 1
      %p281 = scmp.eq.s32.totalorder %s39, 1
      %p282 = scmp.ne.s32.totalorder %s277, %s279
      %p283 = scmp.eq.s32.totalorder %s39, 0
      %p284 = por %p282, %p283
      %p285 = scmp.ne.s32.totalorder %s277, %s279
      %p286 = scmp.eq.s32.totalorder %s44, 1
      %p287 = por %p285, %p286
      %p288 = scmp.ne.s32.totalorder %s279, %s280
      %p289 = scmp.eq.s32.totalorder %s44, 0
      %p290 = por %p288, %p289
      %p291 = scmp.ne.s32.totalorder %s279, %s280
      %p292 = scmp.eq.s32.totalorder %s45, 1
      %p293 = por %p291, %p292
      %p295 = scmp.ne.s32.totalorder %s280, %s294
      %p296 = scmp.eq.s32.totalorder %s45, 0
      %p297 = por %p295, %p296
      %s299 = sadd.s32 %s298, 1
      %p302 = scmp.eq.s32.totalorder %s39, 1
      %p303 = scmp.ne.s32.totalorder %s298, %s300
      %p304 = scmp.eq.s32.totalorder %s39, 0
      %p305 = por %p303, %p304
      %p306 = scmp.ne.s32.totalorder %s298, %s300
      %p307 = scmp.eq.s32.totalorder %s44, 1
      %p308 = por %p306, %p307
      %p309 = scmp.ne.s32.totalorder %s300, %s301
      %p310 = scmp.eq.s32.totalorder %s44, 0
      %p311 = por %p309, %p310
      %p312 = scmp.ne.s32.totalorder %s300, %s301
      %p313 = scmp.eq.s32.totalorder %s45, 1
      %p314 = por %p312, %p313
      %p316 = scmp.ne.s32.totalorder %s301, %s315
      %p317 = scmp.eq.s32.totalorder %s45, 0
      %p318 = por %p316, %p317
      %s319 = ssub.s32 %s39, %s46
      %p320 = scmp.eq.s32.totalorder %s319, 0
      %s322 = sadd.s32 %s321, 1
      %s323 = scalar_select %p320, %s321, %s322
      %p326 = pneg %p320
      %p327 = scmp.eq.s32.totalorder %s39, 1
      %p328 = por %p326, %p327
      %p329 = scmp.ne.s32.totalorder %s321, %s324
      %p330 = scmp.eq.s32.totalorder %s39, 0
      %p331 = por %p329, %p330
      %p332 = scmp.ne.s32.totalorder %s321, %s324
      %p333 = scmp.eq.s32.totalorder %s44, 1
      %p334 = por %p332, %p333
      %p335 = scmp.ne.s32.totalorder %s324, %s325
      %p336 = scmp.eq.s32.totalorder %s44, 0
      %p337 = por %p335, %p336
      %p338 = scmp.ne.s32.totalorder %s324, %s325
      %p339 = scmp.eq.s32.totalorder %s45, 1
      %p340 = por %p338, %p339
      %p342 = scmp.ne.s32.totalorder %s325, %s341
      %p343 = scmp.eq.s32.totalorder %s45, 0
      %p344 = por %p342, %p343
      %s345 = ssub.s32 %s39, %s46
      %p346 = scmp.eq.s32.totalorder %s345, 0
      %s348 = sadd.s32 %s347, 1
      %s349 = scalar_select %p346, %s347, %s348
      %p352 = pneg %p346
      %p353 = scmp.eq.s32.totalorder %s39, 1
      %p354 = por %p352, %p353
      %p355 = scmp.ne.s32.totalorder %s347, %s350
      %p356 = scmp.eq.s32.totalorder %s39, 0
      %p357 = por %p355, %p356
      %p358 = scmp.ne.s32.totalorder %s347, %s350
      %p359 = scmp.eq.s32.totalorder %s44, 1
      %p360 = por %p358, %p359
      %p361 = scmp.ne.s32.totalorder %s350, %s351
      %p362 = scmp.eq.s32.totalorder %s44, 0
      %p363 = por %p361, %p362
      %p364 = scmp.ne.s32.totalorder %s350, %s351
      %p365 = scmp.eq.s32.totalorder %s45, 1
      %p366 = por %p364, %p365
      %p368 = scmp.ne.s32.totalorder %s351, %s367
      %p369 = scmp.eq.s32.totalorder %s45, 0
      %p370 = por %p368, %p369
      %p371 = scmp.le.s32.totalorder 1, %s39
      %p372 = scmp.lt.s32.totalorder %s39, 3
      %p373 = pnand %p371, %p372
      %p374 = pneg %p373
      // Predicated region
      $region9: #{tpu_custom_call.1} parent=5 // pred_check
        _
      $region10: #{tpu_custom_call.1} parent=5 // pred_check_branch
        %376 = sbr.rel (%p373) target = $region12
      $region11: #{tpu_custom_call.1} parent=5 // pred_region
        %s377 = ssub.s32 %s39, 1
        // Predicated region
        $region13: #{tpu_custom_call.1} parent=11 // pred_check
          %p378 = pneg %p164
        $region14: #{tpu_custom_call.1} parent=11 // pred_check_branch
          %380 = sbr.rel (%p378) target = $region16
        $region15: #{tpu_custom_call.1} parent=11 // pred_region
          %382 = vsyncadd [#allocation9], 0
          %s384 = sshll.u32 %s4, 4
          %s385 = int_to_ptr.hbm [resolvable:$true] %s384
          %s386 = sshll.u32 [#allocation10], 4
          %s387 = int_to_ptr.vmem [resolvable:$true] %s386
          %389 = dma.hbm_to_vmem [thread:$0]  %s385, 128, %s387, [#allocation9]
        $region16: #{tpu_custom_call.1} parent=11 // pred_fallthru
          _
        // Predicated region
        $region17: #{tpu_custom_call.1} parent=11 // pred_check
          %p390 = pneg %p185
        $region18: #{tpu_custom_call.1} parent=11 // pred_check_branch
          %392 = sbr.rel (%p390) target = $region20
        $region19: #{tpu_custom_call.1} parent=11 // pred_region
          %394 = vsyncadd [#allocation12], 0
          %s395 = sshll.u32 %s5, 4
          %s396 = int_to_ptr.hbm [resolvable:$true] %s395
          %s397 = sshll.u32 [#allocation11], 4
          %s398 = int_to_ptr.vmem [resolvable:$true] %s397
          %403 = dma.hbm_to_vmem [thread:$0]  %s396, 1024, %s398, [#allocation12], 64, 64, 4
        $region20: #{tpu_custom_call.1} parent=11 // pred_fallthru
          _
        // Predicated region
        $region21: #{tpu_custom_call.1} parent=11 // pred_check
          %p404 = pneg %p206
        $region22: #{tpu_custom_call.1} parent=11 // pred_check_branch
          %406 = sbr.rel (%p404) target = $region24
        $region23: #{tpu_custom_call.1} parent=11 // pred_region
          %408 = vsyncadd [#allocation12], 0
          %s409 = sshll.u32 %s6, 4
          %s410 = int_to_ptr.hbm [resolvable:$true] %s409
          %s411 = sshll.u32 [#allocation13], 4
          %s412 = int_to_ptr.vmem [resolvable:$true] %s411
          %417 = dma.hbm_to_vmem [thread:$0]  %s410, 2048, %s412, [#allocation12], 128, 128, 8
        $region24: #{tpu_custom_call.1} parent=11 // pred_fallthru
          _
        // Predicated region
        $region25: #{tpu_custom_call.1} parent=11 // pred_check
          %p418 = pneg %p227
        $region26: #{tpu_custom_call.1} parent=11 // pred_check_branch
          %420 = sbr.rel (%p418) target = $region28
        $region27: #{tpu_custom_call.1} parent=11 // pred_region
          %422 = vsyncadd [#allocation15], 0
          %s423 = sshll.u32 %s7, 4
          %s424 = int_to_ptr.hbm [resolvable:$true] %s423
          %s425 = sshll.u32 [#allocation14], 4
          %s426 = int_to_ptr.vmem [resolvable:$true] %s425
          %431 = dma.hbm_to_vmem [thread:$0]  %s424, 1024, %s426, [#allocation15], 64, 64, 4
        $region28: #{tpu_custom_call.1} parent=11 // pred_fallthru
          _
        // Predicated region
        $region29: #{tpu_custom_call.1} parent=11 // pred_check
          %p432 = pneg %p248
        $region30: #{tpu_custom_call.1} parent=11 // pred_check_branch
          %434 = sbr.rel (%p432) target = $region32
        $region31: #{tpu_custom_call.1} parent=11 // pred_region
          %436 = vsyncadd [#allocation15], 0
          %s437 = sshll.u32 %s8, 4
          %s438 = int_to_ptr.hbm [resolvable:$true] %s437
          %s439 = sshll.u32 [#allocation16], 4
          %s440 = int_to_ptr.vmem [resolvable:$true] %s439
          %445 = dma.hbm_to_vmem [thread:$0]  %s438, 2048, %s440, [#allocation15], 128, 128, 8
        $region32: #{tpu_custom_call.1} parent=11 // pred_fallthru
          _
        // Predicated region
        $region33: #{tpu_custom_call.1} parent=11 // pred_check
          %p446 = pneg %p269
        $region34: #{tpu_custom_call.1} parent=11 // pred_check_branch
          %448 = sbr.rel (%p446) target = $region36
        $region35: #{tpu_custom_call.1} parent=11 // pred_region
          %450 = vsyncadd [#allocation18], 0
          %s451 = sshll.u32 %s9, 4
          %s452 = int_to_ptr.hbm [resolvable:$true] %s451
          %s453 = sshll.u32 [#allocation17], 4
          %s454 = int_to_ptr.vmem [resolvable:$true] %s453
          %459 = dma.hbm_to_vmem [thread:$0]  %s452, 1024, %s454, [#allocation18], 64, 64, 4
        $region36: #{tpu_custom_call.1} parent=11 // pred_fallthru
          _
        // Predicated region
        $region37: #{tpu_custom_call.1} parent=11 // pred_check
          %p460 = pneg %p290
        $region38: #{tpu_custom_call.1} parent=11 // pred_check_branch
          %462 = sbr.rel (%p460) target = $region40
        $region39: #{tpu_custom_call.1} parent=11 // pred_region
          %464 = vsyncadd [#allocation18], 0
          %s465 = sshll.u32 %s10, 4
          %s466 = int_to_ptr.hbm [resolvable:$true] %s465
          %s467 = sshll.u32 [#allocation19], 4
          %s468 = int_to_ptr.vmem [resolvable:$true] %s467
          %473 = dma.hbm_to_vmem [thread:$0]  %s466, 1024, %s468, [#allocation18], 64, 64, 4
        $region40: #{tpu_custom_call.1} parent=11 // pred_fallthru
          _
        // Predicated region
        $region41: #{tpu_custom_call.1} parent=11 // pred_check
          %p474 = pneg %p311
        $region42: #{tpu_custom_call.1} parent=11 // pred_check_branch
          %476 = sbr.rel (%p474) target = $region44
        $region43: #{tpu_custom_call.1} parent=11 // pred_region
          %478 = vsyncadd [#allocation21], 0
          %s479 = sshll.u32 %s11, 4
          %s480 = int_to_ptr.hbm [resolvable:$true] %s479
          %s481 = sshll.u32 [#allocation20], 4
          %s482 = int_to_ptr.vmem [resolvable:$true] %s481
          %487 = dma.hbm_to_vmem [thread:$0]  %s480, 1024, %s482, [#allocation21], 64, 64, 4
        $region44: #{tpu_custom_call.1} parent=11 // pred_fallthru
          _
      $region12: #{tpu_custom_call.1} parent=5 // pred_fallthru
        _
      %p488 = scmp.lt.s32.totalorder %s39, 2
      // Predicated region
      $region45: #{tpu_custom_call.1} parent=5 // pred_check
        %p489 = pneg %p488
      $region46: #{tpu_custom_call.1} parent=5 // pred_check_branch
        %491 = sbr.rel (%p489) target = $region48
      $region47: #{tpu_custom_call.1} parent=5 // pred_region
        // Predicated region
        $region49: #{tpu_custom_call.1} parent=47 // pred_check
          %p492 = pneg %p59
        $region50: #{tpu_custom_call.1} parent=47 // pred_check_branch
          %494 = sbr.rel (%p492) target = $region52
        $region51: #{tpu_custom_call.1} parent=47 // pred_region
          %s495 = sand.u32 %s49, 1
          %s496 = scalar_lea.sflag [#allocation3], %s495
          %s497 = sand.u32 %s49, 1
          %s498 = smul.addr %s497, 8
          %s499 = scalar_lea.vmem [#allocation2], %s498
          %s500 = smul.u32 2, %s39
          %502 = vsyncadd %s496, 0
          %s503 = smul.addr %s500, 4
          %s504 = scalar_lea.hbm %s0, %s503
          %s505 = sshll.u32 %s504, 4
          %s506 = int_to_ptr.hbm [resolvable:$true] %s505
          %s507 = sshll.u32 %s499, 4
          %s508 = int_to_ptr.vmem [resolvable:$true] %s507
          %513 = dma.hbm_to_vmem [thread:$0]  %s506, 128, %s508, %s496, 64, 64, 4
        $region52: #{tpu_custom_call.1} parent=47 // pred_fallthru
          _
        // Predicated region
        $region53: #{tpu_custom_call.1} parent=47 // pred_check
          %p514 = pneg %p85
        $region54: #{tpu_custom_call.1} parent=47 // pred_check_branch
          %516 = sbr.rel (%p514) target = $region56
        $region55: #{tpu_custom_call.1} parent=47 // pred_region
          %s517 = sand.u32 %s39, 1
          %s518 = scalar_lea.sflag [#allocation6], %s517
          %s519 = sand.u32 %s75, 1
          %s520 = smul.addr %s519, 8
          %s521 = scalar_lea.vmem [#allocation5], %s520
          %s522 = smul.u32 2, %s39
          %524 = vsyncadd %s518, 0
          %s525 = smul.addr %s522, 4
          %s526 = scalar_lea.hbm %s1, %s525
          %s527 = sshll.u32 %s526, 4
          %s528 = int_to_ptr.hbm [resolvable:$true] %s527
          %s529 = sshll.u32 %s521, 4
          %s530 = int_to_ptr.vmem [resolvable:$true] %s529
          %535 = dma.hbm_to_vmem [thread:$0]  %s528, 128, %s530, %s518, 64, 64, 4
        $region56: #{tpu_custom_call.1} parent=47 // pred_fallthru
          _
        // Predicated region
        $region57: #{tpu_custom_call.1} parent=47 // pred_check
          %p536 = pneg %p111
        $region58: #{tpu_custom_call.1} parent=47 // pred_check_branch
          %538 = sbr.rel (%p536) target = $region60
        $region59: #{tpu_custom_call.1} parent=47 // pred_region
          %s539 = sand.u32 %s39, 1
          %s540 = scalar_lea.sflag [#allocation6], %s539
          %s541 = sand.u32 %s101, 1
          %s542 = smul.addr %s541, 16
          %s543 = scalar_lea.vmem [#allocation7], %s542
          %s544 = smul.u32 2, %s39
          %546 = vsyncadd %s540, 0
          %s547 = smul.addr %s544, 8
          %s548 = scalar_lea.hbm %s2, %s547
          %s549 = sshll.u32 %s548, 4
          %s550 = int_to_ptr.hbm [resolvable:$true] %s549
          %s551 = sshll.u32 %s543, 4
          %s552 = int_to_ptr.vmem [resolvable:$true] %s551
          %557 = dma.hbm_to_vmem [thread:$0]  %s550, 256, %s552, %s540, 128, 128, 8
        $region60: #{tpu_custom_call.1} parent=47 // pred_fallthru
          _
        // Predicated region
        $region61: #{tpu_custom_call.1} parent=47 // pred_check
          %p558 = pneg %p137
        $region62: #{tpu_custom_call.1} parent=47 // pred_check_branch
          %560 = sbr.rel (%p558) target = $region64
        $region63: #{tpu_custom_call.1} parent=47 // pred_region
          %s561 = sand.u32 %s39, 1
          %s562 = scalar_lea.sflag [#allocation9], %s561
          %s563 = sand.u32 %s127, 1
          %s564 = smul.addr %s563, 16
          %s565 = scalar_lea.vmem [#allocation8], %s564
          %s566 = smul.u32 2, %s39
          %568 = vsyncadd %s562, 0
          %s569 = smul.addr %s566, 8
          %s570 = scalar_lea.hbm %s3, %s569
          %s571 = sshll.u32 %s570, 4
          %s572 = int_to_ptr.hbm [resolvable:$true] %s571
          %s573 = sshll.u32 %s565, 4
          %s574 = int_to_ptr.vmem [resolvable:$true] %s573
          %579 = dma.hbm_to_vmem [thread:$0]  %s572, 256, %s574, %s562, 128, 128, 8
        $region64: #{tpu_custom_call.1} parent=47 // pred_fallthru
          _
      $region48: #{tpu_custom_call.1} parent=5 // pred_fallthru
        _
      %p580 = scmp.le.s32.totalorder 1, %s39
      %p581 = scmp.lt.s32.totalorder %s39, 3
      %p582 = pnand %p580, %p581
      %p583 = pneg %p582
      // Predicated region
      $region65: #{tpu_custom_call.1} parent=5 // pred_check
        _
      $region66: #{tpu_custom_call.1} parent=5 // pred_check_branch
        %585 = sbr.rel (%p582) target = $region68
      $region67: #{tpu_custom_call.1} parent=5 // pred_region
        %s586 = ssub.s32 %s39, 1
        %s587 = sand.u32 %s52, 1
        %s588 = scalar_lea.sflag [#allocation3], %s587
        %s589 = sand.u32 %s52, 1
        %s590 = smul.addr %s589, 8
        %s591 = scalar_lea.vmem [#allocation2], %s590
        // Predicated region
        $region69: #{tpu_custom_call.1} parent=67 // pred_check
          %p592 = pneg %p65
        $region70: #{tpu_custom_call.1} parent=67 // pred_check_branch
          %594 = sbr.rel (%p592) target = $region72
        $region71: #{tpu_custom_call.1} parent=67 // pred_region
          %596 = dma.done %s588, 128
        $region72: #{tpu_custom_call.1} parent=67 // pred_fallthru
          _
        %s597 = sand.u32 %s44, 1
        %s598 = scalar_lea.sflag [#allocation6], %s597
        %s599 = sand.u32 %s78, 1
        %s600 = smul.addr %s599, 8
        %s601 = scalar_lea.vmem [#allocation5], %s600
        // Predicated region
        $region73: #{tpu_custom_call.1} parent=67 // pred_check
          %p602 = pneg %p91
        $region74: #{tpu_custom_call.1} parent=67 // pred_check_branch
          %604 = sbr.rel (%p602) target = $region76
        $region75: #{tpu_custom_call.1} parent=67 // pred_region
          %606 = dma.done %s598, 128
        $region76: #{tpu_custom_call.1} parent=67 // pred_fallthru
          _
        %s607 = sand.u32 %s44, 1
        %s608 = scalar_lea.sflag [#allocation6], %s607
        %s609 = sand.u32 %s104, 1
        %s610 = smul.addr %s609, 16
        %s611 = scalar_lea.vmem [#allocation7], %s610
        // Predicated region
        $region77: #{tpu_custom_call.1} parent=67 // pred_check
          %p612 = pneg %p117
        $region78: #{tpu_custom_call.1} parent=67 // pred_check_branch
          %614 = sbr.rel (%p612) target = $region80
        $region79: #{tpu_custom_call.1} parent=67 // pred_region
          %616 = dma.done %s608, 256
        $region80: #{tpu_custom_call.1} parent=67 // pred_fallthru
          _
        %s617 = sand.u32 %s44, 1
        %s618 = scalar_lea.sflag [#allocation9], %s617
        %s619 = sand.u32 %s130, 1
        %s620 = smul.addr %s619, 16
        %s621 = scalar_lea.vmem [#allocation8], %s620
        // Predicated region
        $region81: #{tpu_custom_call.1} parent=67 // pred_check
          %p622 = pneg %p143
        $region82: #{tpu_custom_call.1} parent=67 // pred_check_branch
          %624 = sbr.rel (%p622) target = $region84
        $region83: #{tpu_custom_call.1} parent=67 // pred_region
          %626 = dma.done %s618, 256
        $region84: #{tpu_custom_call.1} parent=67 // pred_fallthru
          _
        // Predicated region
        $region85: #{tpu_custom_call.1} parent=67 // pred_check
          %p627 = pneg %p164
        $region86: #{tpu_custom_call.1} parent=67 // pred_check_branch
          %629 = sbr.rel (%p627) target = $region88
        $region87: #{tpu_custom_call.1} parent=67 // pred_region
          %631 = dma.done [#allocation9], 128
        $region88: #{tpu_custom_call.1} parent=67 // pred_fallthru
          _
        // Predicated region
        $region89: #{tpu_custom_call.1} parent=67 // pred_check
          %p632 = pneg %p185
        $region90: #{tpu_custom_call.1} parent=67 // pred_check_branch
          %634 = sbr.rel (%p632) target = $region92
        $region91: #{tpu_custom_call.1} parent=67 // pred_region
          %636 = dma.done [#allocation12], 1024
        $region92: #{tpu_custom_call.1} parent=67 // pred_fallthru
          _
        // Predicated region
        $region93: #{tpu_custom_call.1} parent=67 // pred_check
          %p637 = pneg %p206
        $region94: #{tpu_custom_call.1} parent=67 // pred_check_branch
          %639 = sbr.rel (%p637) target = $region96
        $region95: #{tpu_custom_call.1} parent=67 // pred_region
          %641 = dma.done [#allocation12], 2048
        $region96: #{tpu_custom_call.1} parent=67 // pred_fallthru
          _
        // Predicated region
        $region97: #{tpu_custom_call.1} parent=67 // pred_check
          %p642 = pneg %p227
        $region98: #{tpu_custom_call.1} parent=67 // pred_check_branch
          %644 = sbr.rel (%p642) target = $region100
        $region99: #{tpu_custom_call.1} parent=67 // pred_region
          %646 = dma.done [#allocation15], 1024
        $region100: #{tpu_custom_call.1} parent=67 // pred_fallthru
          _
        // Predicated region
        $region101: #{tpu_custom_call.1} parent=67 // pred_check
          %p647 = pneg %p248
        $region102: #{tpu_custom_call.1} parent=67 // pred_check_branch
          %649 = sbr.rel (%p647) target = $region104
        $region103: #{tpu_custom_call.1} parent=67 // pred_region
          %651 = dma.done [#allocation15], 2048
        $region104: #{tpu_custom_call.1} parent=67 // pred_fallthru
          _
        // Predicated region
        $region105: #{tpu_custom_call.1} parent=67 // pred_check
          %p652 = pneg %p269
        $region106: #{tpu_custom_call.1} parent=67 // pred_check_branch
          %654 = sbr.rel (%p652) target = $region108
        $region107: #{tpu_custom_call.1} parent=67 // pred_region
          %656 = dma.done [#allocation18], 1024
        $region108: #{tpu_custom_call.1} parent=67 // pred_fallthru
          _
        // Predicated region
        $region109: #{tpu_custom_call.1} parent=67 // pred_check
          %p657 = pneg %p290
        $region110: #{tpu_custom_call.1} parent=67 // pred_check_branch
          %659 = sbr.rel (%p657) target = $region112
        $region111: #{tpu_custom_call.1} parent=67 // pred_region
          %661 = dma.done [#allocation18], 1024
        $region112: #{tpu_custom_call.1} parent=67 // pred_fallthru
          _
        // Predicated region
        $region113: #{tpu_custom_call.1} parent=67 // pred_check
          %p662 = pneg %p311
        $region114: #{tpu_custom_call.1} parent=67 // pred_check_branch
          %664 = sbr.rel (%p662) target = $region116
        $region115: #{tpu_custom_call.1} parent=67 // pred_region
          %666 = dma.done [#allocation21], 1024
        $region116: #{tpu_custom_call.1} parent=67 // pred_fallthru
          _
        %s667 = sand.u32 %s52, 1
        %s668 = scalar_lea.sflag [#allocation3], %s667
        %s669 = sand.u32 %s52, 1
        %s670 = smul.addr %s669, 8
        %s671 = scalar_lea.vmem [#allocation2], %s670
        %p672 = pneg %p65
        %p673 = pneg %p62
        %s674 = sand.u32 %s44, 1
        %s675 = scalar_lea.sflag [#allocation6], %s674
        %s676 = sand.u32 %s78, 1
        %s677 = smul.addr %s676, 8
        %s678 = scalar_lea.vmem [#allocation5], %s677
        %p679 = pneg %p91
        %p680 = pneg %p88
        %s681 = sand.u32 %s44, 1
        %s682 = scalar_lea.sflag [#allocation6], %s681
        %s683 = sand.u32 %s104, 1
        %s684 = smul.addr %s683, 16
        %s685 = scalar_lea.vmem [#allocation7], %s684
        %p686 = pneg %p117
        %p687 = pneg %p114
        %s688 = sand.u32 %s44, 1
        %s689 = scalar_lea.sflag [#allocation9], %s688
        %s690 = sand.u32 %s130, 1
        %s691 = smul.addr %s690, 16
        %s692 = scalar_lea.vmem [#allocation8], %s691
        %p693 = pneg %p143
        %p694 = pneg %p140
        %p695 = pneg %p164
        %p696 = pneg %p161
        %p697 = pneg %p185
        %p698 = pneg %p182
        %p699 = pneg %p206
        %p700 = pneg %p203
        %p701 = pneg %p227
        %p702 = pneg %p224
        %p703 = pneg %p248
        %p704 = pneg %p245
        %p705 = pneg %p269
        %p706 = pneg %p266
        %p707 = pneg %p290
        %p708 = pneg %p287
        %p709 = pneg %p311
        %p710 = pneg %p308
        %p711 = pneg %p337
        %p712 = pneg %p334
        %s713 = sand.u32 %s324, 1
        %s714 = scalar_lea.sflag [#allocation4], %s713
        %s715 = sand.u32 %s324, 1
        %s716 = smul.addr %s715, 16
        %s717 = scalar_lea.vmem [#allocation22], %s716
        %p718 = pneg %p363
        %p719 = pneg %p360
        %s720 = sand.u32 %s350, 1
        %s721 = scalar_lea.sflag [#allocation24], %s720
        %s722 = sand.u32 %s350, 1
        %s723 = smul.addr %s722, 32
        %s724 = scalar_lea.vmem [#allocation23], %s723
        %s725 = smul.u32 2, %s44
        %s726 = smul.u32 2, %s44
        %s727 = smul.u32 2, %s44
        %s728 = smul.u32 2, %s44
        %s729 = smul.u32 2, %s44
        %s730 = smul.u32 2, %s44
        %v731 = vld [vmem:[%s601] sm:$0xf]
        %v732 = vld [vmem:[%s601 + $0x4] sm:$0xf]
        %v733 = vld [vmem:[#allocation10] sm:$0x1]
        %v734 = vld [vmem:[#allocation11] sm:$0xf]
        %v735 = vld [vmem:[#allocation11 + $0x4] sm:$0xf]
        %v736 = vld [vmem:[#allocation11 + $0x8] sm:$0xf]
        %v737 = vld [vmem:[#allocation11 + $0xc] sm:$0xf]
        %v738 = vld [vmem:[#allocation11 + $0x10] sm:$0xf]
        %v739 = vld [vmem:[#allocation11 + $0x14] sm:$0xf]
        %v740 = vld [vmem:[#allocation11 + $0x18] sm:$0xf]
        %v741 = vld [vmem:[#allocation11 + $0x1c] sm:$0xf]
        %v742 = vld [vmem:[#allocation11 + $0x20] sm:$0xf]
        %v743 = vld [vmem:[#allocation11 + $0x24] sm:$0xf]
        %v744 = vld [vmem:[#allocation11 + $0x28] sm:$0xf]
        %v745 = vld [vmem:[#allocation11 + $0x2c] sm:$0xf]
        %v746 = vld [vmem:[#allocation11 + $0x30] sm:$0xf]
        %v747 = vld [vmem:[#allocation11 + $0x34] sm:$0xf]
        %v748 = vld [vmem:[#allocation11 + $0x38] sm:$0xf]
        %v749 = vld [vmem:[#allocation11 + $0x3c] sm:$0xf]
        %v751 = vperm.slane %v733, 0
        %v755 = vunpack.c.l.b16 %v731
        %v756 = vunpack.c.l.b16 %v732
        %v757 = vpack.c.b16 %v756, %v755
        %v775 = vunpack.c.l.b16 %v734
        %v776 = vunpack.c.l.b16 %v735
        %v777 = vunpack.c.l.b16 %v736
        %v778 = vunpack.c.l.b16 %v737
        %v779 = vunpack.c.l.b16 %v738
        %v780 = vunpack.c.l.b16 %v739
        %v781 = vunpack.c.l.b16 %v740
        %v782 = vunpack.c.l.b16 %v741
        %v783 = vunpack.c.l.b16 %v742
        %v784 = vunpack.c.l.b16 %v743
        %v785 = vunpack.c.l.b16 %v744
        %v786 = vunpack.c.l.b16 %v745
        %v787 = vunpack.c.l.b16 %v746
        %v788 = vunpack.c.l.b16 %v747
        %v789 = vunpack.c.l.b16 %v748
        %v790 = vunpack.c.l.b16 %v749
        %v791 = vpack.c.b16 %v776, %v775
        %v792 = vpack.c.b16 %v778, %v777
        %v793 = vpack.c.b16 %v780, %v779
        %v794 = vpack.c.b16 %v782, %v781
        %v795 = vpack.c.b16 %v784, %v783
        %v796 = vpack.c.b16 %v786, %v785
        %v797 = vpack.c.b16 %v788, %v787
        %v798 = vpack.c.b16 %v790, %v789
        %807 = vmatpush.bf16.msra.mxu0 %v798
        %808 = vmatpush.bf16.msra.mxu0 %v797
        %809 = vmatpush.bf16.msra.mxu0 %v796
        %810 = vmatpush.bf16.msra.mxu0 %v795
        %811 = vmatpush.bf16.msra.mxu0 %v794
        %812 = vmatpush.bf16.msra.mxu0 %v793
        %813 = vmatpush.bf16.msra.mxu0 %v792
        %814 = vmatpush.bf16.msra.mxu0 %v791
        %815 = vmatmul.bf16.gmra.mxu0 %v757
        %v816 = vpop.f32.mrf.mxu0
        %v817 = vadd.f32 %v751, %v816
        %v818 = vpop.f32.mrf.mxu0
        %v819 = vadd.f32 %v751, %v818
        %820 = vdwg.mxu0
        %v821 = vmax.f32 %v817, 0.0
        %v822 = vmax.f32 %v819, 0.0
        %v823 = vld [vmem:[#allocation10 + $0x1] sm:$0x3]
        %v824 = vpack.c.bf16 %v822, %v821
        %v825 = vld [vmem:[#allocation13] sm:$0xff]
        %v826 = vld [vmem:[#allocation13 + $0x8] sm:$0xff]
        %v827 = vld [vmem:[#allocation13 + $0x10] sm:$0xff]
        %v828 = vld [vmem:[#allocation13 + $0x18] sm:$0xff]
        %v829 = vld [vmem:[#allocation13 + $0x20] sm:$0xff]
        %v830 = vld [vmem:[#allocation13 + $0x28] sm:$0xff]
        %v831 = vld [vmem:[#allocation13 + $0x30] sm:$0xff]
        %v832 = vld [vmem:[#allocation13 + $0x38] sm:$0xff]
        %v833 = vld [vmem:[#allocation13 + $0x40] sm:$0xff]
        %v834 = vld [vmem:[#allocation13 + $0x48] sm:$0xff]
        %v835 = vld [vmem:[#allocation13 + $0x50] sm:$0xff]
        %v836 = vld [vmem:[#allocation13 + $0x58] sm:$0xff]
        %v837 = vld [vmem:[#allocation13 + $0x60] sm:$0xff]
        %v838 = vld [vmem:[#allocation13 + $0x68] sm:$0xff]
        %v839 = vld [vmem:[#allocation13 + $0x70] sm:$0xff]
        %v840 = vld [vmem:[#allocation13 + $0x78] sm:$0xff]
        %v842 = vperm.slane %v823, 0
        %v843 = vperm.slane %v823, 1
        %v862 = vunpack.c.l.b16 %v825
        %v863 = vunpack.c.h.b16 %v825
        %v864 = vunpack.c.l.b16 %v826
        %v865 = vunpack.c.h.b16 %v826
        %v866 = vunpack.c.l.b16 %v827
        %v867 = vunpack.c.h.b16 %v827
        %v868 = vunpack.c.l.b16 %v828
        %v869 = vunpack.c.h.b16 %v828
        %v870 = vunpack.c.l.b16 %v829
        %v871 = vunpack.c.h.b16 %v829
        %v872 = vunpack.c.l.b16 %v830
        %v873 = vunpack.c.h.b16 %v830
        %v874 = vunpack.c.l.b16 %v831
        %v875 = vunpack.c.h.b16 %v831
        %v876 = vunpack.c.l.b16 %v832
        %v877 = vunpack.c.h.b16 %v832
        %v878 = vunpack.c.l.b16 %v833
        %v879 = vunpack.c.h.b16 %v833
        %v880 = vunpack.c.l.b16 %v834
        %v881 = vunpack.c.h.b16 %v834
        %v882 = vunpack.c.l.b16 %v835
        %v883 = vunpack.c.h.b16 %v835
        %v884 = vunpack.c.l.b16 %v836
        %v885 = vunpack.c.h.b16 %v836
        %v886 = vunpack.c.l.b16 %v837
        %v887 = vunpack.c.h.b16 %v837
        %v888 = vunpack.c.l.b16 %v838
        %v889 = vunpack.c.h.b16 %v838
        %v890 = vunpack.c.l.b16 %v839
        %v891 = vunpack.c.h.b16 %v839
        %v892 = vunpack.c.l.b16 %v840
        %v893 = vunpack.c.h.b16 %v840
        %v894 = vpack.c.b16 %v864, %v862
        %v895 = vpack.c.b16 %v865, %v863
        %v896 = vpack.c.b16 %v868, %v866
        %v897 = vpack.c.b16 %v869, %v867
        %v898 = vpack.c.b16 %v872, %v870
        %v899 = vpack.c.b16 %v873, %v871
        %v900 = vpack.c.b16 %v876, %v874
        %v901 = vpack.c.b16 %v877, %v875
        %v902 = vpack.c.b16 %v880, %v878
        %v903 = vpack.c.b16 %v881, %v879
        %v904 = vpack.c.b16 %v884, %v882
        %v905 = vpack.c.b16 %v885, %v883
        %v906 = vpack.c.b16 %v888, %v886
        %v907 = vpack.c.b16 %v889, %v887
        %v908 = vpack.c.b16 %v892, %v890
        %v909 = vpack.c.b16 %v893, %v891
        %926 = vmatpush.bf16.msra.mxu0 %v908
        %927 = vmatpush.bf16.msra.mxu0 %v906
        %928 = vmatpush.bf16.msra.mxu0 %v904
        %929 = vmatpush.bf16.msra.mxu0 %v902
        %930 = vmatpush.bf16.msra.mxu0 %v900
        %931 = vmatpush.bf16.msra.mxu0 %v898
        %932 = vmatpush.bf16.msra.mxu0 %v896
        %933 = vmatpush.bf16.msra.mxu0 %v894
        %934 = vmatmul.bf16.gmra.mxu0 %v824
        %v935 = vpop.f32.mrf.mxu0
        %v936 = vadd.f32 %v842, %v935
        %v937 = vpop.f32.mrf.mxu0
        %v938 = vadd.f32 %v842, %v937
        %939 = vdwg.mxu0
        %940 = vmatpush.bf16.msra.mxu0 %v909
        %941 = vmatpush.bf16.msra.mxu0 %v907
        %942 = vmatpush.bf16.msra.mxu0 %v905
        %943 = vmatpush.bf16.msra.mxu0 %v903
        %944 = vmatpush.bf16.msra.mxu0 %v901
        %945 = vmatpush.bf16.msra.mxu0 %v899
        %946 = vmatpush.bf16.msra.mxu0 %v897
        %947 = vmatpush.bf16.msra.mxu0 %v895
        %948 = vmatmul.bf16.gmra.mxu0 %v824
        %v949 = vpop.f32.mrf.mxu0
        %v950 = vadd.f32 %v843, %v949
        %v951 = vpop.f32.mrf.mxu0
        %v952 = vadd.f32 %v843, %v951
        %953 = vdwg.mxu0
        %v954 = vpack.c.bf16 %v950, %v936
        %v955 = vpack.c.bf16 %v952, %v938
        %956 = vst [vmem:[%s724] sm:$0xff] %v954
        %957 = vst [vmem:[%s724 + $0x10] sm:$0xff] %v955
        %v958 = vld [vmem:[%s591] sm:$0xf]
        %v959 = vld [vmem:[%s591 + $0x4] sm:$0xf]
        %v960 = vld [vmem:[#allocation10 + $0x3] sm:$0x1]
        %v961 = vld [vmem:[#allocation14] sm:$0xf]
        %v962 = vld [vmem:[#allocation14 + $0x4] sm:$0xf]
        %v963 = vld [vmem:[#allocation14 + $0x8] sm:$0xf]
        %v964 = vld [vmem:[#allocation14 + $0xc] sm:$0xf]
        %v965 = vld [vmem:[#allocation14 + $0x10] sm:$0xf]
        %v966 = vld [vmem:[#allocation14 + $0x14] sm:$0xf]
        %v967 = vld [vmem:[#allocation14 + $0x18] sm:$0xf]
        %v968 = vld [vmem:[#allocation14 + $0x1c] sm:$0xf]
        %v969 = vld [vmem:[#allocation14 + $0x20] sm:$0xf]
        %v970 = vld [vmem:[#allocation14 + $0x24] sm:$0xf]
        %v971 = vld [vmem:[#allocation14 + $0x28] sm:$0xf]
        %v972 = vld [vmem:[#allocation14 + $0x2c] sm:$0xf]
        %v973 = vld [vmem:[#allocation14 + $0x30] sm:$0xf]
        %v974 = vld [vmem:[#allocation14 + $0x34] sm:$0xf]
        %v975 = vld [vmem:[#allocation14 + $0x38] sm:$0xf]
        %v976 = vld [vmem:[#allocation14 + $0x3c] sm:$0xf]
        %v978 = vperm.slane %v960, 0
        %v982 = vunpack.c.l.b16 %v958
        %v983 = vunpack.c.l.b16 %v959
        %v984 = vpack.c.b16 %v983, %v982
        %v1002 = vunpack.c.l.b16 %v961
        %v1003 = vunpack.c.l.b16 %v962
        %v1004 = vunpack.c.l.b16 %v963
        %v1005 = vunpack.c.l.b16 %v964
        %v1006 = vunpack.c.l.b16 %v965
        %v1007 = vunpack.c.l.b16 %v966
        %v1008 = vunpack.c.l.b16 %v967
        %v1009 = vunpack.c.l.b16 %v968
        %v1010 = vunpack.c.l.b16 %v969
        %v1011 = vunpack.c.l.b16 %v970
        %v1012 = vunpack.c.l.b16 %v971
        %v1013 = vunpack.c.l.b16 %v972
        %v1014 = vunpack.c.l.b16 %v973
        %v1015 = vunpack.c.l.b16 %v974
        %v1016 = vunpack.c.l.b16 %v975
        %v1017 = vunpack.c.l.b16 %v976
        %v1018 = vpack.c.b16 %v1003, %v1002
        %v1019 = vpack.c.b16 %v1005, %v1004
        %v1020 = vpack.c.b16 %v1007, %v1006
        %v1021 = vpack.c.b16 %v1009, %v1008
        %v1022 = vpack.c.b16 %v1011, %v1010
        %v1023 = vpack.c.b16 %v1013, %v1012
        %v1024 = vpack.c.b16 %v1015, %v1014
        %v1025 = vpack.c.b16 %v1017, %v1016
        %1034 = vmatpush.bf16.msra.mxu0 %v1025
        %1035 = vmatpush.bf16.msra.mxu0 %v1024
        %1036 = vmatpush.bf16.msra.mxu0 %v1023
        %1037 = vmatpush.bf16.msra.mxu0 %v1022
        %1038 = vmatpush.bf16.msra.mxu0 %v1021
        %1039 = vmatpush.bf16.msra.mxu0 %v1020
        %1040 = vmatpush.bf16.msra.mxu0 %v1019
        %1041 = vmatpush.bf16.msra.mxu0 %v1018
        %1042 = vmatmul.bf16.gmra.mxu0 %v984
        %v1043 = vpop.f32.mrf.mxu0
        %v1044 = vadd.f32 %v978, %v1043
        %v1045 = vpop.f32.mrf.mxu0
        %v1046 = vadd.f32 %v978, %v1045
        %1047 = vdwg.mxu0
        %v1048 = vmax.f32 %v1044, 0.0
        %v1049 = vmax.f32 %v1046, 0.0
        %v1050 = vld [vmem:[#allocation10 + $0x4] sm:$0x3]
        %v1051 = vpack.c.bf16 %v1049, %v1048
        %v1052 = vld [vmem:[#allocation16] sm:$0xff]
        %v1053 = vld [vmem:[#allocation16 + $0x8] sm:$0xff]
        %v1054 = vld [vmem:[#allocation16 + $0x10] sm:$0xff]
        %v1055 = vld [vmem:[#allocation16 + $0x18] sm:$0xff]
        %v1056 = vld [vmem:[#allocation16 + $0x20] sm:$0xff]
        %v1057 = vld [vmem:[#allocation16 + $0x28] sm:$0xff]
        %v1058 = vld [vmem:[#allocation16 + $0x30] sm:$0xff]
        %v1059 = vld [vmem:[#allocation16 + $0x38] sm:$0xff]
        %v1060 = vld [vmem:[#allocation16 + $0x40] sm:$0xff]
        %v1061 = vld [vmem:[#allocation16 + $0x48] sm:$0xff]
        %v1062 = vld [vmem:[#allocation16 + $0x50] sm:$0xff]
        %v1063 = vld [vmem:[#allocation16 + $0x58] sm:$0xff]
        %v1064 = vld [vmem:[#allocation16 + $0x60] sm:$0xff]
        %v1065 = vld [vmem:[#allocation16 + $0x68] sm:$0xff]
        %v1066 = vld [vmem:[#allocation16 + $0x70] sm:$0xff]
        %v1067 = vld [vmem:[#allocation16 + $0x78] sm:$0xff]
        %v1069 = vperm.slane %v1050, 0
        %v1070 = vperm.slane %v1050, 1
        %v1089 = vunpack.c.l.b16 %v1052
        %v1090 = vunpack.c.h.b16 %v1052
        %v1091 = vunpack.c.l.b16 %v1053
        %v1092 = vunpack.c.h.b16 %v1053
        %v1093 = vunpack.c.l.b16 %v1054
        %v1094 = vunpack.c.h.b16 %v1054
        %v1095 = vunpack.c.l.b16 %v1055
        %v1096 = vunpack.c.h.b16 %v1055
        %v1097 = vunpack.c.l.b16 %v1056
        %v1098 = vunpack.c.h.b16 %v1056
        %v1099 = vunpack.c.l.b16 %v1057
        %v1100 = vunpack.c.h.b16 %v1057
        %v1101 = vunpack.c.l.b16 %v1058
        %v1102 = vunpack.c.h.b16 %v1058
        %v1103 = vunpack.c.l.b16 %v1059
        %v1104 = vunpack.c.h.b16 %v1059
        %v1105 = vunpack.c.l.b16 %v1060
        %v1106 = vunpack.c.h.b16 %v1060
        %v1107 = vunpack.c.l.b16 %v1061
        %v1108 = vunpack.c.h.b16 %v1061
        %v1109 = vunpack.c.l.b16 %v1062
        %v1110 = vunpack.c.h.b16 %v1062
        %v1111 = vunpack.c.l.b16 %v1063
        %v1112 = vunpack.c.h.b16 %v1063
        %v1113 = vunpack.c.l.b16 %v1064
        %v1114 = vunpack.c.h.b16 %v1064
        %v1115 = vunpack.c.l.b16 %v1065
        %v1116 = vunpack.c.h.b16 %v1065
        %v1117 = vunpack.c.l.b16 %v1066
        %v1118 = vunpack.c.h.b16 %v1066
        %v1119 = vunpack.c.l.b16 %v1067
        %v1120 = vunpack.c.h.b16 %v1067
        %v1121 = vpack.c.b16 %v1091, %v1089
        %v1122 = vpack.c.b16 %v1092, %v1090
        %v1123 = vpack.c.b16 %v1095, %v1093
        %v1124 = vpack.c.b16 %v1096, %v1094
        %v1125 = vpack.c.b16 %v1099, %v1097
        %v1126 = vpack.c.b16 %v1100, %v1098
        %v1127 = vpack.c.b16 %v1103, %v1101
        %v1128 = vpack.c.b16 %v1104, %v1102
        %v1129 = vpack.c.b16 %v1107, %v1105
        %v1130 = vpack.c.b16 %v1108, %v1106
        %v1131 = vpack.c.b16 %v1111, %v1109
        %v1132 = vpack.c.b16 %v1112, %v1110
        %v1133 = vpack.c.b16 %v1115, %v1113
        %v1134 = vpack.c.b16 %v1116, %v1114
        %v1135 = vpack.c.b16 %v1119, %v1117
        %v1136 = vpack.c.b16 %v1120, %v1118
        %1153 = vmatpush.bf16.msra.mxu0 %v1135
        %1154 = vmatpush.bf16.msra.mxu0 %v1133
        %1155 = vmatpush.bf16.msra.mxu0 %v1131
        %1156 = vmatpush.bf16.msra.mxu0 %v1129
        %1157 = vmatpush.bf16.msra.mxu0 %v1127
        %1158 = vmatpush.bf16.msra.mxu0 %v1125
        %1159 = vmatpush.bf16.msra.mxu0 %v1123
        %1160 = vmatpush.bf16.msra.mxu0 %v1121
        %1161 = vmatmul.bf16.gmra.mxu0 %v1051
        %v1162 = vpop.f32.mrf.mxu0
        %v1163 = vadd.f32 %v1069, %v1162
        %v1164 = vpop.f32.mrf.mxu0
        %v1165 = vadd.f32 %v1069, %v1164
        %1166 = vdwg.mxu0
        %1167 = vmatpush.bf16.msra.mxu0 %v1136
        %1168 = vmatpush.bf16.msra.mxu0 %v1134
        %1169 = vmatpush.bf16.msra.mxu0 %v1132
        %1170 = vmatpush.bf16.msra.mxu0 %v1130
        %1171 = vmatpush.bf16.msra.mxu0 %v1128
        %1172 = vmatpush.bf16.msra.mxu0 %v1126
        %1173 = vmatpush.bf16.msra.mxu0 %v1124
        %1174 = vmatpush.bf16.msra.mxu0 %v1122
        %1175 = vmatmul.bf16.gmra.mxu0 %v1051
        %v1176 = vpop.f32.mrf.mxu0
        %v1177 = vadd.f32 %v1070, %v1176
        %v1178 = vpop.f32.mrf.mxu0
        %v1179 = vadd.f32 %v1070, %v1178
        %1180 = vdwg.mxu0
        %v1181 = vpack.c.bf16 %v1177, %v1163
        %v1182 = vpack.c.bf16 %v1179, %v1165
        %1183 = vst [vmem:[%s724 + $0x8] sm:$0xff] %v1181
        %1184 = vst [vmem:[%s724 + $0x18] sm:$0xff] %v1182
        %v1185 = vld [vmem:[%s611] sm:$0xff]
        %v1186 = vld [vmem:[%s611 + $0x8] sm:$0xff]
        %v1187 = vmul.f32 %v950, 0.5
        %v1188 = vmul.f32 %v952, 0.5
        %v1189 = vmul.f32 %v1187, 1.442695
        %v1190 = vpow.pop %v1189
        %v1191 = vmul.f32 %v1188, 1.442695
        %v1192 = vpow.pop %v1191
        %v1193 = vmul.f32 %v1185, %v1190
        %v1194 = vmul.f32 %v1186, %v1192
        %v1195 = vadd.f32 %v936, %v1193
        %v1196 = vadd.f32 %v938, %v1194
        %v1197 = vld [vmem:[%s621] sm:$0xff]
        %v1198 = vld [vmem:[%s621 + $0x8] sm:$0xff]
        %v1199 = vmul.f32 %v1177, 0.5
        %v1200 = vmul.f32 %v1179, 0.5
        %v1201 = vmul.f32 %v1199, 1.442695
        %v1202 = vpow.pop %v1201
        %v1203 = vmul.f32 %v1200, 1.442695
        %v1204 = vpow.pop %v1203
        %v1205 = vmul.f32 %v1197, %v1202
        %v1206 = vmul.f32 %v1198, %v1204
        %v1207 = vadd.f32 %v1163, %v1205
        %v1208 = vadd.f32 %v1165, %v1206
        %v1209 = vld [vmem:[#allocation10 + $0x6] sm:$0x1]
        %v1210 = vpack.c.bf16 %v1196, %v1195
        %v1211 = vld [vmem:[#allocation17] sm:$0xf]
        %v1212 = vld [vmem:[#allocation17 + $0x4] sm:$0xf]
        %v1213 = vld [vmem:[#allocation17 + $0x8] sm:$0xf]
        %v1214 = vld [vmem:[#allocation17 + $0xc] sm:$0xf]
        %v1215 = vld [vmem:[#allocation17 + $0x10] sm:$0xf]
        %v1216 = vld [vmem:[#allocation17 + $0x14] sm:$0xf]
        %v1217 = vld [vmem:[#allocation17 + $0x18] sm:$0xf]
        %v1218 = vld [vmem:[#allocation17 + $0x1c] sm:$0xf]
        %v1219 = vld [vmem:[#allocation17 + $0x20] sm:$0xf]
        %v1220 = vld [vmem:[#allocation17 + $0x24] sm:$0xf]
        %v1221 = vld [vmem:[#allocation17 + $0x28] sm:$0xf]
        %v1222 = vld [vmem:[#allocation17 + $0x2c] sm:$0xf]
        %v1223 = vld [vmem:[#allocation17 + $0x30] sm:$0xf]
        %v1224 = vld [vmem:[#allocation17 + $0x34] sm:$0xf]
        %v1225 = vld [vmem:[#allocation17 + $0x38] sm:$0xf]
        %v1226 = vld [vmem:[#allocation17 + $0x3c] sm:$0xf]
        %v1227 = vpack.c.bf16 %v1208, %v1207
        %v1228 = vld [vmem:[#allocation19] sm:$0xf]
        %v1229 = vld [vmem:[#allocation19 + $0x4] sm:$0xf]
        %v1230 = vld [vmem:[#allocation19 + $0x8] sm:$0xf]
        %v1231 = vld [vmem:[#allocation19 + $0xc] sm:$0xf]
        %v1232 = vld [vmem:[#allocation19 + $0x10] sm:$0xf]
        %v1233 = vld [vmem:[#allocation19 + $0x14] sm:$0xf]
        %v1234 = vld [vmem:[#allocation19 + $0x18] sm:$0xf]
        %v1235 = vld [vmem:[#allocation19 + $0x1c] sm:$0xf]
        %v1236 = vld [vmem:[#allocation19 + $0x20] sm:$0xf]
        %v1237 = vld [vmem:[#allocation19 + $0x24] sm:$0xf]
        %v1238 = vld [vmem:[#allocation19 + $0x28] sm:$0xf]
        %v1239 = vld [vmem:[#allocation19 + $0x2c] sm:$0xf]
        %v1240 = vld [vmem:[#allocation19 + $0x30] sm:$0xf]
        %v1241 = vld [vmem:[#allocation19 + $0x34] sm:$0xf]
        %v1242 = vld [vmem:[#allocation19 + $0x38] sm:$0xf]
        %v1243 = vld [vmem:[#allocation19 + $0x3c] sm:$0xf]
        %v1260 = vunpack.c.l.b16 %v1228
        %v1261 = vunpack.c.l.b16 %v1229
        %v1262 = vunpack.c.l.b16 %v1230
        %v1263 = vunpack.c.l.b16 %v1231
        %v1264 = vunpack.c.l.b16 %v1232
        %v1265 = vunpack.c.l.b16 %v1233
        %v1266 = vunpack.c.l.b16 %v1234
        %v1267 = vunpack.c.l.b16 %v1235
        %v1268 = vunpack.c.l.b16 %v1236
        %v1269 = vunpack.c.l.b16 %v1237
        %v1270 = vunpack.c.l.b16 %v1238
        %v1271 = vunpack.c.l.b16 %v1239
        %v1272 = vunpack.c.l.b16 %v1240
        %v1273 = vunpack.c.l.b16 %v1241
        %v1274 = vunpack.c.l.b16 %v1242
        %v1275 = vunpack.c.l.b16 %v1243
        %v1276 = vpack.c.b16 %v1261, %v1260
        %v1277 = vpack.c.b16 %v1263, %v1262
        %v1278 = vpack.c.b16 %v1265, %v1264
        %v1279 = vpack.c.b16 %v1267, %v1266
        %v1280 = vpack.c.b16 %v1269, %v1268
        %v1281 = vpack.c.b16 %v1271, %v1270
        %v1282 = vpack.c.b16 %v1273, %v1272
        %v1283 = vpack.c.b16 %v1275, %v1274
        %1292 = vmatpush.bf16.msra.mxu0 %v1283
        %1293 = vmatpush.bf16.msra.mxu0 %v1282
        %1294 = vmatpush.bf16.msra.mxu0 %v1281
        %1295 = vmatpush.bf16.msra.mxu0 %v1280
        %1296 = vmatpush.bf16.msra.mxu0 %v1279
        %1297 = vmatpush.bf16.msra.mxu0 %v1278
        %1298 = vmatpush.bf16.msra.mxu0 %v1277
        %1299 = vmatpush.bf16.msra.mxu0 %v1276
        %1300 = vmatmul.bf16.gmra.mxu0 %v1227
        %v1301 = vpop.f32.mrf.mxu0
        %v1302 = vadd.f32 0.0, %v1301
        %v1303 = vpop.f32.mrf.mxu0
        %v1304 = vadd.f32 0.0, %v1303
        %1305 = vdwg.mxu0
        %v1322 = vunpack.c.l.b16 %v1211
        %v1323 = vunpack.c.l.b16 %v1212
        %v1324 = vunpack.c.l.b16 %v1213
        %v1325 = vunpack.c.l.b16 %v1214
        %v1326 = vunpack.c.l.b16 %v1215
        %v1327 = vunpack.c.l.b16 %v1216
        %v1328 = vunpack.c.l.b16 %v1217
        %v1329 = vunpack.c.l.b16 %v1218
        %v1330 = vunpack.c.l.b16 %v1219
        %v1331 = vunpack.c.l.b16 %v1220
        %v1332 = vunpack.c.l.b16 %v1221
        %v1333 = vunpack.c.l.b16 %v1222
        %v1334 = vunpack.c.l.b16 %v1223
        %v1335 = vunpack.c.l.b16 %v1224
        %v1336 = vunpack.c.l.b16 %v1225
        %v1337 = vunpack.c.l.b16 %v1226
        %v1338 = vpack.c.b16 %v1323, %v1322
        %v1339 = vpack.c.b16 %v1325, %v1324
        %v1340 = vpack.c.b16 %v1327, %v1326
        %v1341 = vpack.c.b16 %v1329, %v1328
        %v1342 = vpack.c.b16 %v1331, %v1330
        %v1343 = vpack.c.b16 %v1333, %v1332
        %v1344 = vpack.c.b16 %v1335, %v1334
        %v1345 = vpack.c.b16 %v1337, %v1336
        %1354 = vmatpush.bf16.msra.mxu0 %v1345
        %1355 = vmatpush.bf16.msra.mxu0 %v1344
        %1356 = vmatpush.bf16.msra.mxu0 %v1343
        %1357 = vmatpush.bf16.msra.mxu0 %v1342
        %1358 = vmatpush.bf16.msra.mxu0 %v1341
        %1359 = vmatpush.bf16.msra.mxu0 %v1340
        %1360 = vmatpush.bf16.msra.mxu0 %v1339
        %1361 = vmatpush.bf16.msra.mxu0 %v1338
        %1362 = vmatmul.bf16.gmra.mxu0 %v1210
        %v1363 = vpop.f32.mrf.mxu0
        %v1364 = vadd.f32 %v1302, %v1363
        %v1365 = vpop.f32.mrf.mxu0
        %v1366 = vadd.f32 %v1304, %v1365
        %1367 = vdwg.mxu0
        %v1369 = vperm.slane %v1209, 0
        %v1371 = vadd.f32 %v1364, %v1369
        %v1372 = vadd.f32 %v1366, %v1369
        %v1373 = vmax.f32 %v1371, 0.0
        %v1374 = vmax.f32 %v1372, 0.0
        %v1375 = vld [vmem:[#allocation10 + $0x7] sm:$0x1]
        %v1376 = vpack.c.bf16 %v1374, %v1373
        %v1377 = vld [vmem:[#allocation20] sm:$0xf]
        %v1378 = vld [vmem:[#allocation20 + $0x4] sm:$0xf]
        %v1379 = vld [vmem:[#allocation20 + $0x8] sm:$0xf]
        %v1380 = vld [vmem:[#allocation20 + $0xc] sm:$0xf]
        %v1381 = vld [vmem:[#allocation20 + $0x10] sm:$0xf]
        %v1382 = vld [vmem:[#allocation20 + $0x14] sm:$0xf]
        %v1383 = vld [vmem:[#allocation20 + $0x18] sm:$0xf]
        %v1384 = vld [vmem:[#allocation20 + $0x1c] sm:$0xf]
        %v1385 = vld [vmem:[#allocation20 + $0x20] sm:$0xf]
        %v1386 = vld [vmem:[#allocation20 + $0x24] sm:$0xf]
        %v1387 = vld [vmem:[#allocation20 + $0x28] sm:$0xf]
        %v1388 = vld [vmem:[#allocation20 + $0x2c] sm:$0xf]
        %v1389 = vld [vmem:[#allocation20 + $0x30] sm:$0xf]
        %v1390 = vld [vmem:[#allocation20 + $0x34] sm:$0xf]
        %v1391 = vld [vmem:[#allocation20 + $0x38] sm:$0xf]
        %v1392 = vld [vmem:[#allocation20 + $0x3c] sm:$0xf]
        %v1394 = vperm.slane %v1375, 0
        %v1412 = vunpack.c.l.b16 %v1377
        %v1413 = vunpack.c.l.b16 %v1378
        %v1414 = vunpack.c.l.b16 %v1379
        %v1415 = vunpack.c.l.b16 %v1380
        %v1416 = vunpack.c.l.b16 %v1381
        %v1417 = vunpack.c.l.b16 %v1382
        %v1418 = vunpack.c.l.b16 %v1383
        %v1419 = vunpack.c.l.b16 %v1384
        %v1420 = vunpack.c.l.b16 %v1385
        %v1421 = vunpack.c.l.b16 %v1386
        %v1422 = vunpack.c.l.b16 %v1387
        %v1423 = vunpack.c.l.b16 %v1388
        %v1424 = vunpack.c.l.b16 %v1389
        %v1425 = vunpack.c.l.b16 %v1390
        %v1426 = vunpack.c.l.b16 %v1391
        %v1427 = vunpack.c.l.b16 %v1392
        %v1428 = vpack.c.b16 %v1413, %v1412
        %v1429 = vpack.c.b16 %v1415, %v1414
        %v1430 = vpack.c.b16 %v1417, %v1416
        %v1431 = vpack.c.b16 %v1419, %v1418
        %v1432 = vpack.c.b16 %v1421, %v1420
        %v1433 = vpack.c.b16 %v1423, %v1422
        %v1434 = vpack.c.b16 %v1425, %v1424
        %v1435 = vpack.c.b16 %v1427, %v1426
        %1444 = vmatpush.bf16.msra.mxu0 %v1435
        %1445 = vmatpush.bf16.msra.mxu0 %v1434
        %1446 = vmatpush.bf16.msra.mxu0 %v1433
        %1447 = vmatpush.bf16.msra.mxu0 %v1432
        %1448 = vmatpush.bf16.msra.mxu0 %v1431
        %1449 = vmatpush.bf16.msra.mxu0 %v1430
        %1450 = vmatpush.bf16.msra.mxu0 %v1429
        %1451 = vmatpush.bf16.msra.mxu0 %v1428
        %1452 = vmatmul.bf16.gmra.mxu0 %v1376
        %v1453 = vpop.f32.mrf.mxu0
        %v1454 = vadd.f32 %v1394, %v1453
        %v1455 = vpop.f32.mrf.mxu0
        %v1456 = vadd.f32 %v1394, %v1455
        %1457 = vdwg.mxu0
        %v1458 = vmax.f32 %v1454, -1.0
        %v1459 = vmax.f32 %v1456, -1.0
        %v1460 = vmin.f32 %v1458, 8.0
        %v1461 = vmin.f32 %v1459, 8.0
        %1462 = vst [vmem:[%s717] sm:$0xff] %v1460
        %1463 = vst [vmem:[%s717 + $0x8] sm:$0xff] %v1461
        %s1464 = sand.u32 %s324, 1
        %s1465 = scalar_lea.sflag [#allocation4], %s1464
        %s1466 = sand.u32 %s324, 1
        %s1467 = smul.addr %s1466, 16
        %s1468 = scalar_lea.vmem [#allocation22], %s1467
        %s1469 = sand.u32 %s350, 1
        %s1470 = scalar_lea.sflag [#allocation24], %s1469
        %s1471 = sand.u32 %s350, 1
        %s1472 = smul.addr %s1471, 32
        %s1473 = scalar_lea.vmem [#allocation23], %s1472
        // Predicated region
        $region117: #{tpu_custom_call.1} parent=67 // pred_check
          %p1474 = pneg %p334
        $region118: #{tpu_custom_call.1} parent=67 // pred_check_branch
          %1476 = sbr.rel (%p1474) target = $region120
        $region119: #{tpu_custom_call.1} parent=67 // pred_region
          %s1477 = smul.u32 2, %s44
          %1479 = vsyncadd %s1465, 0
          %s1480 = smul.addr %s1477, 8
          %s1481 = scalar_lea.hbm %s12, %s1480
          %s1482 = sshll.u32 %s1468, 4
          %s1483 = int_to_ptr.vmem [resolvable:$true] %s1482
          %s1484 = sshll.u32 %s1481, 4
          %s1485 = int_to_ptr.hbm [resolvable:$true] %s1484
          %1490 = dma.vmem_to_hbm [thread:$0]  %s1483, 256, %s1485, %s1465, 128, 128, 8
        $region120: #{tpu_custom_call.1} parent=67 // pred_fallthru
          _
        // Predicated region
        $region121: #{tpu_custom_call.1} parent=67 // pred_check
          %p1491 = pneg %p360
        $region122: #{tpu_custom_call.1} parent=67 // pred_check_branch
          %1493 = sbr.rel (%p1491) target = $region124
        $region123: #{tpu_custom_call.1} parent=67 // pred_region
          %s1494 = smul.u32 2, %s44
          %1496 = vsyncadd %s1470, 0
          %s1497 = smul.addr %s1494, 4
          %s1498 = smul.addr %s1497, 4
          %s1499 = scalar_lea.hbm %s13, %s1498
          %s1500 = sshll.u32 %s1473, 4
          %s1501 = int_to_ptr.vmem [resolvable:$true] %s1500
          %s1502 = sshll.u32 %s1499, 4
          %s1503 = int_to_ptr.hbm [resolvable:$true] %s1502
          %1508 = dma.vmem_to_hbm [thread:$0]  %s1501, 512, %s1503, %s1470, 256, 256, 16
        $region124: #{tpu_custom_call.1} parent=67 // pred_fallthru
          _
      $region68: #{tpu_custom_call.1} parent=5 // pred_fallthru
        _
      %p1509 = scmp.le.s32.totalorder 2, %s39
      // Predicated region
      $region125: #{tpu_custom_call.1} parent=5 // pred_check
        %p1510 = pneg %p1509
      $region126: #{tpu_custom_call.1} parent=5 // pred_check_branch
        %1512 = sbr.rel (%p1510) target = $region128
      $region127: #{tpu_custom_call.1} parent=5 // pred_region
        %s1513 = ssub.s32 %s39, 2
        // Predicated region
        $region129: #{tpu_custom_call.1} parent=127 // pred_check
          %p1514 = pneg %p340
        $region130: #{tpu_custom_call.1} parent=127 // pred_check_branch
          %1516 = sbr.rel (%p1514) target = $region132
        $region131: #{tpu_custom_call.1} parent=127 // pred_region
          %s1517 = sand.u32 %s325, 1
          %s1518 = scalar_lea.sflag [#allocation4], %s1517
          %s1519 = sand.u32 %s325, 1
          %s1520 = smul.addr %s1519, 16
          %s1521 = scalar_lea.vmem [#allocation22], %s1520
          %1523 = dma.done %s1518, 256
        $region132: #{tpu_custom_call.1} parent=127 // pred_fallthru
          _
        // Predicated region
        $region133: #{tpu_custom_call.1} parent=127 // pred_check
          %p1524 = pneg %p366
        $region134: #{tpu_custom_call.1} parent=127 // pred_check_branch
          %1526 = sbr.rel (%p1524) target = $region136
        $region135: #{tpu_custom_call.1} parent=127 // pred_region
          %s1527 = sand.u32 %s351, 1
          %s1528 = scalar_lea.sflag [#allocation24], %s1527
          %s1529 = sand.u32 %s351, 1
          %s1530 = smul.addr %s1529, 32
          %s1531 = scalar_lea.vmem [#allocation23], %s1530
          %1533 = dma.done %s1528, 512
        $region136: #{tpu_custom_call.1} parent=127 // pred_fallthru
          _
      $region128: #{tpu_custom_call.1} parent=5 // pred_fallthru
        _
    $region6: #{tpu_custom_call.1} parent=1 // loop_footer
      %s43 = sadd.s32 1, %s39
    $region7: #{tpu_custom_call.1} parent=1 // loop_footer_branch
      %38 = sbr.rel target = $region3
    $region8: #{tpu_custom_call.1} parent=1 // loop_exit
      _
    %1534 = vsyncpa [#allocation3], 1
    %s1535 = scalar_lea.sflag [#allocation3], 1
    %1536 = vsyncpa %s1535, 1
    %1537 = vsyncpa [#allocation6], 1
    %s1538 = scalar_lea.sflag [#allocation6], 1
    %1539 = vsyncpa %s1538, 1
    %1540 = vsyncpa [#allocation9], 1
    %s1541 = scalar_lea.sflag [#allocation9], 1
    %1542 = vsyncpa %s1541, 1
    %1543 = vsyncpa [#allocation12], 1
    %1544 = vsyncpa [#allocation15], 1
    %1545 = vsyncpa [#allocation18], 1
    %1546 = vsyncpa [#allocation21], 1
    %1547 = vsyncpa [#allocation4], 1
    %s1548 = scalar_lea.sflag [#allocation4], 1
    %1549 = vsyncpa %s1548, 1
    %1550 = vsyncpa [#allocation24], 1
    %s1551 = scalar_lea.sflag [#allocation24], 1
    %1552 = vsyncpa %s1551, 1

// kernel: tpu_custom_call.1
$region0: #{tpu_custom_call.1}
  #allocation0 [shape = 'u32[]', space=smem, size = 0x4, offset = 0x4, fixed_abs, tag = 'smem constant byte address 0x4 - core index']
  #allocation1 [shape = 'u32[72,128]{1,0:T(1,128)}', space=vmem, size = 0x9000, scoped, tag = 'internal scratch']
  %s0 = inlined_call_operand.hbm [shape: bf16[32,128], index: 0, kind: input, shape index: {}]
  %s1 = inlined_call_operand.hbm [shape: bf16[32,128], index: 1, kind: input, shape index: {}]
  %s2 = inlined_call_operand.hbm [shape: f32[32,128], index: 2, kind: input, shape index: {}]
  %s3 = inlined_call_operand.hbm [shape: f32[32,128], index: 3, kind: input, shape index: {}]
  %s4 = inlined_call_operand.hbm [shape: f32[1,1024], index: 4, kind: input, shape index: {}]
  %s5 = inlined_call_operand.hbm [shape: bf16[128,128], index: 5, kind: input, shape index: {}]
  %s6 = inlined_call_operand.hbm [shape: bf16[128,256], index: 6, kind: input, shape index: {}]
  %s7 = inlined_call_operand.hbm [shape: bf16[128,128], index: 7, kind: input, shape index: {}]
  %s8 = inlined_call_operand.hbm [shape: bf16[128,256], index: 8, kind: input, shape index: {}]
  %s9 = inlined_call_operand.hbm [shape: bf16[128,128], index: 9, kind: input, shape index: {}]
  %s10 = inlined_call_operand.hbm [shape: bf16[128,128], index: 10, kind: input, shape index: {}]
  %s11 = inlined_call_operand.hbm [shape: bf16[128,128], index: 11, kind: input, shape index: {}]
  %s12 = inlined_call_operand.hbm [shape: f32[32,128], index: 12, kind: output, shape index: {0}]
  %s13 = inlined_call_operand.hbm [shape: bf16[32,512], index: 13, kind: output, shape index: {1}]
  %14 = xla_tuple %s12, %s13
  %s15 = sld [smem:[#allocation0]]
  $region137: #{tpu_custom_call.1} parent=0
    _
  %s17 = ssub.s32 1, %s15
  %s18 = scalar_select 0, %s17, %s15
  $region1: #{tpu_custom_call.1} parent=0
    #allocation2 [shape = 'u8[8192]{0}', space=vmem, size = 0x2000, scoped, tag = 'input window, operand 0']
    #allocation3 [shape = 's32[2]{0}', space=sflag, size = 0x8, scoped, tag = 'scoped memory for tpu_custom_call.1']
    #allocation4 [shape = 's32[2]{0}', space=sflag, size = 0x8, scoped, tag = 'scoped memory for tpu_custom_call.1']
    #allocation5 [shape = 'u8[8192]{0}', space=vmem, size = 0x2000, scoped, tag = 'input window, operand 1']
    #allocation6 [shape = 's32[2]{0}', space=sflag, size = 0x8, scoped, tag = 'scoped memory for tpu_custom_call.1']
    #allocation7 [shape = 'u8[16384]{0}', space=vmem, size = 0x4000, scoped, tag = 'input window, operand 2']
    #allocation8 [shape = 'u8[16384]{0}', space=vmem, size = 0x4000, scoped, tag = 'input window, operand 3']
    #allocation9 [shape = 's32[2]{0}', space=sflag, size = 0x8, scoped, tag = 'scoped memory for tpu_custom_call.1']
    #allocation10 [shape = 'u8[4096]{0}', space=vmem, size = 0x1000, scoped, tag = 'input window, operand 4, single buffered']
    #allocation11 [shape = 'u8[32768]{0}', space=vmem, size = 0x8000, scoped, tag = 'input window, operand 5, single buffered']
    #allocation12 [shape = 's32[1]{0}', space=sflag, size = 0x4, scoped, tag = 'scoped memory for tpu_custom_call.1']
    #allocation13 [shape = 'u8[65536]{0}', space=vmem, size = 0x10000, scoped, tag = 'input window, operand 6, single buffered']
    #allocation14 [shape = 'u8[32768]{0}', space=vmem, size = 0x8000, scoped, tag = 'input window, operand 7, single buffered']
    #allocation15 [shape = 's32[1]{0}', space=sflag, size = 0x4, scoped, tag = 'scoped memory for tpu_custom_call.1']
    #allocation16 [shape = 'u8[65536]{0}', space=vmem, size = 0x10000, scoped, tag = 'input window, operand 8, single buffered']
    #allocation17 [shape = 'u8[32768]{0}', space=vmem, size = 0x8000, scoped, tag = 'input window, operand 9, single buffered']
    #allocation18 [shape = 's32[1]{0}', space=sflag, size = 0x4, scoped, tag = 'scoped memory for tpu_custom_call.1']
    #allocation19 [shape = 'u8[32768]{0}', space=vmem, size = 0x8000, scoped, tag = 'input window, operand 10, single buffered']
    #allocation20 [shape = 'u8[32768]{0}', space=vmem, size = 0x8000, scoped, tag = 'input window, operand 11, single buffered']
    #allocation21 [shape = 's32[1]{0}', space=sflag, size = 0x4, scoped, tag = 'scoped memory for tpu_custom_call.1']
    #allocation22 [shape = 'u8[16384]{0}', space=vmem, size = 0x4000, scoped, tag = 'output window, operand 0']
    #allocation23 [shape = 'u8[32768]{0}', space=vmem, size = 0x8000, scoped, tag = 'output window, operand 1']
    #allocation24 [shape = 's32[2]{0}', space=sflag, size = 0x8, scoped, tag = 'scoped memory for tpu_custom_call.1']
    %19 = vsyncpa [#allocation3], 0
    %s20 = scalar_lea.sflag [#allocation3], 1
    %21 = vsyncpa %s20, 0
    %22 = vsyncpa [#allocation6], 0
    %s23 = scalar_lea.sflag [#allocation6], 1
    %24 = vsyncpa %s23, 0
    %25 = vsyncpa [#allocation9], 0
    %s26 = scalar_lea.sflag [#allocation9], 1
    %27 = vsyncpa %s26, 0
    %28 = vsyncpa [#allocation12], 0
    %29 = vsyncpa [#allocation15], 0
    %30 = vsyncpa [#allocation18], 0
    %31 = vsyncpa [#allocation21], 0
    %32 = vsyncpa [#allocation4], 0
    %s33 = scalar_lea.sflag [#allocation4], 1
    %34 = vsyncpa %s33, 0
    %35 = vsyncpa [#allocation24], 0
    %s36 = scalar_lea.sflag [#allocation24], 1
    %37 = vsyncpa %s36, 0
    loop: start=0, step=1, limit=4
    $region2: #{tpu_custom_call.1} parent=1 // loop_pre_header
      _
    $region3: #{tpu_custom_call.1} parent=1 // loop_header
      %s39 = sphi 0, %s43
      %p40 = scmp.ge.s32.totalorder %s39, 4
      %s49 = sphi 0, %s51
      %s52 = sphi 0, %s49
      %s53 = sphi 0, %s52
      %s69 = sphi 0, %s53
      %s75 = sphi 0, %s77
      %s78 = sphi 0, %s75
      %s79 = sphi 0, %s78
      %s95 = sphi 0, %s79
      %s101 = sphi 0, %s103
      %s104 = sphi 0, %s101
      %s105 = sphi 0, %s104
      %s121 = sphi 0, %s105
      %s127 = sphi 0, %s129
      %s130 = sphi 0, %s127
      %s131 = sphi 0, %s130
      %s147 = sphi 0, %s131
      %s151 = sphi 0, %s151
      %s153 = sphi 0, %s151
      %s154 = sphi 0, %s153
      %s168 = sphi 0, %s154
      %s172 = sphi 0, %s172
      %s174 = sphi 0, %s172
      %s175 = sphi 0, %s174
      %s189 = sphi 0, %s175
      %s193 = sphi 0, %s193
      %s195 = sphi 0, %s193
      %s196 = sphi 0, %s195
      %s210 = sphi 0, %s196
      %s214 = sphi 0, %s214
      %s216 = sphi 0, %s214
      %s217 = sphi 0, %s216
      %s231 = sphi 0, %s217
      %s235 = sphi 0, %s235
      %s237 = sphi 0, %s235
      %s238 = sphi 0, %s237
      %s252 = sphi 0, %s238
      %s256 = sphi 0, %s256
      %s258 = sphi 0, %s256
      %s259 = sphi 0, %s258
      %s273 = sphi 0, %s259
      %s277 = sphi 0, %s277
      %s279 = sphi 0, %s277
      %s280 = sphi 0, %s279
      %s294 = sphi 0, %s280
      %s298 = sphi 0, %s298
      %s300 = sphi 0, %s298
      %s301 = sphi 0, %s300
      %s315 = sphi 0, %s301
      %s321 = sphi 0, %s323
      %s324 = sphi 0, %s321
      %s325 = sphi 0, %s324
      %s341 = sphi 0, %s325
      %s347 = sphi 0, %s349
      %s350 = sphi 0, %s347
      %s351 = sphi 0, %s350
      %s367 = sphi 0, %s351
    $region4: #{tpu_custom_call.1} parent=1 // loop_header_branch
      %42 = sbr.rel (%p40) target = $region8
    $region5: #{tpu_custom_call.1} parent=1 // loop_body
      %s44 = ssub.s32 %s39, 1
      %s45 = ssub.s32 %s39, 2
      %s46 = sadd.s32 %s39, 1
      %s47 = ssub.s32 %s39, %s46
      %p48 = scmp.eq.s32.totalorder %s47, 0
      %s50 = sadd.s32 %s49, 1
      %s51 = scalar_select %p48, %s49, %s50
      %p54 = pneg %p48
      %p55 = scmp.eq.s32.totalorder %s39, 1
      %p56 = por %p54, %p55
      %p57 = scmp.ne.s32.totalorder %s49, %s52
      %p58 = scmp.eq.s32.totalorder %s39, 0
      %p59 = por %p57, %p58
      %p60 = scmp.ne.s32.totalorder %s49, %s52
      %p61 = scmp.eq.s32.totalorder %s44, 1
      %p62 = por %p60, %p61
      %p63 = scmp.ne.s32.totalorder %s52, %s53
      %p64 = scmp.eq.s32.totalorder %s44, 0
      %p65 = por %p63, %p64
      %p66 = scmp.ne.s32.totalorder %s52, %s53
      %p67 = scmp.eq.s32.totalorder %s45, 1
      %p68 = por %p66, %p67
      %p70 = scmp.ne.s32.totalorder %s53, %s69
      %p71 = scmp.eq.s32.totalorder %s45, 0
      %p72 = por %p70, %p71
      %s73 = ssub.s32 %s39, %s46
      %p74 = scmp.eq.s32.totalorder %s73, 0
      %s76 = sadd.s32 %s75, 1
      %s77 = scalar_select %p74, %s75, %s76
      %p80 = pneg %p74
      %p81 = scmp.eq.s32.totalorder %s39, 1
      %p82 = por %p80, %p81
      %p83 = scmp.ne.s32.totalorder %s75, %s78
      %p84 = scmp.eq.s32.totalorder %s39, 0
      %p85 = por %p83, %p84
      %p86 = scmp.ne.s32.totalorder %s75, %s78
      %p87 = scmp.eq.s32.totalorder %s44, 1
      %p88 = por %p86, %p87
      %p89 = scmp.ne.s32.totalorder %s78, %s79
      %p90 = scmp.eq.s32.totalorder %s44, 0
      %p91 = por %p89, %p90
      %p92 = scmp.ne.s32.totalorder %s78, %s79
      %p93 = scmp.eq.s32.totalorder %s45, 1
      %p94 = por %p92, %p93
      %p96 = scmp.ne.s32.totalorder %s79, %s95
      %p97 = scmp.eq.s32.totalorder %s45, 0
      %p98 = por %p96, %p97
      %s99 = ssub.s32 %s39, %s46
      %p100 = scmp.eq.s32.totalorder %s99, 0
      %s102 = sadd.s32 %s101, 1
      %s103 = scalar_select %p100, %s101, %s102
      %p106 = pneg %p100
      %p107 = scmp.eq.s32.totalorder %s39, 1
      %p108 = por %p106, %p107
      %p109 = scmp.ne.s32.totalorder %s101, %s104
      %p110 = scmp.eq.s32.totalorder %s39, 0
      %p111 = por %p109, %p110
      %p112 = scmp.ne.s32.totalorder %s101, %s104
      %p113 = scmp.eq.s32.totalorder %s44, 1
      %p114 = por %p112, %p113
      %p115 = scmp.ne.s32.totalorder %s104, %s105
      %p116 = scmp.eq.s32.totalorder %s44, 0
      %p117 = por %p115, %p116
      %p118 = scmp.ne.s32.totalorder %s104, %s105
      %p119 = scmp.eq.s32.totalorder %s45, 1
      %p120 = por %p118, %p119
      %p122 = scmp.ne.s32.totalorder %s105, %s121
      %p123 = scmp.eq.s32.totalorder %s45, 0
      %p124 = por %p122, %p123
      %s125 = ssub.s32 %s39, %s46
      %p126 = scmp.eq.s32.totalorder %s125, 0
      %s128 = sadd.s32 %s127, 1
      %s129 = scalar_select %p126, %s127, %s128
      %p132 = pneg %p126
      %p133 = scmp.eq.s32.totalorder %s39, 1
      %p134 = por %p132, %p133
      %p135 = scmp.ne.s32.totalorder %s127, %s130
      %p136 = scmp.eq.s32.totalorder %s39, 0
      %p137 = por %p135, %p136
      %p138 = scmp.ne.s32.totalorder %s127, %s130
      %p139 = scmp.eq.s32.totalorder %s44, 1
      %p140 = por %p138, %p139
      %p141 = scmp.ne.s32.totalorder %s130, %s131
      %p142 = scmp.eq.s32.totalorder %s44, 0
      %p143 = por %p141, %p142
      %p144 = scmp.ne.s32.totalorder %s130, %s131
      %p145 = scmp.eq.s32.totalorder %s45, 1
      %p146 = por %p144, %p145
      %p148 = scmp.ne.s32.totalorder %s131, %s147
      %p149 = scmp.eq.s32.totalorder %s45, 0
      %p150 = por %p148, %p149
      %s152 = sadd.s32 %s151, 1
      %p155 = scmp.eq.s32.totalorder %s39, 1
      %p156 = scmp.ne.s32.totalorder %s151, %s153
      %p157 = scmp.eq.s32.totalorder %s39, 0
      %p158 = por %p156, %p157
      %p159 = scmp.ne.s32.totalorder %s151, %s153
      %p160 = scmp.eq.s32.totalorder %s44, 1
      %p161 = por %p159, %p160
      %p162 = scmp.ne.s32.totalorder %s153, %s154
      %p163 = scmp.eq.s32.totalorder %s44, 0
      %p164 = por %p162, %p163
      %p165 = scmp.ne.s32.totalorder %s153, %s154
      %p166 = scmp.eq.s32.totalorder %s45, 1
      %p167 = por %p165, %p166
      %p169 = scmp.ne.s32.totalorder %s154, %s168
      %p170 = scmp.eq.s32.totalorder %s45, 0
      %p171 = por %p169, %p170
      %s173 = sadd.s32 %s172, 1
      %p176 = scmp.eq.s32.totalorder %s39, 1
      %p177 = scmp.ne.s32.totalorder %s172, %s174
      %p178 = scmp.eq.s32.totalorder %s39, 0
      %p179 = por %p177, %p178
      %p180 = scmp.ne.s32.totalorder %s172, %s174
      %p181 = scmp.eq.s32.totalorder %s44, 1
      %p182 = por %p180, %p181
      %p183 = scmp.ne.s32.totalorder %s174, %s175
      %p184 = scmp.eq.s32.totalorder %s44, 0
      %p185 = por %p183, %p184
      %p186 = scmp.ne.s32.totalorder %s174, %s175
      %p187 = scmp.eq.s32.totalorder %s45, 1
      %p188 = por %p186, %p187
      %p190 = scmp.ne.s32.totalorder %s175, %s189
      %p191 = scmp.eq.s32.totalorder %s45, 0
      %p192 = por %p190, %p191
      %s194 = sadd.s32 %s193, 1
      %p197 = scmp.eq.s32.totalorder %s39, 1
      %p198 = scmp.ne.s32.totalorder %s193, %s195
      %p199 = scmp.eq.s32.totalorder %s39, 0
      %p200 = por %p198, %p199
      %p201 = scmp.ne.s32.totalorder %s193, %s195
      %p202 = scmp.eq.s32.totalorder %s44, 1
      %p203 = por %p201, %p202
      %p204 = scmp.ne.s32.totalorder %s195, %s196
      %p205 = scmp.eq.s32.totalorder %s44, 0
      %p206 = por %p204, %p205
      %p207 = scmp.ne.s32.totalorder %s195, %s196
      %p208 = scmp.eq.s32.totalorder %s45, 1
      %p209 = por %p207, %p208
      %p211 = scmp.ne.s32.totalorder %s196, %s210
      %p212 = scmp.eq.s32.totalorder %s45, 0
      %p213 = por %p211, %p212
      %s215 = sadd.s32 %s214, 1
      %p218 = scmp.eq.s32.totalorder %s39, 1
      %p219 = scmp.ne.s32.totalorder %s214, %s216
      %p220 = scmp.eq.s32.totalorder %s39, 0
      %p221 = por %p219, %p220
      %p222 = scmp.ne.s32.totalorder %s214, %s216
      %p223 = scmp.eq.s32.totalorder %s44, 1
      %p224 = por %p222, %p223
      %p225 = scmp.ne.s32.totalorder %s216, %s217
      %p226 = scmp.eq.s32.totalorder %s44, 0
      %p227 = por %p225, %p226
      %p228 = scmp.ne.s32.totalorder %s216, %s217
      %p229 = scmp.eq.s32.totalorder %s45, 1
      %p230 = por %p228, %p229
      %p232 = scmp.ne.s32.totalorder %s217, %s231
      %p233 = scmp.eq.s32.totalorder %s45, 0
      %p234 = por %p232, %p233
      %s236 = sadd.s32 %s235, 1
      %p239 = scmp.eq.s32.totalorder %s39, 1
      %p240 = scmp.ne.s32.totalorder %s235, %s237
      %p241 = scmp.eq.s32.totalorder %s39, 0
      %p242 = por %p240, %p241
      %p243 = scmp.ne.s32.totalorder %s235, %s237
      %p244 = scmp.eq.s32.totalorder %s44, 1
      %p245 = por %p243, %p244
      %p246 = scmp.ne.s32.totalorder %s237, %s238
      %p247 = scmp.eq.s32.totalorder %s44, 0
      %p248 = por %p246, %p247
      %p249 = scmp.ne.s32.totalorder %s237, %s238
      %p250 = scmp.eq.s32.totalorder %s45, 1
      %p251 = por %p249, %p250
      %p253 = scmp.ne.s32.totalorder %s238, %s252
      %p254 = scmp.eq.s32.totalorder %s45, 0
      %p255 = por %p253, %p254
      %s257 = sadd.s32 %s256, 1
      %p260 = scmp.eq.s32.totalorder %s39, 1
      %p261 = scmp.ne.s32.totalorder %s256, %s258
      %p262 = scmp.eq.s32.totalorder %s39, 0
      %p263 = por %p261, %p262
      %p264 = scmp.ne.s32.totalorder %s256, %s258
      %p265 = scmp.eq.s32.totalorder %s44, 1
      %p266 = por %p264, %p265
      %p267 = scmp.ne.s32.totalorder %s258, %s259
      %p268 = scmp.eq.s32.totalorder %s44, 0
      %p269 = por %p267, %p268
      %p270 = scmp.ne.s32.totalorder %s258, %s259
      %p271 = scmp.eq.s32.totalorder %s45, 1
      %p272 = por %p270, %p271
      %p274 = scmp.ne.s32.totalorder %s259, %s273
      %p275 = scmp.eq.s32.totalorder %s45, 0
      %p276 = por %p274, %p275
      %s278 = sadd.s32 %s277, 1
      %p281 = scmp.eq.s32.totalorder %s39, 1
      %p282 = scmp.ne.s32.totalorder %s277, %s279
      %p283 = scmp.eq.s32.totalorder %s39, 0
      %p284 = por %p282, %p283
      %p285 = scmp.ne.s32.totalorder %s277, %s279
      %p286 = scmp.eq.s32.totalorder %s44, 1
      %p287 = por %p285, %p286
      %p288 = scmp.ne.s32.totalorder %s279, %s280
      %p289 = scmp.eq.s32.totalorder %s44, 0
      %p290 = por %p288, %p289
      %p291 = scmp.ne.s32.totalorder %s279, %s280
      %p292 = scmp.eq.s32.totalorder %s45, 1
      %p293 = por %p291, %p292
      %p295 = scmp.ne.s32.totalorder %s280, %s294
      %p296 = scmp.eq.s32.totalorder %s45, 0
      %p297 = por %p295, %p296
      %s299 = sadd.s32 %s298, 1
      %p302 = scmp.eq.s32.totalorder %s39, 1
      %p303 = scmp.ne.s32.totalorder %s298, %s300
      %p304 = scmp.eq.s32.totalorder %s39, 0
      %p305 = por %p303, %p304
      %p306 = scmp.ne.s32.totalorder %s298, %s300
      %p307 = scmp.eq.s32.totalorder %s44, 1
      %p308 = por %p306, %p307
      %p309 = scmp.ne.s32.totalorder %s300, %s301
      %p310 = scmp.eq.s32.totalorder %s44, 0
      %p311 = por %p309, %p310
      %p312 = scmp.ne.s32.totalorder %s300, %s301
      %p313 = scmp.eq.s32.totalorder %s45, 1
      %p314 = por %p312, %p313
      %p316 = scmp.ne.s32.totalorder %s301, %s315
      %p317 = scmp.eq.s32.totalorder %s45, 0
      %p318 = por %p316, %p317
      %s319 = ssub.s32 %s39, %s46
      %p320 = scmp.eq.s32.totalorder %s319, 0
      %s322 = sadd.s32 %s321, 1
      %s323 = scalar_select %p320, %s321, %s322
      %p326 = pneg %p320
      %p327 = scmp.eq.s32.totalorder %s39, 1
      %p328 = por %p326, %p327
      %p329 = scmp.ne.s32.totalorder %s321, %s324
      %p330 = scmp.eq.s32.totalorder %s39, 0
      %p331 = por %p329, %p330
      %p332 = scmp.ne.s32.totalorder %s321, %s324
      %p333 = scmp.eq.s32.totalorder %s44, 1
      %p334 = por %p332, %p333
      %p335 = scmp.ne.s32.totalorder %s324, %s325
      %p336 = scmp.eq.s32.totalorder %s44, 0
      %p337 = por %p335, %p336
      %p338 = scmp.ne.s32.totalorder %s324, %s325
      %p339 = scmp.eq.s32.totalorder %s45, 1
      %p340 = por %p338, %p339
      %p342 = scmp.ne.s32.totalorder %s325, %s341
      %p343 = scmp.eq.s32.totalorder %s45, 0
      %p344 = por %p342, %p343
      %s345 = ssub.s32 %s39, %s46
      %p346 = scmp.eq.s32.totalorder %s345, 0
      %s348 = sadd.s32 %s347, 1
      %s349 = scalar_select %p346, %s347, %s348
      %p352 = pneg %p346
      %p353 = scmp.eq.s32.totalorder %s39, 1
      %p354 = por %p352, %p353
      %p355 = scmp.ne.s32.totalorder %s347, %s350
      %p356 = scmp.eq.s32.totalorder %s39, 0
      %p357 = por %p355, %p356
      %p358 = scmp.ne.s32.totalorder %s347, %s350
      %p359 = scmp.eq.s32.totalorder %s44, 1
      %p360 = por %p358, %p359
      %p361 = scmp.ne.s32.totalorder %s350, %s351
      %p362 = scmp.eq.s32.totalorder %s44, 0
      %p363 = por %p361, %p362
      %p364 = scmp.ne.s32.totalorder %s350, %s351
      %p365 = scmp.eq.s32.totalorder %s45, 1
      %p366 = por %p364, %p365
      %p368 = scmp.ne.s32.totalorder %s351, %s367
      %p369 = scmp.eq.s32.totalorder %s45, 0
      %p370 = por %p368, %p369
      %p371 = scmp.le.s32.totalorder 1, %s39
      %p372 = scmp.lt.s32.totalorder %s39, 3
      %p373 = pnand %p371, %p372
      %p374 = pneg %p373
      // Predicated region
      $region9: #{tpu_custom_call.1} parent=5 // pred_check
        _
      $region10: #{tpu_custom_call.1} parent=5 // pred_check_branch
        %376 = sbr.rel (%p373) target = $region12
      $region11: #{tpu_custom_call.1} parent=5 // pred_region
        %s377 = ssub.s32 %s39, 1
        // Predicated region
        $region13: #{tpu_custom_call.1} parent=11 // pred_check
          %p378 = pneg %p164
        $region14: #{tpu_custom_call.1} parent=11 // pred_check_branch
          %380 = sbr.rel (%p378) target = $region16
        $region15: #{tpu_custom_call.1} parent=11 // pred_region
          %382 = vsyncadd [#allocation9], 0
          %s384 = sshll.u32 %s4, 4
          %s385 = int_to_ptr.hbm [resolvable:$true] %s384
          %s386 = sshll.u32 [#allocation10], 4
          %s387 = int_to_ptr.vmem [resolvable:$true] %s386
          %389 = dma.hbm_to_vmem [thread:$0]  %s385, 128, %s387, [#allocation9]
        $region16: #{tpu_custom_call.1} parent=11 // pred_fallthru
          _
        // Predicated region
        $region17: #{tpu_custom_call.1} parent=11 // pred_check
          %p390 = pneg %p185
        $region18: #{tpu_custom_call.1} parent=11 // pred_check_branch
          %392 = sbr.rel (%p390) target = $region20
        $region19: #{tpu_custom_call.1} parent=11 // pred_region
          %394 = vsyncadd [#allocation12], 0
          %s395 = sshll.u32 %s5, 4
          %s396 = int_to_ptr.hbm [resolvable:$true] %s395
          %s397 = sshll.u32 [#allocation11], 4
          %s398 = int_to_ptr.vmem [resolvable:$true] %s397
          %403 = dma.hbm_to_vmem [thread:$0]  %s396, 1024, %s398, [#allocation12], 64, 64, 4
        $region20: #{tpu_custom_call.1} parent=11 // pred_fallthru
          _
        // Predicated region
        $region21: #{tpu_custom_call.1} parent=11 // pred_check
          %p404 = pneg %p206
        $region22: #{tpu_custom_call.1} parent=11 // pred_check_branch
          %406 = sbr.rel (%p404) target = $region24
        $region23: #{tpu_custom_call.1} parent=11 // pred_region
          %408 = vsyncadd [#allocation12], 0
          %s409 = sshll.u32 %s6, 4
          %s410 = int_to_ptr.hbm [resolvable:$true] %s409
          %s411 = sshll.u32 [#allocation13], 4
          %s412 = int_to_ptr.vmem [resolvable:$true] %s411
          %417 = dma.hbm_to_vmem [thread:$0]  %s410, 2048, %s412, [#allocation12], 128, 128, 8
        $region24: #{tpu_custom_call.1} parent=11 // pred_fallthru
          _
        // Predicated region
        $region25: #{tpu_custom_call.1} parent=11 // pred_check
          %p418 = pneg %p227
        $region26: #{tpu_custom_call.1} parent=11 // pred_check_branch
          %420 = sbr.rel (%p418) target = $region28
        $region27: #{tpu_custom_call.1} parent=11 // pred_region
          %422 = vsyncadd [#allocation15], 0
          %s423 = sshll.u32 %s7, 4
          %s424 = int_to_ptr.hbm [resolvable:$true] %s423
          %s425 = sshll.u32 [#allocation14], 4
          %s426 = int_to_ptr.vmem [resolvable:$true] %s425
          %431 = dma.hbm_to_vmem [thread:$0]  %s424, 1024, %s426, [#allocation15], 64, 64, 4
        $region28: #{tpu_custom_call.1} parent=11 // pred_fallthru
          _
        // Predicated region
        $region29: #{tpu_custom_call.1} parent=11 // pred_check
          %p432 = pneg %p248
        $region30: #{tpu_custom_call.1} parent=11 // pred_check_branch
          %434 = sbr.rel (%p432) target = $region32
        $region31: #{tpu_custom_call.1} parent=11 // pred_region
          %436 = vsyncadd [#allocation15], 0
          %s437 = sshll.u32 %s8, 4
          %s438 = int_to_ptr.hbm [resolvable:$true] %s437
          %s439 = sshll.u32 [#allocation16], 4
          %s440 = int_to_ptr.vmem [resolvable:$true] %s439
          %445 = dma.hbm_to_vmem [thread:$0]  %s438, 2048, %s440, [#allocation15], 128, 128, 8
        $region32: #{tpu_custom_call.1} parent=11 // pred_fallthru
          _
        // Predicated region
        $region33: #{tpu_custom_call.1} parent=11 // pred_check
          %p446 = pneg %p269
        $region34: #{tpu_custom_call.1} parent=11 // pred_check_branch
          %448 = sbr.rel (%p446) target = $region36
        $region35: #{tpu_custom_call.1} parent=11 // pred_region
          %450 = vsyncadd [#allocation18], 0
          %s451 = sshll.u32 %s9, 4
          %s452 = int_to_ptr.hbm [resolvable:$true] %s451
          %s453 = sshll.u32 [#allocation17], 4
          %s454 = int_to_ptr.vmem [resolvable:$true] %s453
          %459 = dma.hbm_to_vmem [thread:$0]  %s452, 1024, %s454, [#allocation18], 64, 64, 4
        $region36: #{tpu_custom_call.1} parent=11 // pred_fallthru
          _
        // Predicated region
        $region37: #{tpu_custom_call.1} parent=11 // pred_check
          %p460 = pneg %p290
        $region38: #{tpu_custom_call.1} parent=11 // pred_check_branch
          %462 = sbr.rel (%p460) target = $region40
        $region39: #{tpu_custom_call.1} parent=11 // pred_region
          %464 = vsyncadd [#allocation18], 0
          %s465 = sshll.u32 %s10, 4
          %s466 = int_to_ptr.hbm [resolvable:$true] %s465
          %s467 = sshll.u32 [#allocation19], 4
          %s468 = int_to_ptr.vmem [resolvable:$true] %s467
          %473 = dma.hbm_to_vmem [thread:$0]  %s466, 1024, %s468, [#allocation18], 64, 64, 4
        $region40: #{tpu_custom_call.1} parent=11 // pred_fallthru
          _
        // Predicated region
        $region41: #{tpu_custom_call.1} parent=11 // pred_check
          %p474 = pneg %p311
        $region42: #{tpu_custom_call.1} parent=11 // pred_check_branch
          %476 = sbr.rel (%p474) target = $region44
        $region43: #{tpu_custom_call.1} parent=11 // pred_region
          %478 = vsyncadd [#allocation21], 0
          %s479 = sshll.u32 %s11, 4
          %s480 = int_to_ptr.hbm [resolvable:$true] %s479
          %s481 = sshll.u32 [#allocation20], 4
          %s482 = int_to_ptr.vmem [resolvable:$true] %s481
          %487 = dma.hbm_to_vmem [thread:$0]  %s480, 1024, %s482, [#allocation21], 64, 64, 4
        $region44: #{tpu_custom_call.1} parent=11 // pred_fallthru
          _
      $region12: #{tpu_custom_call.1} parent=5 // pred_fallthru
        _
      %p488 = scmp.lt.s32.totalorder %s39, 2
      // Predicated region
      $region45: #{tpu_custom_call.1} parent=5 // pred_check
        %p489 = pneg %p488
      $region46: #{tpu_custom_call.1} parent=5 // pred_check_branch
        %491 = sbr.rel (%p489) target = $region48
      $region47: #{tpu_custom_call.1} parent=5 // pred_region
        // Predicated region
        $region49: #{tpu_custom_call.1} parent=47 // pred_check
          %p492 = pneg %p59
        $region50: #{tpu_custom_call.1} parent=47 // pred_check_branch
          %494 = sbr.rel (%p492) target = $region52
        $region51: #{tpu_custom_call.1} parent=47 // pred_region
          %s495 = sand.u32 %s49, 1
          %s496 = scalar_lea.sflag [#allocation3], %s495
          %s497 = sand.u32 %s49, 1
          %s498 = smul.addr %s497, 8
          %s499 = scalar_lea.vmem [#allocation2], %s498
          %s500 = smul.u32 2, %s39
          %502 = vsyncadd %s496, 0
          %s503 = smul.addr %s500, 4
          %s504 = scalar_lea.hbm %s0, %s503
          %s505 = sshll.u32 %s504, 4
          %s506 = int_to_ptr.hbm [resolvable:$true] %s505
          %s507 = sshll.u32 %s499, 4
          %s508 = int_to_ptr.vmem [resolvable:$true] %s507
          %513 = dma.hbm_to_vmem [thread:$0]  %s506, 128, %s508, %s496, 64, 64, 4
        $region52: #{tpu_custom_call.1} parent=47 // pred_fallthru
          _
        // Predicated region
        $region53: #{tpu_custom_call.1} parent=47 // pred_check
          %p514 = pneg %p85
        $region54: #{tpu_custom_call.1} parent=47 // pred_check_branch
          %516 = sbr.rel (%p514) target = $region56
        $region55: #{tpu_custom_call.1} parent=47 // pred_region
          %s517 = sand.u32 %s39, 1
          %s518 = scalar_lea.sflag [#allocation6], %s517
          %s519 = sand.u32 %s75, 1
          %s520 = smul.addr %s519, 8
          %s521 = scalar_lea.vmem [#allocation5], %s520
          %s522 = smul.u32 2, %s39
          %524 = vsyncadd %s518, 0
          %s525 = smul.addr %s522, 4
          %s526 = scalar_lea.hbm %s1, %s525
          %s527 = sshll.u32 %s526, 4
          %s528 = int_to_ptr.hbm [resolvable:$true] %s527
          %s529 = sshll.u32 %s521, 4
          %s530 = int_to_ptr.vmem [resolvable:$true] %s529
          %535 = dma.hbm_to_vmem [thread:$0]  %s528, 128, %s530, %s518, 64, 64, 4
        $region56: #{tpu_custom_call.1} parent=47 // pred_fallthru
          _
        // Predicated region
        $region57: #{tpu_custom_call.1} parent=47 // pred_check
          %p536 = pneg %p111
        $region58: #{tpu_custom_call.1} parent=47 // pred_check_branch
          %538 = sbr.rel (%p536) target = $region60
        $region59: #{tpu_custom_call.1} parent=47 // pred_region
          %s539 = sand.u32 %s39, 1
          %s540 = scalar_lea.sflag [#allocation6], %s539
          %s541 = sand.u32 %s101, 1
          %s542 = smul.addr %s541, 16
          %s543 = scalar_lea.vmem [#allocation7], %s542
          %s544 = smul.u32 2, %s39
          %546 = vsyncadd %s540, 0
          %s547 = smul.addr %s544, 8
          %s548 = scalar_lea.hbm %s2, %s547
          %s549 = sshll.u32 %s548, 4
          %s550 = int_to_ptr.hbm [resolvable:$true] %s549
          %s551 = sshll.u32 %s543, 4
          %s552 = int_to_ptr.vmem [resolvable:$true] %s551
          %557 = dma.hbm_to_vmem [thread:$0]  %s550, 256, %s552, %s540, 128, 128, 8
        $region60: #{tpu_custom_call.1} parent=47 // pred_fallthru
          _
        // Predicated region
        $region61: #{tpu_custom_call.1} parent=47 // pred_check
          %p558 = pneg %p137
        $region62: #{tpu_custom_call.1} parent=47 // pred_check_branch
          %560 = sbr.rel (%p558) target = $region64
        $region63: #{tpu_custom_call.1} parent=47 // pred_region
          %s561 = sand.u32 %s39, 1
          %s562 = scalar_lea.sflag [#allocation9], %s561
          %s563 = sand.u32 %s127, 1
          %s564 = smul.addr %s563, 16
          %s565 = scalar_lea.vmem [#allocation8], %s564
          %s566 = smul.u32 2, %s39
          %568 = vsyncadd %s562, 0
          %s569 = smul.addr %s566, 8
          %s570 = scalar_lea.hbm %s3, %s569
          %s571 = sshll.u32 %s570, 4
          %s572 = int_to_ptr.hbm [resolvable:$true] %s571
          %s573 = sshll.u32 %s565, 4
          %s574 = int_to_ptr.vmem [resolvable:$true] %s573
          %579 = dma.hbm_to_vmem [thread:$0]  %s572, 256, %s574, %s562, 128, 128, 8
        $region64: #{tpu_custom_call.1} parent=47 // pred_fallthru
          _
      $region48: #{tpu_custom_call.1} parent=5 // pred_fallthru
        _
      %p580 = scmp.le.s32.totalorder 1, %s39
      %p581 = scmp.lt.s32.totalorder %s39, 3
      %p582 = pnand %p580, %p581
      %p583 = pneg %p582
      // Predicated region
      $region65: #{tpu_custom_call.1} parent=5 // pred_check
        _
      $region66: #{tpu_custom_call.1} parent=5 // pred_check_branch
        %585 = sbr.rel (%p582) target = $region68
      $region67: #{tpu_custom_call.1} parent=5 // pred_region
        %s586 = ssub.s32 %s39, 1
        %s587 = sand.u32 %s52, 1
        %s588 = scalar_lea.sflag [#allocation3], %s587
        %s589 = sand.u32 %s52, 1
        %s590 = smul.addr %s589, 8
        %s591 = scalar_lea.vmem [#allocation2], %s590
        // Predicated region
        $region69: #{tpu_custom_call.1} parent=67 // pred_check
          %p592 = pneg %p65
        $region70: #{tpu_custom_call.1} parent=67 // pred_check_branch
          %594 = sbr.rel (%p592) target = $region72
        $region71: #{tpu_custom_call.1} parent=67 // pred_region
          %596 = dma.done %s588, 128
        $region72: #{tpu_custom_call.1} parent=67 // pred_fallthru
          _
        %s597 = sand.u32 %s44, 1
        %s598 = scalar_lea.sflag [#allocation6], %s597
        %s599 = sand.u32 %s78, 1
        %s600 = smul.addr %s599, 8
        %s601 = scalar_lea.vmem [#allocation5], %s600
        // Predicated region
        $region73: #{tpu_custom_call.1} parent=67 // pred_check
          %p602 = pneg %p91
        $region74: #{tpu_custom_call.1} parent=67 // pred_check_branch
          %604 = sbr.rel (%p602) target = $region76
        $region75: #{tpu_custom_call.1} parent=67 // pred_region
          %606 = dma.done %s598, 128
        $region76: #{tpu_custom_call.1} parent=67 // pred_fallthru
          _
        %s607 = sand.u32 %s44, 1
        %s608 = scalar_lea.sflag [#allocation6], %s607
        %s609 = sand.u32 %s104, 1
        %s610 = smul.addr %s609, 16
        %s611 = scalar_lea.vmem [#allocation7], %s610
        // Predicated region
        $region77: #{tpu_custom_call.1} parent=67 // pred_check
          %p612 = pneg %p117
        $region78: #{tpu_custom_call.1} parent=67 // pred_check_branch
          %614 = sbr.rel (%p612) target = $region80
        $region79: #{tpu_custom_call.1} parent=67 // pred_region
          %616 = dma.done %s608, 256
        $region80: #{tpu_custom_call.1} parent=67 // pred_fallthru
          _
        %s617 = sand.u32 %s44, 1
        %s618 = scalar_lea.sflag [#allocation9], %s617
        %s619 = sand.u32 %s130, 1
        %s620 = smul.addr %s619, 16
        %s621 = scalar_lea.vmem [#allocation8], %s620
        // Predicated region
        $region81: #{tpu_custom_call.1} parent=67 // pred_check
          %p622 = pneg %p143
        $region82: #{tpu_custom_call.1} parent=67 // pred_check_branch
          %624 = sbr.rel (%p622) target = $region84
        $region83: #{tpu_custom_call.1} parent=67 // pred_region
          %626 = dma.done %s618, 256
        $region84: #{tpu_custom_call.1} parent=67 // pred_fallthru
          _
        // Predicated region
        $region85: #{tpu_custom_call.1} parent=67 // pred_check
          %p627 = pneg %p164
        $region86: #{tpu_custom_call.1} parent=67 // pred_check_branch
          %629 = sbr.rel (%p627) target = $region88
        $region87: #{tpu_custom_call.1} parent=67 // pred_region
          %631 = dma.done [#allocation9], 128
        $region88: #{tpu_custom_call.1} parent=67 // pred_fallthru
          _
        // Predicated region
        $region89: #{tpu_custom_call.1} parent=67 // pred_check
          %p632 = pneg %p185
        $region90: #{tpu_custom_call.1} parent=67 // pred_check_branch
          %634 = sbr.rel (%p632) target = $region92
        $region91: #{tpu_custom_call.1} parent=67 // pred_region
          %636 = dma.done [#allocation12], 1024
        $region92: #{tpu_custom_call.1} parent=67 // pred_fallthru
          _
        // Predicated region
        $region93: #{tpu_custom_call.1} parent=67 // pred_check
          %p637 = pneg %p206
        $region94: #{tpu_custom_call.1} parent=67 // pred_check_branch
          %639 = sbr.rel (%p637) target = $region96
        $region95: #{tpu_custom_call.1} parent=67 // pred_region
          %641 = dma.done [#allocation12], 2048
        $region96: #{tpu_custom_call.1} parent=67 // pred_fallthru
          _
        // Predicated region
        $region97: #{tpu_custom_call.1} parent=67 // pred_check
          %p642 = pneg %p227
        $region98: #{tpu_custom_call.1} parent=67 // pred_check_branch
          %644 = sbr.rel (%p642) target = $region100
        $region99: #{tpu_custom_call.1} parent=67 // pred_region
          %646 = dma.done [#allocation15], 1024
        $region100: #{tpu_custom_call.1} parent=67 // pred_fallthru
          _
        // Predicated region
        $region101: #{tpu_custom_call.1} parent=67 // pred_check
          %p647 = pneg %p248
        $region102: #{tpu_custom_call.1} parent=67 // pred_check_branch
          %649 = sbr.rel (%p647) target = $region104
        $region103: #{tpu_custom_call.1} parent=67 // pred_region
          %651 = dma.done [#allocation15], 2048
        $region104: #{tpu_custom_call.1} parent=67 // pred_fallthru
          _
        // Predicated region
        $region105: #{tpu_custom_call.1} parent=67 // pred_check
          %p652 = pneg %p269
        $region106: #{tpu_custom_call.1} parent=67 // pred_check_branch
          %654 = sbr.rel (%p652) target = $region108
        $region107: #{tpu_custom_call.1} parent=67 // pred_region
          %656 = dma.done [#allocation18], 1024
        $region108: #{tpu_custom_call.1} parent=67 // pred_fallthru
          _
        // Predicated region
        $region109: #{tpu_custom_call.1} parent=67 // pred_check
          %p657 = pneg %p290
        $region110: #{tpu_custom_call.1} parent=67 // pred_check_branch
          %659 = sbr.rel (%p657) target = $region112
        $region111: #{tpu_custom_call.1} parent=67 // pred_region
          %661 = dma.done [#allocation18], 1024
        $region112: #{tpu_custom_call.1} parent=67 // pred_fallthru
          _
        // Predicated region
        $region113: #{tpu_custom_call.1} parent=67 // pred_check
          %p662 = pneg %p311
        $region114: #{tpu_custom_call.1} parent=67 // pred_check_branch
          %664 = sbr.rel (%p662) target = $region116
        $region115: #{tpu_custom_call.1} parent=67 // pred_region
          %666 = dma.done [#allocation21], 1024
        $region116: #{tpu_custom_call.1} parent=67 // pred_fallthru
          _
        %s667 = sand.u32 %s52, 1
        %s668 = scalar_lea.sflag [#allocation3], %s667
        %s669 = sand.u32 %s52, 1
        %s670 = smul.addr %s669, 8
        %s671 = scalar_lea.vmem [#allocation2], %s670
        %p672 = pneg %p65
        %p673 = pneg %p62
        %s674 = sand.u32 %s44, 1
        %s675 = scalar_lea.sflag [#allocation6], %s674
        %s676 = sand.u32 %s78, 1
        %s677 = smul.addr %s676, 8
        %s678 = scalar_lea.vmem [#allocation5], %s677
        %p679 = pneg %p91
        %p680 = pneg %p88
        %s681 = sand.u32 %s44, 1
        %s682 = scalar_lea.sflag [#allocation6], %s681
        %s683 = sand.u32 %s104, 1
        %s684 = smul.addr %s683, 16
        %s685 = scalar_lea.vmem [#allocation7], %s684
        %p686 = pneg %p117
        %p687 = pneg %p114
        %s688 = sand.u32 %s44, 1
        %s689 = scalar_lea.sflag [#allocation9], %s688
        %s690 = sand.u32 %s130, 1
        %s691 = smul.addr %s690, 16
        %s692 = scalar_lea.vmem [#allocation8], %s691
        %p693 = pneg %p143
        %p694 = pneg %p140
        %p695 = pneg %p164
        %p696 = pneg %p161
        %p697 = pneg %p185
        %p698 = pneg %p182
        %p699 = pneg %p206
        %p700 = pneg %p203
        %p701 = pneg %p227
        %p702 = pneg %p224
        %p703 = pneg %p248
        %p704 = pneg %p245
        %p705 = pneg %p269
        %p706 = pneg %p266
        %p707 = pneg %p290
        %p708 = pneg %p287
        %p709 = pneg %p311
        %p710 = pneg %p308
        %p711 = pneg %p337
        %p712 = pneg %p334
        %s713 = sand.u32 %s324, 1
        %s714 = scalar_lea.sflag [#allocation4], %s713
        %s715 = sand.u32 %s324, 1
        %s716 = smul.addr %s715, 16
        %s717 = scalar_lea.vmem [#allocation22], %s716
        %p718 = pneg %p363
        %p719 = pneg %p360
        %s720 = sand.u32 %s350, 1
        %s721 = scalar_lea.sflag [#allocation24], %s720
        %s722 = sand.u32 %s350, 1
        %s723 = smul.addr %s722, 32
        %s724 = scalar_lea.vmem [#allocation23], %s723
        %s725 = smul.u32 2, %s44
        %s726 = smul.u32 2, %s44
        %s727 = smul.u32 2, %s44
        %s728 = smul.u32 2, %s44
        %s729 = smul.u32 2, %s44
        %s730 = smul.u32 2, %s44
        %v731 = vld [vmem:[%s601] sm:$0xf]
        %v732 = vld [vmem:[%s601 + $0x4] sm:$0xf]
        %v733 = vld [vmem:[#allocation10] sm:$0x1]
        %v734 = vld [vmem:[#allocation11] sm:$0xf]
        %v735 = vld [vmem:[#allocation11 + $0x4] sm:$0xf]
        %v736 = vld [vmem:[#allocation11 + $0x8] sm:$0xf]
        %v737 = vld [vmem:[#allocation11 + $0xc] sm:$0xf]
        %v738 = vld [vmem:[#allocation11 + $0x10] sm:$0xf]
        %v739 = vld [vmem:[#allocation11 + $0x14] sm:$0xf]
        %v740 = vld [vmem:[#allocation11 + $0x18] sm:$0xf]
        %v741 = vld [vmem:[#allocation11 + $0x1c] sm:$0xf]
        %v742 = vld [vmem:[#allocation11 + $0x20] sm:$0xf]
        %v743 = vld [vmem:[#allocation11 + $0x24] sm:$0xf]
        %v744 = vld [vmem:[#allocation11 + $0x28] sm:$0xf]
        %v745 = vld [vmem:[#allocation11 + $0x2c] sm:$0xf]
        %v746 = vld [vmem:[#allocation11 + $0x30] sm:$0xf]
        %v747 = vld [vmem:[#allocation11 + $0x34] sm:$0xf]
        %v748 = vld [vmem:[#allocation11 + $0x38] sm:$0xf]
        %v749 = vld [vmem:[#allocation11 + $0x3c] sm:$0xf]
        %v751 = vperm.slane %v733, 0
        %v755 = vunpack.c.l.b16 %v731
        %v756 = vunpack.c.l.b16 %v732
        %v757 = vpack.c.b16 %v756, %v755
        %v775 = vunpack.c.l.b16 %v734
        %v776 = vunpack.c.l.b16 %v735
        %v777 = vunpack.c.l.b16 %v736
        %v778 = vunpack.c.l.b16 %v737
        %v779 = vunpack.c.l.b16 %v738
        %v780 = vunpack.c.l.b16 %v739
        %v781 = vunpack.c.l.b16 %v740
        %v782 = vunpack.c.l.b16 %v741
        %v783 = vunpack.c.l.b16 %v742
        %v784 = vunpack.c.l.b16 %v743
        %v785 = vunpack.c.l.b16 %v744
        %v786 = vunpack.c.l.b16 %v745
        %v787 = vunpack.c.l.b16 %v746
        %v788 = vunpack.c.l.b16 %v747
        %v789 = vunpack.c.l.b16 %v748
        %v790 = vunpack.c.l.b16 %v749
        %v791 = vpack.c.b16 %v776, %v775
        %v792 = vpack.c.b16 %v778, %v777
        %v793 = vpack.c.b16 %v780, %v779
        %v794 = vpack.c.b16 %v782, %v781
        %v795 = vpack.c.b16 %v784, %v783
        %v796 = vpack.c.b16 %v786, %v785
        %v797 = vpack.c.b16 %v788, %v787
        %v798 = vpack.c.b16 %v790, %v789
        %807 = vmatpush.bf16.msra.mxu0 %v798
        %808 = vmatpush.bf16.msra.mxu0 %v797
        %809 = vmatpush.bf16.msra.mxu0 %v796
        %810 = vmatpush.bf16.msra.mxu0 %v795
        %811 = vmatpush.bf16.msra.mxu0 %v794
        %812 = vmatpush.bf16.msra.mxu0 %v793
        %813 = vmatpush.bf16.msra.mxu0 %v792
        %814 = vmatpush.bf16.msra.mxu0 %v791
        %815 = vmatmul.bf16.gmra.mxu0 %v757
        %v816 = vpop.f32.mrf.mxu0
        %v817 = vadd.f32 %v751, %v816
        %v818 = vpop.f32.mrf.mxu0
        %v819 = vadd.f32 %v751, %v818
        %820 = vdwg.mxu0
        %v821 = vmax.f32 %v817, 0.0
        %v822 = vmax.f32 %v819, 0.0
        %v823 = vld [vmem:[#allocation10 + $0x1] sm:$0x3]
        %v824 = vpack.c.bf16 %v822, %v821
        %v825 = vld [vmem:[#allocation13] sm:$0xff]
        %v826 = vld [vmem:[#allocation13 + $0x8] sm:$0xff]
        %v827 = vld [vmem:[#allocation13 + $0x10] sm:$0xff]
        %v828 = vld [vmem:[#allocation13 + $0x18] sm:$0xff]
        %v829 = vld [vmem:[#allocation13 + $0x20] sm:$0xff]
        %v830 = vld [vmem:[#allocation13 + $0x28] sm:$0xff]
        %v831 = vld [vmem:[#allocation13 + $0x30] sm:$0xff]
        %v832 = vld [vmem:[#allocation13 + $0x38] sm:$0xff]
        %v833 = vld [vmem:[#allocation13 + $0x40] sm:$0xff]
        %v834 = vld [vmem:[#allocation13 + $0x48] sm:$0xff]
        %v835 = vld [vmem:[#allocation13 + $0x50] sm:$0xff]
        %v836 = vld [vmem:[#allocation13 + $0x58] sm:$0xff]
        %v837 = vld [vmem:[#allocation13 + $0x60] sm:$0xff]
        %v838 = vld [vmem:[#allocation13 + $0x68] sm:$0xff]
        %v839 = vld [vmem:[#allocation13 + $0x70] sm:$0xff]
        %v840 = vld [vmem:[#allocation13 + $0x78] sm:$0xff]
        %v842 = vperm.slane %v823, 0
        %v843 = vperm.slane %v823, 1
        %v862 = vunpack.c.l.b16 %v825
        %v863 = vunpack.c.h.b16 %v825
        %v864 = vunpack.c.l.b16 %v826
        %v865 = vunpack.c.h.b16 %v826
        %v866 = vunpack.c.l.b16 %v827
        %v867 = vunpack.c.h.b16 %v827
        %v868 = vunpack.c.l.b16 %v828
        %v869 = vunpack.c.h.b16 %v828
        %v870 = vunpack.c.l.b16 %v829
        %v871 = vunpack.c.h.b16 %v829
        %v872 = vunpack.c.l.b16 %v830
        %v873 = vunpack.c.h.b16 %v830
        %v874 = vunpack.c.l.b16 %v831
        %v875 = vunpack.c.h.b16 %v831
        %v876 = vunpack.c.l.b16 %v832
        %v877 = vunpack.c.h.b16 %v832
        %v878 = vunpack.c.l.b16 %v833
        %v879 = vunpack.c.h.b16 %v833
        %v880 = vunpack.c.l.b16 %v834
        %v881 = vunpack.c.h.b16 %v834
        %v882 = vunpack.c.l.b16 %v835
        %v883 = vunpack.c.h.b16 %v835
        %v884 = vunpack.c.l.b16 %v836
        %v885 = vunpack.c.h.b16 %v836
        %v886 = vunpack.c.l.b16 %v837
        %v887 = vunpack.c.h.b16 %v837
        %v888 = vunpack.c.l.b16 %v838
        %v889 = vunpack.c.h.b16 %v838
        %v890 = vunpack.c.l.b16 %v839
        %v891 = vunpack.c.h.b16 %v839
        %v892 = vunpack.c.l.b16 %v840
        %v893 = vunpack.c.h.b16 %v840
        %v894 = vpack.c.b16 %v864, %v862
        %v895 = vpack.c.b16 %v865, %v863
        %v896 = vpack.c.b16 %v868, %v866
        %v897 = vpack.c.b16 %v869, %v867
        %v898 = vpack.c.b16 %v872, %v870
        %v899 = vpack.c.b16 %v873, %v871
        %v900 = vpack.c.b16 %v876, %v874
        %v901 = vpack.c.b16 %v877, %v875
        %v902 = vpack.c.b16 %v880, %v878
        %v903 = vpack.c.b16 %v881, %v879
        %v904 = vpack.c.b16 %v884, %v882
        %v905 = vpack.c.b16 %v885, %v883
        %v906 = vpack.c.b16 %v888, %v886
        %v907 = vpack.c.b16 %v889, %v887
        %v908 = vpack.c.b16 %v892, %v890
        %v909 = vpack.c.b16 %v893, %v891
        %926 = vmatpush.bf16.msra.mxu0 %v908
        %927 = vmatpush.bf16.msra.mxu0 %v906
        %928 = vmatpush.bf16.msra.mxu0 %v904
        %929 = vmatpush.bf16.msra.mxu0 %v902
        %930 = vmatpush.bf16.msra.mxu0 %v900
        %931 = vmatpush.bf16.msra.mxu0 %v898
        %932 = vmatpush.bf16.msra.mxu0 %v896
        %933 = vmatpush.bf16.msra.mxu0 %v894
        %934 = vmatmul.bf16.gmra.mxu0 %v824
        %v935 = vpop.f32.mrf.mxu0
        %v936 = vadd.f32 %v842, %v935
        %v937 = vpop.f32.mrf.mxu0
        %v938 = vadd.f32 %v842, %v937
        %939 = vdwg.mxu0
        %940 = vmatpush.bf16.msra.mxu0 %v909
        %941 = vmatpush.bf16.msra.mxu0 %v907
        %942 = vmatpush.bf16.msra.mxu0 %v905
        %943 = vmatpush.bf16.msra.mxu0 %v903
        %944 = vmatpush.bf16.msra.mxu0 %v901
        %945 = vmatpush.bf16.msra.mxu0 %v899
        %946 = vmatpush.bf16.msra.mxu0 %v897
        %947 = vmatpush.bf16.msra.mxu0 %v895
        %948 = vmatmul.bf16.gmra.mxu0 %v824
        %v949 = vpop.f32.mrf.mxu0
        %v950 = vadd.f32 %v843, %v949
        %v951 = vpop.f32.mrf.mxu0
        %v952 = vadd.f32 %v843, %v951
        %953 = vdwg.mxu0
        %v954 = vpack.c.bf16 %v950, %v936
        %v955 = vpack.c.bf16 %v952, %v938
        %956 = vst [vmem:[%s724] sm:$0xff] %v954
        %957 = vst [vmem:[%s724 + $0x10] sm:$0xff] %v955
        %v958 = vld [vmem:[%s591] sm:$0xf]
        %v959 = vld [vmem:[%s591 + $0x4] sm:$0xf]
        %v960 = vld [vmem:[#allocation10 + $0x3] sm:$0x1]
        %v961 = vld [vmem:[#allocation14] sm:$0xf]
        %v962 = vld [vmem:[#allocation14 + $0x4] sm:$0xf]
        %v963 = vld [vmem:[#allocation14 + $0x8] sm:$0xf]
        %v964 = vld [vmem:[#allocation14 + $0xc] sm:$0xf]
        %v965 = vld [vmem:[#allocation14 + $0x10] sm:$0xf]
        %v966 = vld [vmem:[#allocation14 + $0x14] sm:$0xf]
        %v967 = vld [vmem:[#allocation14 + $0x18] sm:$0xf]
        %v968 = vld [vmem:[#allocation14 + $0x1c] sm:$0xf]
        %v969 = vld [vmem:[#allocation14 + $0x20] sm:$0xf]
        %v970 = vld [vmem:[#allocation14 + $0x24] sm:$0xf]
        %v971 = vld [vmem:[#allocation14 + $0x28] sm:$0xf]
        %v972 = vld [vmem:[#allocation14 + $0x2c] sm:$0xf]
        %v973 = vld [vmem:[#allocation14 + $0x30] sm:$0xf]
        %v974 = vld [vmem:[#allocation14 + $0x34] sm:$0xf]
        %v975 = vld [vmem:[#allocation14 + $0x38] sm:$0xf]
        %v976 = vld [vmem:[#allocation14 + $0x3c] sm:$0xf]
        %v978 = vperm.slane %v960, 0
        %v982 = vunpack.c.l.b16 %v958
        %v983 = vunpack.c.l.b16 %v959
        %v984 = vpack.c.b16 %v983, %v982
        %v1002 = vunpack.c.l.b16 %v961
        %v1003 = vunpack.c.l.b16 %v962
        %v1004 = vunpack.c.l.b16 %v963
        %v1005 = vunpack.c.l.b16 %v964
        %v1006 = vunpack.c.l.b16 %v965
        %v1007 = vunpack.c.l.b16 %v966
        %v1008 = vunpack.c.l.b16 %v967
        %v1009 = vunpack.c.l.b16 %v968
        %v1010 = vunpack.c.l.b16 %v969
        %v1011 = vunpack.c.l.b16 %v970
        %v1012 = vunpack.c.l.b16 %v971
        %v1013 = vunpack.c.l.b16 %v972
        %v1014 = vunpack.c.l.b16 %v973
        %v1015 = vunpack.c.l.b16 %v974
        %v1016 = vunpack.c.l.b16 %v975
        %v1017 = vunpack.c.l.b16 %v976
        %v1018 = vpack.c.b16 %v1003, %v1002
        %v1019 = vpack.c.b16 %v1005, %v1004
        %v1020 = vpack.c.b16 %v1007, %v1006
        %v1021 = vpack.c.b16 %v1009, %v1008
        %v1022 = vpack.c.b16 %v1011, %v1010
        %v1023 = vpack.c.b16 %v1013, %v1012
        %v1024 = vpack.c.b16 %v1015, %v1014
        %v1025 = vpack.c.b16 %v1017, %v1016
        %1034 = vmatpush.bf16.msra.mxu0 %v1025
        %1035 = vmatpush.bf16.msra.mxu0 %v1024
        %1036 = vmatpush.bf16.msra.mxu0 %v1023
        %1037 = vmatpush.bf16.msra.mxu0 %v1022
        %1038 = vmatpush.bf16.msra.mxu0 %v1021
        %1039 = vmatpush.bf16.msra.mxu0 %v1020
        %1040 = vmatpush.bf16.msra.mxu0 %v1019
        %1041 = vmatpush.bf16.msra.mxu0 %v1018
        %1042 = vmatmul.bf16.gmra.mxu0 %v984
        %v1043 = vpop.f32.mrf.mxu0
        %v1044 = vadd.f32 %v978, %v1043
        %v1045 = vpop.f32.mrf.mxu0
        %v1046 = vadd.f32 %v978, %v1045
        %1047 = vdwg.mxu0
        %v1048 = vmax.f32 %v1044, 0.0
        %v1049 = vmax.f32 %v1046, 0.0
        %v1050 = vld [vmem:[#allocation10 + $0x4] sm:$0x3]
        %v1051 = vpack.c.bf16 %v1049, %v1048
        %v1052 = vld [vmem:[#allocation16] sm:$0xff]
        %v1053 = vld [vmem:[#allocation16 + $0x8] sm:$0xff]
        %v1054 = vld [vmem:[#allocation16 + $0x10] sm:$0xff]
        %v1055 = vld [vmem:[#allocation16 + $0x18] sm:$0xff]
        %v1056 = vld [vmem:[#allocation16 + $0x20] sm:$0xff]
        %v1057 = vld [vmem:[#allocation16 + $0x28] sm:$0xff]
        %v1058 = vld [vmem:[#allocation16 + $0x30] sm:$0xff]
        %v1059 = vld [vmem:[#allocation16 + $0x38] sm:$0xff]
        %v1060 = vld [vmem:[#allocation16 + $0x40] sm:$0xff]
        %v1061 = vld [vmem:[#allocation16 + $0x48] sm:$0xff]
        %v1062 = vld [vmem:[#allocation16 + $0x50] sm:$0xff]
        %v1063 = vld [vmem:[#allocation16 + $0x58] sm:$0xff]
        %v1064 = vld [vmem:[#allocation16 + $0x60] sm:$0xff]
        %v1065 = vld [vmem:[#allocation16 + $0x68] sm:$0xff]
        %v1066 = vld [vmem:[#allocation16 + $0x70] sm:$0xff]
        %v1067 = vld [vmem:[#allocation16 + $0x78] sm:$0xff]
        %v1069 = vperm.slane %v1050, 0
        %v1070 = vperm.slane %v1050, 1
        %v1089 = vunpack.c.l.b16 %v1052
        %v1090 = vunpack.c.h.b16 %v1052
        %v1091 = vunpack.c.l.b16 %v1053
        %v1092 = vunpack.c.h.b16 %v1053
        %v1093 = vunpack.c.l.b16 %v1054
        %v1094 = vunpack.c.h.b16 %v1054
        %v1095 = vunpack.c.l.b16 %v1055
        %v1096 = vunpack.c.h.b16 %v1055
        %v1097 = vunpack.c.l.b16 %v1056
        %v1098 = vunpack.c.h.b16 %v1056
        %v1099 = vunpack.c.l.b16 %v1057
        %v1100 = vunpack.c.h.b16 %v1057
        %v1101 = vunpack.c.l.b16 %v1058
        %v1102 = vunpack.c.h.b16 %v1058
        %v1103 = vunpack.c.l.b16 %v1059
        %v1104 = vunpack.c.h.b16 %v1059
        %v1105 = vunpack.c.l.b16 %v1060
        %v1106 = vunpack.c.h.b16 %v1060
        %v1107 = vunpack.c.l.b16 %v1061
        %v1108 = vunpack.c.h.b16 %v1061
        %v1109 = vunpack.c.l.b16 %v1062
        %v1110 = vunpack.c.h.b16 %v1062
        %v1111 = vunpack.c.l.b16 %v1063
        %v1112 = vunpack.c.h.b16 %v1063
        %v1113 = vunpack.c.l.b16 %v1064
        %v1114 = vunpack.c.h.b16 %v1064
        %v1115 = vunpack.c.l.b16 %v1065
        %v1116 = vunpack.c.h.b16 %v1065
        %v1117 = vunpack.c.l.b16 %v1066
        %v1118 = vunpack.c.h.b16 %v1066
        %v1119 = vunpack.c.l.b16 %v1067
        %v1120 = vunpack.c.h.b16 %v1067
        %v1121 = vpack.c.b16 %v1091, %v1089
        %v1122 = vpack.c.b16 %v1092, %v1090
        %v1123 = vpack.c.b16 %v1095, %v1093
        %v1124 = vpack.c.b16 %v1096, %v1094
        %v1125 = vpack.c.b16 %v1099, %v1097
        %v1126 = vpack.c.b16 %v1100, %v1098
        %v1127 = vpack.c.b16 %v1103, %v1101
        %v1128 = vpack.c.b16 %v1104, %v1102
        %v1129 = vpack.c.b16 %v1107, %v1105
        %v1130 = vpack.c.b16 %v1108, %v1106
        %v1131 = vpack.c.b16 %v1111, %v1109
        %v1132 = vpack.c.b16 %v1112, %v1110
        %v1133 = vpack.c.b16 %v1115, %v1113
        %v1134 = vpack.c.b16 %v1116, %v1114
        %v1135 = vpack.c.b16 %v1119, %v1117
        %v1136 = vpack.c.b16 %v1120, %v1118
        %1153 = vmatpush.bf16.msra.mxu0 %v1135
        %1154 = vmatpush.bf16.msra.mxu0 %v1133
        %1155 = vmatpush.bf16.msra.mxu0 %v1131
        %1156 = vmatpush.bf16.msra.mxu0 %v1129
        %1157 = vmatpush.bf16.msra.mxu0 %v1127
        %1158 = vmatpush.bf16.msra.mxu0 %v1125
        %1159 = vmatpush.bf16.msra.mxu0 %v1123
        %1160 = vmatpush.bf16.msra.mxu0 %v1121
        %1161 = vmatmul.bf16.gmra.mxu0 %v1051
        %v1162 = vpop.f32.mrf.mxu0
        %v1163 = vadd.f32 %v1069, %v1162
        %v1164 = vpop.f32.mrf.mxu0
        %v1165 = vadd.f32 %v1069, %v1164
        %1166 = vdwg.mxu0
        %1167 = vmatpush.bf16.msra.mxu0 %v1136
        %1168 = vmatpush.bf16.msra.mxu0 %v1134
        %1169 = vmatpush.bf16.msra.mxu0 %v1132
        %1170 = vmatpush.bf16.msra.mxu0 %v1130
        %1171 = vmatpush.bf16.msra.mxu0 %v1128
        %1172 = vmatpush.bf16.msra.mxu0 %v1126
        %1173 = vmatpush.bf16.msra.mxu0 %v1124
        %1174 = vmatpush.bf16.msra.mxu0 %v1122
        %1175 = vmatmul.bf16.gmra.mxu0 %v1051
        %v1176 = vpop.f32.mrf.mxu0
        %v1177 = vadd.f32 %v1070, %v1176
        %v1178 = vpop.f32.mrf.mxu0
        %v1179 = vadd.f32 %v1070, %v1178
        %1180 = vdwg.mxu0
        %v1181 = vpack.c.bf16 %v1177, %v1163
        %v1182 = vpack.c.bf16 %v1179, %v1165
        %1183 = vst [vmem:[%s724 + $0x8] sm:$0xff] %v1181
        %1184 = vst [vmem:[%s724 + $0x18] sm:$0xff] %v1182
        %v1185 = vld [vmem:[%s611] sm:$0xff]
        %v1186 = vld [vmem:[%s611 + $0x8] sm:$0xff]
        %v1187 = vmul.f32 %v950, 0.5
        %v1188 = vmul.f32 %v952, 0.5
        %v1189 = vmul.f32 %v1187, 1.442695
        %v1190 = vpow.pop %v1189
        %v1191 = vmul.f32 %v1188, 1.442695
        %v1192 = vpow.pop %v1191
        %v1193 = vmul.f32 %v1185, %v1190
        %v1194 = vmul.f32 %v1186, %v1192
        %v1195 = vadd.f32 %v936, %v1193
        %v1196 = vadd.f32 %v938, %v1194
        %v1197 = vld [vmem:[%s621] sm:$0xff]
        %v1198 = vld [vmem:[%s621 + $0x8] sm:$0xff]
        %v1199 = vmul.f32 %v1177, 0.5
        %v1200 = vmul.f32 %v1179, 0.5
        %v1201 = vmul.f32 %v1199, 1.442695
        %v1202 = vpow.pop %v1201
        %v1203 = vmul.f32 %v1200, 1.442695
        %v1204 = vpow.pop %v1203
        %v1205 = vmul.f32 %v1197, %v1202
        %v1206 = vmul.f32 %v1198, %v1204
        %v1207 = vadd.f32 %v1163, %v1205
        %v1208 = vadd.f32 %v1165, %v1206
        %v1209 = vld [vmem:[#allocation10 + $0x6] sm:$0x1]
        %v1210 = vpack.c.bf16 %v1196, %v1195
        %v1211 = vld [vmem:[#allocation17] sm:$0xf]
        %v1212 = vld [vmem:[#allocation17 + $0x4] sm:$0xf]
        %v1213 = vld [vmem:[#allocation17 + $0x8] sm:$0xf]
        %v1214 = vld [vmem:[#allocation17 + $0xc] sm:$0xf]
        %v1215 = vld [vmem:[#allocation17 + $0x10] sm:$0xf]
        %v1216 = vld [vmem:[#allocation17 + $0x14] sm:$0xf]
        %v1217 = vld [vmem:[#allocation17 + $0x18] sm:$0xf]
        %v1218 = vld [vmem:[#allocation17 + $0x1c] sm:$0xf]
        %v1219 = vld [vmem:[#allocation17 + $0x20] sm:$0xf]
        %v1220 = vld [vmem:[#allocation17 + $0x24] sm:$0xf]
        %v1221 = vld [vmem:[#allocation17 + $0x28] sm:$0xf]
        %v1222 = vld [vmem:[#allocation17 + $0x2c] sm:$0xf]
        %v1223 = vld [vmem:[#allocation17 + $0x30] sm:$0xf]
        %v1224 = vld [vmem:[#allocation17 + $0x34] sm:$0xf]
        %v1225 = vld [vmem:[#allocation17 + $0x38] sm:$0xf]
        %v1226 = vld [vmem:[#allocation17 + $0x3c] sm:$0xf]
        %v1227 = vpack.c.bf16 %v1208, %v1207
        %v1228 = vld [vmem:[#allocation19] sm:$0xf]
        %v1229 = vld [vmem:[#allocation19 + $0x4] sm:$0xf]
        %v1230 = vld [vmem:[#allocation19 + $0x8] sm:$0xf]
        %v1231 = vld [vmem:[#allocation19 + $0xc] sm:$0xf]
        %v1232 = vld [vmem:[#allocation19 + $0x10] sm:$0xf]
        %v1233 = vld [vmem:[#allocation19 + $0x14] sm:$0xf]
        %v1234 = vld [vmem:[#allocation19 + $0x18] sm:$0xf]
        %v1235 = vld [vmem:[#allocation19 + $0x1c] sm:$0xf]
        %v1236 = vld [vmem:[#allocation19 + $0x20] sm:$0xf]
        %v1237 = vld [vmem:[#allocation19 + $0x24] sm:$0xf]
        %v1238 = vld [vmem:[#allocation19 + $0x28] sm:$0xf]
        %v1239 = vld [vmem:[#allocation19 + $0x2c] sm:$0xf]
        %v1240 = vld [vmem:[#allocation19 + $0x30] sm:$0xf]
        %v1241 = vld [vmem:[#allocation19 + $0x34] sm:$0xf]
        %v1242 = vld [vmem:[#allocation19 + $0x38] sm:$0xf]
        %v1243 = vld [vmem:[#allocation19 + $0x3c] sm:$0xf]
        %v1260 = vunpack.c.l.b16 %v1228
        %v1261 = vunpack.c.l.b16 %v1229
        %v1262 = vunpack.c.l.b16 %v1230
        %v1263 = vunpack.c.l.b16 %v1231
        %v1264 = vunpack.c.l.b16 %v1232
        %v1265 = vunpack.c.l.b16 %v1233
        %v1266 = vunpack.c.l.b16 %v1234
        %v1267 = vunpack.c.l.b16 %v1235
        %v1268 = vunpack.c.l.b16 %v1236
        %v1269 = vunpack.c.l.b16 %v1237
        %v1270 = vunpack.c.l.b16 %v1238
        %v1271 = vunpack.c.l.b16 %v1239
        %v1272 = vunpack.c.l.b16 %v1240
        %v1273 = vunpack.c.l.b16 %v1241
        %v1274 = vunpack.c.l.b16 %v1242
        %v1275 = vunpack.c.l.b16 %v1243
        %v1276 = vpack.c.b16 %v1261, %v1260
        %v1277 = vpack.c.b16 %v1263, %v1262
        %v1278 = vpack.c.b16 %v1265, %v1264
        %v1279 = vpack.c.b16 %v1267, %v1266
        %v1280 = vpack.c.b16 %v1269, %v1268
        %v1281 = vpack.c.b16 %v1271, %v1270
        %v1282 = vpack.c.b16 %v1273, %v1272
        %v1283 = vpack.c.b16 %v1275, %v1274
        %1292 = vmatpush.bf16.msra.mxu0 %v1283
        %1293 = vmatpush.bf16.msra.mxu0 %v1282
        %1294 = vmatpush.bf16.msra.mxu0 %v1281
        %1295 = vmatpush.bf16.msra.mxu0 %v1280
        %1296 = vmatpush.bf16.msra.mxu0 %v1279
        %1297 = vmatpush.bf16.msra.mxu0 %v1278
        %1298 = vmatpush.bf16.msra.mxu0 %v1277
        %1299 = vmatpush.bf16.msra.mxu0 %v1276
        %1300 = vmatmul.bf16.gmra.mxu0 %v1227
        %v1301 = vpop.f32.mrf.mxu0
        %v1302 = vadd.f32 0.0, %v1301
        %v1303 = vpop.f32.mrf.mxu0
        %v1304 = vadd.f32 0.0, %v1303
        %1305 = vdwg.mxu0
        %v1322 = vunpack.c.l.b16 %v1211
        %v1323 = vunpack.c.l.b16 %v1212
        %v1324 = vunpack.c.l.b16 %v1213
        %v1325 = vunpack.c.l.b16 %v1214
        %v1326 = vunpack.c.l.b16 %v1215
        %v1327 = vunpack.c.l.b16 %v1216
        %v1328 = vunpack.c.l.b16 %v1217
        %v1329 = vunpack.c.l.b16 %v1218
        %v1330 = vunpack.c.l.b16 %v1219
        %v1331 = vunpack.c.l.b16 %v1220
        %v1332 = vunpack.c.l.b16 %v1221
        %v1333 = vunpack.c.l.b16 %v1222
        %v1334 = vunpack.c.l.b16 %v1223
        %v1335 = vunpack.c.l.b16 %v1224
        %v1336 = vunpack.c.l.b16 %v1225
        %v1337 = vunpack.c.l.b16 %v1226
        %v1338 = vpack.c.b16 %v1323, %v1322
        %v1339 = vpack.c.b16 %v1325, %v1324
        %v1340 = vpack.c.b16 %v1327, %v1326
        %v1341 = vpack.c.b16 %v1329, %v1328
        %v1342 = vpack.c.b16 %v1331, %v1330
        %v1343 = vpack.c.b16 %v1333, %v1332
        %v1344 = vpack.c.b16 %v1335, %v1334
        %v1345 = vpack.c.b16 %v1337, %v1336
        %1354 = vmatpush.bf16.msra.mxu0 %v1345
        %1355 = vmatpush.bf16.msra.mxu0 %v1344
        %1356 = vmatpush.bf16.msra.mxu0 %v1343
        %1357 = vmatpush.bf16.msra.mxu0 %v1342
        %1358 = vmatpush.bf16.msra.mxu0 %v1341
        %1359 = vmatpush.bf16.msra.mxu0 %v1340
        %1360 = vmatpush.bf16.msra.mxu0 %v1339
        %1361 = vmatpush.bf16.msra.mxu0 %v1338
        %1362 = vmatmul.bf16.gmra.mxu0 %v1210
        %v1363 = vpop.f32.mrf.mxu0
        %v1364 = vadd.f32 %v1302, %v1363
        %v1365 = vpop.f32.mrf.mxu0
        %v1366 = vadd.f32 %v1304, %v1365
        %1367 = vdwg.mxu0
        %v1369 = vperm.slane %v1209, 0
        %v1371 = vadd.f32 %v1364, %v1369
        %v1372 = vadd.f32 %v1366, %v1369
        %v1373 = vmax.f32 %v1371, 0.0
        %v1374 = vmax.f32 %v1372, 0.0
        %v1375 = vld [vmem:[#allocation10 + $0x7] sm:$0x1]
        %v1376 = vpack.c.bf16 %v1374, %v1373
        %v1377 = vld [vmem:[#allocation20] sm:$0xf]
        %v1378 = vld [vmem:[#allocation20 + $0x4] sm:$0xf]
        %v1379 = vld [vmem:[#allocation20 + $0x8] sm:$0xf]
        %v1380 = vld [vmem:[#allocation20 + $0xc] sm:$0xf]
        %v1381 = vld [vmem:[#allocation20 + $0x10] sm:$0xf]
        %v1382 = vld [vmem:[#allocation20 + $0x14] sm:$0xf]
        %v1383 = vld [vmem:[#allocation20 + $0x18] sm:$0xf]
        %v1384 = vld [vmem:[#allocation20 + $0x1c] sm:$0xf]
        %v1385 = vld [vmem:[#allocation20 + $0x20] sm:$0xf]
        %v1386 = vld [vmem:[#allocation20 + $0x24] sm:$0xf]
        %v1387 = vld [vmem:[#allocation20 + $0x28] sm:$0xf]
        %v1388 = vld [vmem:[#allocation20 + $0x2c] sm:$0xf]
        %v1389 = vld [vmem:[#allocation20 + $0x30] sm:$0xf]
        %v1390 = vld [vmem:[#allocation20 + $0x34] sm:$0xf]
        %v1391 = vld [vmem:[#allocation20 + $0x38] sm:$0xf]
        %v1392 = vld [vmem:[#allocation20 + $0x3c] sm:$0xf]
        %v1394 = vperm.slane %v1375, 0
        %v1412 = vunpack.c.l.b16 %v1377
        %v1413 = vunpack.c.l.b16 %v1378
        %v1414 = vunpack.c.l.b16 %v1379
        %v1415 = vunpack.c.l.b16 %v1380
        %v1416 = vunpack.c.l.b16 %v1381
        %v1417 = vunpack.c.l.b16 %v1382
        %v1418 = vunpack.c.l.b16 %v1383
        %v1419 = vunpack.c.l.b16 %v1384
        %v1420 = vunpack.c.l.b16 %v1385
        %v1421 = vunpack.c.l.b16 %v1386
        %v1422 = vunpack.c.l.b16 %v1387
        %v1423 = vunpack.c.l.b16 %v1388
        %v1424 = vunpack.c.l.b16 %v1389
        %v1425 = vunpack.c.l.b16 %v1390
        %v1426 = vunpack.c.l.b16 %v1391
        %v1427 = vunpack.c.l.b16 %v1392
        %v1428 = vpack.c.b16 %v1413, %v1412
        %v1429 = vpack.c.b16 %v1415, %v1414
        %v1430 = vpack.c.b16 %v1417, %v1416
        %v1431 = vpack.c.b16 %v1419, %v1418
        %v1432 = vpack.c.b16 %v1421, %v1420
        %v1433 = vpack.c.b16 %v1423, %v1422
        %v1434 = vpack.c.b16 %v1425, %v1424
        %v1435 = vpack.c.b16 %v1427, %v1426
        %1444 = vmatpush.bf16.msra.mxu0 %v1435
        %1445 = vmatpush.bf16.msra.mxu0 %v1434
        %1446 = vmatpush.bf16.msra.mxu0 %v1433
        %1447 = vmatpush.bf16.msra.mxu0 %v1432
        %1448 = vmatpush.bf16.msra.mxu0 %v1431
        %1449 = vmatpush.bf16.msra.mxu0 %v1430
        %1450 = vmatpush.bf16.msra.mxu0 %v1429
        %1451 = vmatpush.bf16.msra.mxu0 %v1428
        %1452 = vmatmul.bf16.gmra.mxu0 %v1376
        %v1453 = vpop.f32.mrf.mxu0
        %v1454 = vadd.f32 %v1394, %v1453
        %v1455 = vpop.f32.mrf.mxu0
        %v1456 = vadd.f32 %v1394, %v1455
        %1457 = vdwg.mxu0
        %v1458 = vmax.f32 %v1454, -1.0
        %v1459 = vmax.f32 %v1456, -1.0
        %v1460 = vmin.f32 %v1458, 8.0
        %v1461 = vmin.f32 %v1459, 8.0
        %1462 = vst [vmem:[%s717] sm:$0xff] %v1460
        %1463 = vst [vmem:[%s717 + $0x8] sm:$0xff] %v1461
        %s1464 = sand.u32 %s324, 1
        %s1465 = scalar_lea.sflag [#allocation4], %s1464
        %s1466 = sand.u32 %s324, 1
        %s1467 = smul.addr %s1466, 16
        %s1468 = scalar_lea.vmem [#allocation22], %s1467
        %s1469 = sand.u32 %s350, 1
        %s1470 = scalar_lea.sflag [#allocation24], %s1469
        %s1471 = sand.u32 %s350, 1
        %s1472 = smul.addr %s1471, 32
        %s1473 = scalar_lea.vmem [#allocation23], %s1472
        // Predicated region
        $region117: #{tpu_custom_call.1} parent=67 // pred_check
          %p1474 = pneg %p334
        $region118: #{tpu_custom_call.1} parent=67 // pred_check_branch
          %1476 = sbr.rel (%p1474) target = $region120
        $region119: #{tpu_custom_call.1} parent=67 // pred_region
          %s1477 = smul.u32 2, %s44
          %1479 = vsyncadd %s1465, 0
          %s1480 = smul.addr %s1477, 8
          %s1481 = scalar_lea.hbm %s12, %s1480
          %s1482 = sshll.u32 %s1468, 4
          %s1483 = int_to_ptr.vmem [resolvable:$true] %s1482
          %s1484 = sshll.u32 %s1481, 4
          %s1485 = int_to_ptr.hbm [resolvable:$true] %s1484
          %1490 = dma.vmem_to_hbm [thread:$0]  %s1483, 256, %s1485, %s1465, 128, 128, 8
        $region120: #{tpu_custom_call.1} parent=67 // pred_fallthru
          _
        // Predicated region
        $region121: #{tpu_custom_call.1} parent=67 // pred_check
          %p1491 = pneg %p360
        $region122: #{tpu_custom_call.1} parent=67 // pred_check_branch
          %1493 = sbr.rel (%p1491) target = $region124
        $region123: #{tpu_custom_call.1} parent=67 // pred_region
          %s1494 = smul.u32 2, %s44
          %1496 = vsyncadd %s1470, 0
          %s1497 = smul.addr %s1494, 4
          %s1498 = smul.addr %s1497, 4
          %s1499 = scalar_lea.hbm %s13, %s1498
          %s1500 = sshll.u32 %s1473, 4
          %s1501 = int_to_ptr.vmem [resolvable:$true] %s1500
          %s1502 = sshll.u32 %s1499, 4
          %s1503 = int_to_ptr.hbm [resolvable:$true] %s1502
          %1508 = dma.vmem_to_hbm [thread:$0]  %s1501, 512, %s1503, %s1470, 256, 256, 16
        $region124: #{tpu_custom_call.1} parent=67 // pred_fallthru
          _
      $region68: #{tpu_custom_call.1} parent=5 // pred_fallthru
        _
      %p1509 = scmp.le.s32.totalorder 2, %s39
      // Predicated region
      $region125: #{tpu_custom_call.1} parent=5 // pred_check
        %p1510 = pneg %p1509
      $region126: #{tpu_custom_call.1} parent=5 // pred_check_branch
        %1512 = sbr.rel (%p1510) target = $region128
      $region127: #{tpu_custom_call.1} parent=5 // pred_region
        %s1513 = ssub.s32 %s39, 2
        // Predicated region
        $region129: #{tpu_custom_call.1} parent=127 // pred_check
          %p1514 = pneg %p340
        $region130: #{tpu_custom_call.1} parent=127 // pred_check_branch
          %1516 = sbr.rel (%p1514) target = $region132
        $region131: #{tpu_custom_call.1} parent=127 // pred_region
          %s1517 = sand.u32 %s325, 1
          %s1518 = scalar_lea.sflag [#allocation4], %s1517
          %s1519 = sand.u32 %s325, 1
          %s1520 = smul.addr %s1519, 16
          %s1521 = scalar_lea.vmem [#allocation22], %s1520
          %1523 = dma.done %s1518, 256
        $region132: #{tpu_custom_call.1} parent=127 // pred_fallthru
          _
        // Predicated region
        $region133: #{tpu_custom_call.1} parent=127 // pred_check
          %p1524 = pneg %p366
        $region134: #{tpu_custom_call.1} parent=127 // pred_check_branch
          %1526 = sbr.rel (%p1524) target = $region136
        $region135: #{tpu_custom_call.1} parent=127 // pred_region
          %s1527 = sand.u32 %s351, 1
          %s1528 = scalar_lea.sflag [#allocation24], %s1527
          %s1529 = sand.u32 %s351, 1
          %s1530 = smul.addr %s1529, 32
          %s1531 = scalar_lea.vmem [#allocation23], %s1530
          %1533 = dma.done %s1528, 512
        $region136: #{tpu_custom_call.1} parent=127 // pred_fallthru
          _
      $region128: #{tpu_custom_call.1} parent=5 // pred_fallthru
        _
    $region6: #{tpu_custom_call.1} parent=1 // loop_footer
      %s43 = sadd.s32 1, %s39
    $region7: #{tpu_custom_call.1} parent=1 // loop_footer_branch
      %38 = sbr.rel target = $region3
    $region8: #{tpu_custom_call.1} parent=1 // loop_exit
      _
    %1534 = vsyncpa [#allocation3], 1
    %s1535 = scalar_lea.sflag [#allocation3], 1
    %1536 = vsyncpa %s1535, 1
    %1537 = vsyncpa [#allocation6], 1
    %s1538 = scalar_lea.sflag [#allocation6], 1
    %1539 = vsyncpa %s1538, 1
    %1540 = vsyncpa [#allocation9], 1
    %s1541 = scalar_lea.sflag [#allocation9], 1
    %1542 = vsyncpa %s1541, 1
    %1543 = vsyncpa [#allocation12], 1
    %1544 = vsyncpa [#allocation15], 1
    %1545 = vsyncpa [#allocation18], 1
    %1546 = vsyncpa [#allocation21], 1
    %1547 = vsyncpa [#allocation4], 1
    %s1548 = scalar_lea.sflag [#allocation4], 1
    %1549 = vsyncpa %s1548, 1
    %1550 = vsyncpa [#allocation24], 1
    %s1551 = scalar_lea.sflag [#allocation24], 1
    %1552 = vsyncpa %s1551, 1

</llo_original>
